<compile_context>
chip_gen: v7x
topology: tpu7x:2x2x1
jax: 0.10.0
libtpu: 0.0.40
codegen_flags: <defaults>
</compile_context>

<pallas_src>
import functools
import math

import jax
import jax.numpy as jnp
import numpy as np
from jax.experimental import pallas as pl
from jax.experimental.pallas import tpu as pltpu


def _round_up(x, m):
    return (x + m - 1) // m * m


def _vmem_config():
    """Per-generation VMEM limit/budget (v7x: 64 MiB per TC, v5e/v6e: 128 MiB)."""
    cap = 64 * 1024 * 1024
    try:
        cap = int(getattr(pltpu.get_tpu_info(), "vmem_capacity_bytes", cap))
    except Exception:
        pass
    limit = min(cap * 3 // 4, 100 * 1024 * 1024)
    return limit, limit * 4 // 5


_VMEM_LIMIT, _VMEM_BUDGET = _vmem_config()


def _pick_tile_n(n_pad, cap=512):
    if n_pad <= cap:
        return n_pad
    for t in (512, 256, 128):
        if n_pad % t == 0:
            return t
    return 128


def _pick_tile_m(m, per_row_bytes, fixed_bytes, budget=_VMEM_BUDGET):
    """Largest row tile fitting the VMEM budget; M is padded UP to the tile
    (no tm=16 fallback) and we keep >=2 grid blocks when M allows (megacore)."""
    tm = 16
    for t in (1024, 512, 256, 128, 64, 32, 16):
        if fixed_bytes + t * per_row_bytes <= budget:
            tm = t
            break
    while tm > 16 and tm >= _round_up(m, 16):
        tm //= 2
    return tm, _round_up(m, tm)


_GELU_C = math.sqrt(2.0 / math.pi)


def _gelu_tanh(x):
    return 0.5 * x * (1.0 + jnp.tanh(_GELU_C * (x + 0.044715 * x * x * x)))


# ----------------------- fused GEMM (+bias, +GELU) kernels ------------------ #
def _gemm_bias_kernel(x_ref, w_ref, b_ref, o_ref, *, activation):
    acc = jnp.dot(x_ref[...], w_ref[...], preferred_element_type=jnp.float32)
    acc = acc + b_ref[...]
    if activation == "gelu":
        # TODO(synk): nn.GELU (exact erf) approximated by tanh-GELU fused in the
        # epilogue (exp/tanh lower to the EUP slot, hidden under the MXU GEMM).
        acc = _gelu_tanh(acc)
    o_ref[...] = acc.astype(o_ref.dtype)


def _gemm_res_ln_kernel(x_ref, w_ref, b_ref, r_ref, g_ref, bb_ref, o_ref, *,
                        eps, n_valid):
    acc = jnp.dot(x_ref[...], w_ref[...], preferred_element_type=jnp.float32)
    xr = acc + b_ref[...] + r_ref[...].astype(jnp.float32)
    col = jax.lax.broadcasted_iota(jnp.int32, xr.shape, 1)
    valid = col < n_valid                       # ignore lane padding in the stats
    inv_n = 1.0 / float(n_valid)
    mu = jnp.sum(jnp.where(valid, xr, 0.0), axis=-1, keepdims=True) * inv_n
    xc = jnp.where(valid, xr - mu, 0.0)
    var = jnp.sum(xc * xc, axis=-1, keepdims=True) * inv_n
    y = xc * jax.lax.rsqrt(var + eps) * g_ref[...] + bb_ref[...]
    o_ref[...] = y.astype(o_ref.dtype)


def matmul_bias(x, w_p, b_p, n_valid, *, activation=None, out_dtype=jnp.bfloat16):
    """(x @ w_p) + b_p (optionally GELU) fused; bf16 operands, f32 MXU accum."""
    x = x.astype(jnp.bfloat16)
    M, K = x.shape
    n_pad = w_p.shape[1]
    tn = _pick_tile_n(n_pad)
    out_bytes = np.dtype(out_dtype).itemsize
    per_row = 2 * (2 * K + out_bytes * tn)               # x + out (double buffered)
    fixed = 2 * (2 * K * tn + 4 * tn)                    # W + bias
    tm, m_pad = _pick_tile_m(M, per_row, fixed)
    x_p = x if m_pad == M else jnp.pad(x, ((0, m_pad - M), (0, 0)))

    y = pl.pallas_call(
        functools.partial(_gemm_bias_kernel, activation=activation),
        out_shape=jax.ShapeDtypeStruct((m_pad, n_pad), out_dtype),
        grid_spec=pltpu.PrefetchScalarGridSpec(
            num_scalar_prefetch=0,
            grid=(m_pad // tm, n_pad // tn),
            in_specs=[
                pl.BlockSpec((tm, K), lambda i, j: (i, 0)),
                pl.BlockSpec((K, tn), lambda i, j: (0, j)),
                pl.BlockSpec((1, tn), lambda i, j: (0, j)),
            ],
            out_specs=pl.BlockSpec((tm, tn), lambda i, j: (i, j)),
        ),
        compiler_params=pltpu.CompilerParams(
            dimension_semantics=("parallel", "parallel"),
            vmem_limit_bytes=_VMEM_LIMIT),
    )(x_p, w_p, b_p)
    if m_pad != M or n_pad != n_valid:
        y = y[:M, :n_valid]
    return y


def matmul_res_layernorm(x, w_p, b_p, res, g_p, bb_p, n_valid, *, eps=1e-5):
    """LayerNorm((x @ w_p + b_p) + res) fused in one kernel (bf16 output)."""
    x = x.astype(jnp.bfloat16)
    res = res.astype(jnp.bfloat16)
    M, K = x.shape
    n_pad = w_p.shape[1]
    if res.shape[1] != n_pad:
        res = jnp.pad(res, ((0, 0), (0, n_pad - res.shape[1])))
    per_row = 2 * (2 * K + 2 * n_pad + 2 * n_pad)        # x + res + out
    fixed = 2 * (2 * K * n_pad + 3 * 4 * n_pad)          # W + bias/gamma/beta
    tm, m_pad = _pick_tile_m(M, per_row, fixed)
    if m_pad != M:
        x = jnp.pad(x, ((0, m_pad - M), (0, 0)))
        res = jnp.pad(res, ((0, m_pad - M), (0, 0)))

    y = pl.pallas_call(
        functools.partial(_gemm_res_ln_kernel, eps=eps, n_valid=n_valid),
        out_shape=jax.ShapeDtypeStruct((m_pad, n_pad), jnp.bfloat16),
        grid_spec=pltpu.PrefetchScalarGridSpec(
            num_scalar_prefetch=0,
            grid=(m_pad // tm,),
            in_specs=[
                pl.BlockSpec((tm, K), lambda i: (i, 0)),
                pl.BlockSpec((K, n_pad), lambda i: (0, 0)),
                pl.BlockSpec((1, n_pad), lambda i: (0, 0)),
                pl.BlockSpec((tm, n_pad), lambda i: (i, 0)),
                pl.BlockSpec((1, n_pad), lambda i: (0, 0)),
                pl.BlockSpec((1, n_pad), lambda i: (0, 0)),
            ],
            out_specs=pl.BlockSpec((tm, n_pad), lambda i: (i, 0)),
        ),
        compiler_params=pltpu.CompilerParams(
            dimension_semantics=("parallel",), vmem_limit_bytes=_VMEM_LIMIT),
    )(x, w_p, b_p, res, g_p, bb_p)
    if m_pad != M or n_pad != n_valid:
        y = y[:M, :n_valid]
    return y


# --------------------- head-batched fused attention kernel ------------------ #
def _attention_kernel(qkv_ref, o_ref, *, head_num, d_head, scale, seq_len):
    E = head_num * d_head
    for h in range(head_num):                    # static unroll over heads
        lo = h * d_head
        q = qkv_ref[:, lo:lo + d_head]           # (Tp, d) bf16
        k = qkv_ref[:, E + lo:E + lo + d_head]
        v = qkv_ref[:, 2 * E + lo:2 * E + lo + d_head]
        e = jax.lax.dot_general(q, k, (((1,), (1,)), ((), ())),
                                preferred_element_type=jnp.float32) * scale
        col = jax.lax.broadcasted_iota(jnp.int32, e.shape, 1)
        e = jnp.where(col < seq_len, e, -1e30)   # mask padded key positions
        e = e - jnp.max(e, axis=-1, keepdims=True)
        p = jnp.exp(e)
        p = p * pl.reciprocal(jnp.sum(p, axis=-1, keepdims=True), approx=True)
        out = jnp.dot(p.astype(jnp.bfloat16), v, preferred_element_type=jnp.float32)
        o_ref[:, lo:lo + d_head] = out.astype(o_ref.dtype)


def attention(qkv, head_num, d_head, scale, seq_len):
    """softmax(q k^T * scale) v for all heads of one batch element per grid step.

    qkv: (B, Tp, 3E) bf16 with columns already in (q|k|v, head-major) order
    (qkv weight pre-permuted), so head split/merge is free and the (Tp, E)
    output store is lane-dense.
    """
    B, Tp, three_e = qkv.shape
    E = head_num * d_head
    kern = functools.partial(_attention_kernel, head_num=head_num,
                             d_head=d_head, scale=scale, seq_len=seq_len)
    return pl.pallas_call(
        kern,
        out_shape=jax.ShapeDtypeStruct((B, Tp, E), jnp.bfloat16),
        grid_spec=pltpu.PrefetchScalarGridSpec(
            num_scalar_prefetch=0,
            grid=(B,),
            in_specs=[pl.BlockSpec((None, Tp, three_e), lambda b: (b, 0, 0))],
            out_specs=pl.BlockSpec((None, Tp, E), lambda b: (b, 0, 0)),
        ),
        compiler_params=pltpu.CompilerParams(
            dimension_semantics=("parallel",), vmem_limit_bytes=_VMEM_LIMIT),
    )(qkv)


# ------------------------------ ViT forward --------------------------------- #
def _patchify(x, patch_dim):
    # einops 'b c (patch_x x) (patch_y y) -> b (x y) (patch_x patch_y c)'
    B, C, H, W = x.shape
    P = patch_dim
    XS, YS = H // P, W // P
    t = x.reshape(B, C, P, XS, P, YS).transpose(0, 3, 5, 2, 4, 1)
    return t.reshape(B, XS * YS, P * P * C), XS * YS


def vit_forward(params, x, *, patch_dim, head_num, num_classes, classification):
    B = x.shape[0]
    E = params["pos"].shape[1]
    d_head = E // head_num
    scale = float(d_head) ** 0.5      # NOTE: module MULTIPLIES by sqrt(head_dim)

    patches, tokens = _patchify(x, patch_dim)
    proj = matmul_bias(patches.reshape(B * tokens, -1),
                       params["proj_w"], params["proj_b"], E)
    proj = proj.reshape(B, tokens, E).astype(jnp.float32)

    cls = jnp.broadcast_to(params["cls"], (B, 1, E))
    h = jnp.concatenate([cls, proj], axis=1) + params["pos"][: tokens + 1, :]
    # TODO(synk): Dropout layers (p=0.1) run in inference mode (identity).
    T = tokens + 1
    Tp = _round_up(T, 16)
    h = jnp.pad(h, ((0, 0), (0, Tp - T), (0, 0))).astype(jnp.bfloat16)

    M = B * Tp
    for blk in params["blocks"]:
        h2 = h.reshape(M, E)
        # qkv projection (no bias); pre-permuted weights -> head-major columns
        qkv = matmul_bias(h2, blk["qkv_w"], blk["qkv_b"], 3 * E)
        att = attention(qkv.reshape(B, Tp, 3 * E), head_num, d_head, scale, T)
        # out-projection (no bias) + residual + LayerNorm1, fused
        h2 = matmul_res_layernorm(att.reshape(M, E), blk["out_w"], blk["out_b"],
                                  h2, blk["ln1_g"], blk["ln1_b"], E)
        # MLP: fc1 + GELU fused, then fc2 + residual + LayerNorm2 fused
        f = matmul_bias(h2, blk["fc1_w"], blk["fc1_b"], blk["fc1_w"].shape[1],
                        activation="gelu")
        h2 = matmul_res_layernorm(f, blk["fc2_w"], blk["fc2_b"],
                                  h2, blk["ln2_g"], blk["ln2_b"], E)
        h = h2.reshape(B, Tp, E)

    if classification:
        return matmul_bias(h[:, 0, :], params["head_w"], params["head_b"],
                           num_classes, out_dtype=jnp.float32)
    return h[:, 1:T, :].astype(jnp.float32)


# ---------------------------- parameter handling ----------------------------- #
def init_vit_params(key, *, img_dim, in_channels, embedding_dim, head_num,
                    mlp_dim, block_num, patch_dim, num_classes):
    del head_num  # raw layout independent of head count
    E = embedding_dim
    num_tokens = (img_dim // patch_dim) ** 2
    token_dim = in_channels * patch_dim ** 2
    keys = jax.random.split(key, 4 + block_num)

    def uni(k, shape, fan_in):
        b = 1.0 / math.sqrt(fan_in)
        return jax.random.uniform(k, shape, jnp.float32, -b, b)

    params = {
        "proj_w": uni(keys[0], (token_dim, E), token_dim),
        "proj_b": uni(jax.random.fold_in(keys[0], 1), (E,), token_dim),
        "cls": jax.random.normal(keys[1], (1, 1, E), jnp.float32),
        "pos": jax.random.uniform(keys[2], (num_tokens + 1, E), jnp.float32, 0.0, 1.0),
        "head_w": uni(keys[3], (E, num_classes), E),
        "head_b": uni(jax.random.fold_in(keys[3], 1), (num_classes,), E),
        "blocks": [],
    }
    for i in range(block_num):
        ks = jax.random.split(keys[4 + i], 6)
        params["blocks"].append({
            "qkv_w": uni(ks[0], (E, 3 * E), E),
            "out_w": uni(ks[1], (E, E), E),
            "ln1_g": jnp.ones((E,), jnp.float32),
            "ln1_b": jnp.zeros((E,), jnp.float32),
            "ln2_g": jnp.ones((E,), jnp.float32),
            "ln2_b": jnp.zeros((E,), jnp.float32),
            "fc1_w": uni(ks[2], (E, mlp_dim), E),
            "fc1_b": uni(ks[3], (mlp_dim,), E),
            "fc2_w": uni(ks[4], (mlp_dim, E), mlp_dim),
            "fc2_b": uni(ks[5], (E,), mlp_dim),
        })
    return params


def _prep_linear(w, b=None, k_pad=None):
    k, n = w.shape
    n_pad = _round_up(n, 128)
    w = jnp.asarray(w, jnp.bfloat16)
    if k_pad is not None and k_pad > k:
        w = jnp.pad(w, ((0, k_pad - k), (0, 0)))
    w_p = jnp.pad(w, ((0, 0), (0, n_pad - n)))
    if b is None:
        b_p = jnp.zeros((1, n_pad), jnp.float32)
    else:
        b_p = jnp.pad(jnp.asarray(b, jnp.float32), (0, n_pad - n)).reshape(1, n_pad)
    return w_p, b_p


def prepare_params(raw, head_num):
    """One-time: bf16 cast, 128-lane pad, qkv column permutation to (k,h,d)."""
    E = raw["proj_w"].shape[1]
    d_head = E // head_num
    # module splits qkv columns as '(d k h)'; permute to (k, h, d) so the GEMM
    # output is already [q_h0 .. q_hH | k_h0 .. | v_h0 ..] -> no XLA transposes.
    perm = np.arange(3 * E).reshape(d_head, 3, head_num).transpose(1, 2, 0).reshape(-1)

    def prep_ln(g, b):
        n = g.shape[0]
        n_pad = _round_up(n, 128)
        return (jnp.pad(jnp.asarray(g, jnp.float32), (0, n_pad - n)).reshape(1, n_pad),
                jnp.pad(jnp.asarray(b, jnp.float32), (0, n_pad - n)).reshape(1, n_pad))

    p = {"cls": jnp.asarray(raw["cls"], jnp.float32),
         "pos": jnp.asarray(raw["pos"], jnp.float32)}
    p["proj_w"], p["proj_b"] = _prep_linear(raw["proj_w"], raw["proj_b"])
    p["head_w"], p["head_b"] = _prep_linear(raw["head_w"], raw["head_b"])
    p["blocks"] = []
    mlp_dim = raw["blocks"][0]["fc1_w"].shape[1] if raw["blocks"] else 0
    for blk in raw["blocks"]:
        b = {}
        b["qkv_w"], b["qkv_b"] = _prep_linear(jnp.asarray(blk["qkv_w"])[:, perm])
        b["out_w"], b["out_b"] = _prep_linear(blk["out_w"])
        b["fc1_w"], b["fc1_b"] = _prep_linear(blk["fc1_w"], blk["fc1_b"])
        b["fc2_w"], b["fc2_b"] = _prep_linear(blk["fc2_w"], blk["fc2_b"],
                                              k_pad=_round_up(mlp_dim, 128))
        b["ln1_g"], b["ln1_b"] = prep_ln(blk["ln1_g"], blk["ln1_b"])
        b["ln2_g"], b["ln2_b"] = prep_ln(blk["ln2_g"], blk["ln2_b"])
        p["blocks"].append(b)
    return p


# ------------------------- pure-JAX reference check ------------------------- #
def _lin_bf16(a, w, b=None):
    y = jnp.einsum("...k,kn->...n", a.astype(jnp.bfloat16), w.astype(jnp.bfloat16),
                   preferred_element_type=jnp.float32)
    return y if b is None else y + b


def _layernorm_ref(x, g, b, eps=1e-5):
    mu = jnp.mean(x, axis=-1, keepdims=True)
    xc = x - mu
    var = jnp.mean(xc * xc, axis=-1, keepdims=True)
    return xc * jax.lax.rsqrt(var + eps) * g + b


def vit_forward_ref(params, x, *, patch_dim, head_num, classification):
    B = x.shape[0]
    E = params["proj_w"].shape[1]
    d_head = E // head_num
    scale = float(d_head) ** 0.5

    patches, tokens = _patchify(x, patch_dim)
    h = _lin_bf16(patches, params["proj_w"], params["proj_b"])
    cls = jnp.broadcast_to(params["cls"], (B, 1, E))
    h = jnp.concatenate([cls, h], axis=1) + params["pos"][: tokens + 1, :]
    T = tokens + 1

    for blk in params["blocks"]:
        qkv = _lin_bf16(h, blk["qkv_w"])
        qkv = qkv.reshape(B, T, d_head, 3, head_num).transpose(3, 0, 4, 1, 2)
        q, k, v = (a.astype(jnp.bfloat16) for a in (qkv[0], qkv[1], qkv[2]))
        energy = jnp.einsum("bhid,bhjd->bhij", q, k,
                            preferred_element_type=jnp.float32) * scale
        att = jax.nn.softmax(energy, axis=-1)
        o = jnp.einsum("bhij,bhjd->bhid", att.astype(jnp.bfloat16), v,
                       preferred_element_type=jnp.float32)
        o = o.transpose(0, 2, 1, 3).reshape(B, T, E)
        o = _lin_bf16(o, blk["out_w"])
        h = _layernorm_ref(h + o, blk["ln1_g"], blk["ln1_b"])
        f = jax.nn.gelu(_lin_bf16(h, blk["fc1_w"], blk["fc1_b"]), approximate=False)
        f = _lin_bf16(f, blk["fc2_w"], blk["fc2_b"])
        h = _layernorm_ref(h + f, blk["ln2_g"], blk["ln2_b"])

    if classification:
        return _lin_bf16(h[:, 0, :], params["head_w"], params["head_b"])
    return h[:, 1:, :]


# ------------------------------------ main ----------------------------------- #
if __name__ == "__main__":
    img_dim, in_channels, patch_dim = 16, 3, 4
    embedding_dim, head_num, mlp_dim = 128, 4, 256
    block_num, num_classes, batch = 2, 3, 2

    key = jax.random.PRNGKey(0)
    kp, kx = jax.random.split(key)
    raw = init_vit_params(kp, img_dim=img_dim, in_channels=in_channels,
                          embedding_dim=embedding_dim, head_num=head_num,
                          mlp_dim=mlp_dim, block_num=block_num,
                          patch_dim=patch_dim, num_classes=num_classes)
    params = prepare_params(raw, head_num)   # one-time bf16 cast / pad / permute
    x = jax.random.normal(kx, (batch, in_channels, img_dim, img_dim), jnp.float32)

    fwd = jax.jit(functools.partial(vit_forward, patch_dim=patch_dim,
                                    head_num=head_num, num_classes=num_classes,
                                    classification=True))
    out = jax.block_until_ready(fwd(params, x))
    assert out.shape == (batch, num_classes), out.shape

    ref = jax.block_until_ready(
        vit_forward_ref(raw, x, patch_dim=patch_dim, head_num=head_num,
                        classification=True))
    np.testing.assert_allclose(np.asarray(out), np.asarray(ref),
                               atol=2e-2, rtol=2e-2)
    print("KERNEL_OK")
</pallas_src>

<mosaic_0001>
module attributes {stable_mosaic.version = 11 : i64} {
  func.func @_gemm_bias_kernel(%arg0: i32, %arg1: i32, %arg2: memref<16x48xbf16, #tpu.memory_space<vmem>>, %arg3: memref<48x128xbf16, #tpu.memory_space<vmem>>, %arg4: memref<1x128xf32, #tpu.memory_space<vmem>>, %arg5: memref<16x128xbf16, #tpu.memory_space<vmem>>) attributes {dimension_semantics = [#tpu.dimension_semantics<parallel>, #tpu.dimension_semantics<parallel>], iteration_bounds = array<i64: 2, 1>, scalar_prefetch = 0 : i64, scratch_operands = 0 : i64, tpu.core_type = #tpu.core_type<tc>, window_params = [{transform_indices = @transform_0, window_bounds = array<i64: 16, 48>}, {transform_indices = @transform_1, window_bounds = array<i64: 48, 128>}, {transform_indices = @transform_2, window_bounds = array<i64: 1, 128>}, {transform_indices = @transform_3, window_bounds = array<i64: 16, 128>}]} {
    %c0 = arith.constant 0 : index
    %c0_0 = arith.constant 0 : index
    %0 = vector.load %arg2[%c0, %c0_0] : memref<16x48xbf16, #tpu.memory_space<vmem>>, vector<16x48xbf16>
    %c0_1 = arith.constant 0 : index
    %c0_2 = arith.constant 0 : index
    %1 = vector.load %arg3[%c0_1, %c0_2] : memref<48x128xbf16, #tpu.memory_space<vmem>>, vector<48x128xbf16>
    %cst = arith.constant dense<0.000000e+00> : vector<16x128xf32>
    %2 = tpu.matmul %0, %1, %cst {dimension_numbers = #tpu.dot_dimension_numbers<[1], [0], [0], [1], [0, 0, 1, 1], [], []>} : vector<16x48xbf16>, vector<48x128xbf16>, vector<16x128xf32> -> vector<16x128xf32>
    %c0_3 = arith.constant 0 : index
    %c0_4 = arith.constant 0 : index
    %3 = vector.load %arg4[%c0_3, %c0_4] : memref<1x128xf32, #tpu.memory_space<vmem>>, vector<1x128xf32>
    %4 = vector.broadcast %3 : vector<1x128xf32> to vector<16x128xf32>
    %5 = arith.addf %2, %4 : vector<16x128xf32>
    %6 = arith.truncf %5 : vector<16x128xf32> to vector<16x128xbf16>
    %c0_5 = arith.constant 0 : index
    %c0_6 = arith.constant 0 : index
    %7 = vector.load %arg5[%c0_5, %c0_6] : memref<16x128xbf16, #tpu.memory_space<vmem>>, vector<16x128xbf16>
    tpu.vector_store %arg5[%c0_5, %c0_6], %6 {strides = array<i32>} : memref<16x128xbf16, #tpu.memory_space<vmem>>, vector<16x128xbf16>,
    return
  }
  func.func @transform_0(%arg0: i32, %arg1: i32) -> (i32, i32) {
    %c0_i32 = arith.constant 0 : i32
    %c0_i32_0 = arith.constant 0 : i32
    return %arg0, %c0_i32 : i32, i32
  }
  func.func @transform_1(%arg0: i32, %arg1: i32) -> (i32, i32) {
    %c0_i32 = arith.constant 0 : i32
    %c0_i32_0 = arith.constant 0 : i32
    return %c0_i32, %arg1 : i32, i32
  }
  func.func @transform_2(%arg0: i32, %arg1: i32) -> (i32, i32) {
    %c0_i32 = arith.constant 0 : i32
    %c0_i32_0 = arith.constant 0 : i32
    return %c0_i32, %arg1 : i32, i32
  }
  func.func @transform_3(%arg0: i32, %arg1: i32) -> (i32, i32) {
    %c0_i32 = arith.constant 0 : i32
    return %arg0, %arg1 : i32, i32
  }
}

module attributes {stable_mosaic.version = 11 : i64} {
  func.func @_gemm_bias_kernel(%arg0: i32, %arg1: i32, %arg2: memref<32x128xbf16, #tpu.memory_space<vmem>>, %arg3: memref<128x384xbf16, #tpu.memory_space<vmem>>, %arg4: memref<1x384xf32, #tpu.memory_space<vmem>>, %arg5: memref<32x384xbf16, #tpu.memory_space<vmem>>) attributes {dimension_semantics = [#tpu.dimension_semantics<parallel>, #tpu.dimension_semantics<parallel>], iteration_bounds = array<i64: 2, 1>, scalar_prefetch = 0 : i64, scratch_operands = 0 : i64, tpu.core_type = #tpu.core_type<tc>, window_params = [{transform_indices = @transform_0, window_bounds = array<i64: 32, 128>}, {transform_indices = @transform_1, window_bounds = array<i64: 128, 384>}, {transform_indices = @transform_2, window_bounds = array<i64: 1, 384>}, {transform_indices = @transform_3, window_bounds = array<i64: 32, 384>}]} {
    %c0 = arith.constant 0 : index
    %c0_0 = arith.constant 0 : index
    %0 = vector.load %arg2[%c0, %c0_0] : memref<32x128xbf16, #tpu.memory_space<vmem>>, vector<32x128xbf16>
    %c0_1 = arith.constant 0 : index
    %c0_2 = arith.constant 0 : index
    %1 = vector.load %arg3[%c0_1, %c0_2] : memref<128x384xbf16, #tpu.memory_space<vmem>>, vector<128x384xbf16>
    %cst = arith.constant dense<0.000000e+00> : vector<32x384xf32>
    %2 = tpu.matmul %0, %1, %cst {dimension_numbers = #tpu.dot_dimension_numbers<[1], [0], [0], [1], [0, 0, 1, 1], [], []>} : vector<32x128xbf16>, vector<128x384xbf16>, vector<32x384xf32> -> vector<32x384xf32>
    %c0_3 = arith.constant 0 : index
    %c0_4 = arith.constant 0 : index
    %3 = vector.load %arg4[%c0_3, %c0_4] : memref<1x384xf32, #tpu.memory_space<vmem>>, vector<1x384xf32>
    %4 = vector.broadcast %3 : vector<1x384xf32> to vector<32x384xf32>
    %5 = arith.addf %2, %4 : vector<32x384xf32>
    %6 = arith.truncf %5 : vector<32x384xf32> to vector<32x384xbf16>
    %c0_5 = arith.constant 0 : index
    %c0_6 = arith.constant 0 : index
    %7 = vector.load %arg5[%c0_5, %c0_6] : memref<32x384xbf16, #tpu.memory_space<vmem>>, vector<32x384xbf16>
    tpu.vector_store %arg5[%c0_5, %c0_6], %6 {strides = array<i32>} : memref<32x384xbf16, #tpu.memory_space<vmem>>, vector<32x384xbf16>,
    return
  }
  func.func @transform_0(%arg0: i32, %arg1: i32) -> (i32, i32) {
    %c0_i32 = arith.constant 0 : i32
    %c0_i32_0 = arith.constant 0 : i32
    return %arg0, %c0_i32 : i32, i32
  }
  func.func @transform_1(%arg0: i32, %arg1: i32) -> (i32, i32) {
    %c0_i32 = arith.constant 0 : i32
    %c0_i32_0 = arith.constant 0 : i32
    return %c0_i32, %arg1 : i32, i32
  }
  func.func @transform_2(%arg0: i32, %arg1: i32) -> (i32, i32) {
    %c0_i32 = arith.constant 0 : i32
    %c0_i32_0 = arith.constant 0 : i32
    return %c0_i32, %arg1 : i32, i32
  }
  func.func @transform_3(%arg0: i32, %arg1: i32) -> (i32, i32) {
    %c0_i32 = arith.constant 0 : i32
    return %arg0, %arg1 : i32, i32
  }
}

module attributes {stable_mosaic.version = 11 : i64} {
  func.func @_attention_kernel(%arg0: i32, %arg1: memref<1x32x384xbf16, #tpu.memory_space<vmem>>, %arg2: memref<1x32x128xbf16, #tpu.memory_space<vmem>>) attributes {dimension_semantics = [#tpu.dimension_semantics<parallel>], iteration_bounds = array<i64: 2>, scalar_prefetch = 0 : i64, scratch_operands = 0 : i64, tpu.core_type = #tpu.core_type<tc>, window_params = [{transform_indices = @transform_0, window_bounds = array<i64: 1, 32, 384>}, {transform_indices = @transform_1, window_bounds = array<i64: 1, 32, 128>}]} {
    %c0 = arith.constant 0 : index
    %c0_0 = arith.constant 0 : index
    %c0_1 = arith.constant 0 : index
    %0 = vector.load %arg1[%c0, %c0_0, %c0_1] : memref<1x32x384xbf16, #tpu.memory_space<vmem>>, vector<1x32x32xbf16>
    %1 = vector.shape_cast %0 : vector<1x32x32xbf16> to vector<32x32xbf16>
    %c0_2 = arith.constant 0 : index
    %c0_3 = arith.constant 0 : index
    %c128 = arith.constant 128 : index
    %2 = vector.load %arg1[%c0_2, %c0_3, %c128] : memref<1x32x384xbf16, #tpu.memory_space<vmem>>, vector<1x32x32xbf16>
    %3 = vector.shape_cast %2 : vector<1x32x32xbf16> to vector<32x32xbf16>
    %c0_4 = arith.constant 0 : index
    %c0_5 = arith.constant 0 : index
    %c256 = arith.constant 256 : index
    %4 = vector.load %arg1[%c0_4, %c0_5, %c256] : memref<1x32x384xbf16, #tpu.memory_space<vmem>>, vector<1x32x32xbf16>
    %5 = vector.shape_cast %4 : vector<1x32x32xbf16> to vector<32x32xbf16>
    %cst = arith.constant dense<0.000000e+00> : vector<32x32xf32>
    %6 = tpu.matmul %1, %3, %cst {dimension_numbers = #tpu.dot_dimension_numbers<[1], [1], [0], [0], [0, 0, 1, 0], [], []>} : vector<32x32xbf16>, vector<32x32xbf16>, vector<32x32xf32> -> vector<32x32xf32>
    %cst_6 = arith.constant 5.65685415 : f32
    %7 = vector.broadcast %cst_6 : f32 to vector<32x32xf32>
    %8 = arith.mulf %6, %7 : vector<32x32xf32>
    %9 = tpu.iota {dimensions = array<i32: 1>} : vector<32x32xi32>
    %c17_i32 = arith.constant 17 : i32
    %10 = vector.broadcast %c17_i32 : i32 to vector<32x32xi32>
    %11 = arith.cmpi slt, %9, %10 : vector<32x32xi32>
    %cst_7 = arith.constant -1.000000e+30 : f32
    %12 = vector.broadcast %cst_7 : f32 to vector<32x32xf32>
    %13 = arith.select %11, %8, %12 : vector<32x32xi1>, vector<32x32xf32>
    %cst_8 = arith.constant dense<0xFF800000> : vector<32xf32>
    %14 = vector.multi_reduction <maximumf>, %13, %cst_8 [1] : vector<32x32xf32> to vector<32xf32>
    %15 = vector.shape_cast %14 : vector<32xf32> to vector<32x1xf32>
    %16 = vector.broadcast %15 : vector<32x1xf32> to vector<32x32xf32>
    %17 = arith.subf %13, %16 : vector<32x32xf32>
    %18 = math.exp %17 : vector<32x32xf32>
    %cst_9 = arith.constant dense<0.000000e+00> : vector<32xf32>
    %19 = vector.multi_reduction <add>, %18, %cst_9 [1] : vector<32x32xf32> to vector<32xf32>
    %20 = vector.shape_cast %19 : vector<32xf32> to vector<32x1xf32>
    %21 = tpu.reciprocal %20 {approx = true} : vector<32x1xf32> -> vector<32x1xf32>
    %22 = vector.broadcast %21 : vector<32x1xf32> to vector<32x32xf32>
    %23 = arith.mulf %18, %22 : vector<32x32xf32>
    %24 = arith.truncf %23 : vector<32x32xf32> to vector<32x32xbf16>
    %cst_10 = arith.constant dense<0.000000e+00> : vector<32x32xf32>
    %25 = tpu.matmul %24, %5, %cst_10 {dimension_numbers = #tpu.dot_dimension_numbers<[1], [0], [0], [1], [0, 0, 1, 1], [], []>} : vector<32x32xbf16>, vector<32x32xbf16>, vector<32x32xf32> -> vector<32x32xf32>
    %26 = arith.truncf %25 : vector<32x32xf32> to vector<32x32xbf16>
    %c0_11 = arith.constant 0 : index
    %c0_12 = arith.constant 0 : index
    %c0_13 = arith.constant 0 : index
    %27 = vector.load %arg2[%c0_11, %c0_12, %c0_13] : memref<1x32x128xbf16, #tpu.memory_space<vmem>>, vector<1x32x32xbf16>
    %28 = vector.shape_cast %27 : vector<1x32x32xbf16> to vector<32x32xbf16>
    %29 = vector.shape_cast %26 : vector<32x32xbf16> to vector<1x32x32xbf16>
    tpu.vector_store %arg2[%c0_11, %c0_12, %c0_13], %29 {strides = array<i32>} : memref<1x32x128xbf16, #tpu.memory_space<vmem>>, vector<1x32x32xbf16>,
    %c0_14 = arith.constant 0 : index
    %c0_15 = arith.constant 0 : index
    %c32 = arith.constant 32 : index
    %30 = vector.load %arg1[%c0_14, %c0_15, %c32] : memref<1x32x384xbf16, #tpu.memory_space<vmem>>, vector<1x32x32xbf16>
    %31 = vector.shape_cast %30 : vector<1x32x32xbf16> to vector<32x32xbf16>
    %c0_16 = arith.constant 0 : index
    %c0_17 = arith.constant 0 : index
    %c160 = arith.constant 160 : index
    %32 = vector.load %arg1[%c0_16, %c0_17, %c160] : memref<1x32x384xbf16, #tpu.memory_space<vmem>>, vector<1x32x32xbf16>
    %33 = vector.shape_cast %32 : vector<1x32x32xbf16> to vector<32x32xbf16>
    %c0_18 = arith.constant 0 : index
    %c0_19 = arith.constant 0 : index
    %c288 = arith.constant 288 : index
    %34 = vector.load %arg1[%c0_18, %c0_19, %c288] : memref<1x32x384xbf16, #tpu.memory_space<vmem>>, vector<1x32x32xbf16>
    %35 = vector.shape_cast %34 : vector<1x32x32xbf16> to vector<32x32xbf16>
    %cst_20 = arith.constant dense<0.000000e+00> : vector<32x32xf32>
    %36 = tpu.matmul %31, %33, %cst_20 {dimension_numbers = #tpu.dot_dimension_numbers<[1], [1], [0], [0], [0, 0, 1, 0], [], []>} : vector<32x32xbf16>, vector<32x32xbf16>, vector<32x32xf32> -> vector<32x32xf32>
    %cst_21 = arith.constant 5.65685415 : f32
    %37 = vector.broadcast %cst_21 : f32 to vector<32x32xf32>
    %38 = arith.mulf %36, %37 : vector<32x32xf32>
    %39 = tpu.iota {dimensions = array<i32: 1>} : vector<32x32xi32>
    %c17_i32_22 = arith.constant 17 : i32
    %40 = vector.broadcast %c17_i32_22 : i32 to vector<32x32xi32>
    %41 = arith.cmpi slt, %39, %40 : vector<32x32xi32>
    %cst_23 = arith.constant -1.000000e+30 : f32
    %42 = vector.broadcast %cst_23 : f32 to vector<32x32xf32>
    %43 = arith.select %41, %38, %42 : vector<32x32xi1>, vector<32x32xf32>
    %cst_24 = arith.constant dense<0xFF800000> : vector<32xf32>
    %44 = vector.multi_reduction <maximumf>, %43, %cst_24 [1] : vector<32x32xf32> to vector<32xf32>
    %45 = vector.shape_cast %44 : vector<32xf32> to vector<32x1xf32>
    %46 = vector.broadcast %45 : vector<32x1xf32> to vector<32x32xf32>
    %47 = arith.subf %43, %46 : vector<32x32xf32>
    %48 = math.exp %47 : vector<32x32xf32>
    %cst_25 = arith.constant dense<0.000000e+00> : vector<32xf32>
    %49 = vector.multi_reduction <add>, %48, %cst_25 [1] : vector<32x32xf32> to vector<32xf32>
    %50 = vector.shape_cast %49 : vector<32xf32> to vector<32x1xf32>
    %51 = tpu.reciprocal %50 {approx = true} : vector<32x1xf32> -> vector<32x1xf32>
    %52 = vector.broadcast %51 : vector<32x1xf32> to vector<32x32xf32>
    %53 = arith.mulf %48, %52 : vector<32x32xf32>
    %54 = arith.truncf %53 : vector<32x32xf32> to vector<32x32xbf16>
    %cst_26 = arith.constant dense<0.000000e+00> : vector<32x32xf32>
    %55 = tpu.matmul %54, %35, %cst_26 {dimension_numbers = #tpu.dot_dimension_numbers<[1], [0], [0], [1], [0, 0, 1, 1], [], []>} : vector<32x32xbf16>, vector<32x32xbf16>, vector<32x32xf32> -> vector<32x32xf32>
    %56 = arith.truncf %55 : vector<32x32xf32> to vector<32x32xbf16>
    %c0_27 = arith.constant 0 : index
    %c0_28 = arith.constant 0 : index
    %c32_29 = arith.constant 32 : index
    %57 = vector.load %arg2[%c0_27, %c0_28, %c32_29] : memref<1x32x128xbf16, #tpu.memory_space<vmem>>, vector<1x32x32xbf16>
    %58 = vector.shape_cast %57 : vector<1x32x32xbf16> to vector<32x32xbf16>
    %59 = vector.shape_cast %56 : vector<32x32xbf16> to vector<1x32x32xbf16>
    tpu.vector_store %arg2[%c0_27, %c0_28, %c32_29], %59 {strides = array<i32>} : memref<1x32x128xbf16, #tpu.memory_space<vmem>>, vector<1x32x32xbf16>,
    %c0_30 = arith.constant 0 : index
    %c0_31 = arith.constant 0 : index
    %c64 = arith.constant 64 : index
    %60 = vector.load %arg1[%c0_30, %c0_31, %c64] : memref<1x32x384xbf16, #tpu.memory_space<vmem>>, vector<1x32x32xbf16>
    %61 = vector.shape_cast %60 : vector<1x32x32xbf16> to vector<32x32xbf16>
    %c0_32 = arith.constant 0 : index
    %c0_33 = arith.constant 0 : index
    %c192 = arith.constant 192 : index
    %62 = vector.load %arg1[%c0_32, %c0_33, %c192] : memref<1x32x384xbf16, #tpu.memory_space<vmem>>, vector<1x32x32xbf16>
    %63 = vector.shape_cast %62 : vector<1x32x32xbf16> to vector<32x32xbf16>
    %c0_34 = arith.constant 0 : index
    %c0_35 = arith.constant 0 : index
    %c320 = arith.constant 320 : index
    %64 = vector.load %arg1[%c0_34, %c0_35, %c320] : memref<1x32x384xbf16, #tpu.memory_space<vmem>>, vector<1x32x32xbf16>
    %65 = vector.shape_cast %64 : vector<1x32x32xbf16> to vector<32x32xbf16>
    %cst_36 = arith.constant dense<0.000000e+00> : vector<32x32xf32>
    %66 = tpu.matmul %61, %63, %cst_36 {dimension_numbers = #tpu.dot_dimension_numbers<[1], [1], [0], [0], [0, 0, 1, 0], [], []>} : vector<32x32xbf16>, vector<32x32xbf16>, vector<32x32xf32> -> vector<32x32xf32>
    %cst_37 = arith.constant 5.65685415 : f32
    %67 = vector.broadcast %cst_37 : f32 to vector<32x32xf32>
    %68 = arith.mulf %66, %67 : vector<32x32xf32>
    %69 = tpu.iota {dimensions = array<i32: 1>} : vector<32x32xi32>
    %c17_i32_38 = arith.constant 17 : i32
    %70 = vector.broadcast %c17_i32_38 : i32 to vector<32x32xi32>
    %71 = arith.cmpi slt, %69, %70 : vector<32x32xi32>
    %cst_39 = arith.constant -1.000000e+30 : f32
    %72 = vector.broadcast %cst_39 : f32 to vector<32x32xf32>
    %73 = arith.select %71, %68, %72 : vector<32x32xi1>, vector<32x32xf32>
    %cst_40 = arith.constant dense<0xFF800000> : vector<32xf32>
    %74 = vector.multi_reduction <maximumf>, %73, %cst_40 [1] : vector<32x32xf32> to vector<32xf32>
    %75 = vector.shape_cast %74 : vector<32xf32> to vector<32x1xf32>
    %76 = vector.broadcast %75 : vector<32x1xf32> to vector<32x32xf32>
    %77 = arith.subf %73, %76 : vector<32x32xf32>
    %78 = math.exp %77 : vector<32x32xf32>
    %cst_41 = arith.constant dense<0.000000e+00> : vector<32xf32>
    %79 = vector.multi_reduction <add>, %78, %cst_41 [1] : vector<32x32xf32> to vector<32xf32>
    %80 = vector.shape_cast %79 : vector<32xf32> to vector<32x1xf32>
    %81 = tpu.reciprocal %80 {approx = true} : vector<32x1xf32> -> vector<32x1xf32>
    %82 = vector.broadcast %81 : vector<32x1xf32> to vector<32x32xf32>
    %83 = arith.mulf %78, %82 : vector<32x32xf32>
    %84 = arith.truncf %83 : vector<32x32xf32> to vector<32x32xbf16>
    %cst_42 = arith.constant dense<0.000000e+00> : vector<32x32xf32>
    %85 = tpu.matmul %84, %65, %cst_42 {dimension_numbers = #tpu.dot_dimension_numbers<[1], [0], [0], [1], [0, 0, 1, 1], [], []>} : vector<32x32xbf16>, vector<32x32xbf16>, vector<32x32xf32> -> vector<32x32xf32>
    %86 = arith.truncf %85 : vector<32x32xf32> to vector<32x32xbf16>
    %c0_43 = arith.constant 0 : index
    %c0_44 = arith.constant 0 : index
    %c64_45 = arith.constant 64 : index
    %87 = vector.load %arg2[%c0_43, %c0_44, %c64_45] : memref<1x32x128xbf16, #tpu.memory_space<vmem>>, vector<1x32x32xbf16>
    %88 = vector.shape_cast %87 : vector<1x32x32xbf16> to vector<32x32xbf16>
    %89 = vector.shape_cast %86 : vector<32x32xbf16> to vector<1x32x32xbf16>
    tpu.vector_store %arg2[%c0_43, %c0_44, %c64_45], %89 {strides = array<i32>} : memref<1x32x128xbf16, #tpu.memory_space<vmem>>, vector<1x32x32xbf16>,
    %c0_46 = arith.constant 0 : index
    %c0_47 = arith.constant 0 : index
    %c96 = arith.constant 96 : index
    %90 = vector.load %arg1[%c0_46, %c0_47, %c96] : memref<1x32x384xbf16, #tpu.memory_space<vmem>>, vector<1x32x32xbf16>
    %91 = vector.shape_cast %90 : vector<1x32x32xbf16> to vector<32x32xbf16>
    %c0_48 = arith.constant 0 : index
    %c0_49 = arith.constant 0 : index
    %c224 = arith.constant 224 : index
    %92 = vector.load %arg1[%c0_48, %c0_49, %c224] : memref<1x32x384xbf16, #tpu.memory_space<vmem>>, vector<1x32x32xbf16>
    %93 = vector.shape_cast %92 : vector<1x32x32xbf16> to vector<32x32xbf16>
    %c0_50 = arith.constant 0 : index
    %c0_51 = arith.constant 0 : index
    %c352 = arith.constant 352 : index
    %94 = vector.load %arg1[%c0_50, %c0_51, %c352] : memref<1x32x384xbf16, #tpu.memory_space<vmem>>, vector<1x32x32xbf16>
    %95 = vector.shape_cast %94 : vector<1x32x32xbf16> to vector<32x32xbf16>
    %cst_52 = arith.constant dense<0.000000e+00> : vector<32x32xf32>
    %96 = tpu.matmul %91, %93, %cst_52 {dimension_numbers = #tpu.dot_dimension_numbers<[1], [1], [0], [0], [0, 0, 1, 0], [], []>} : vector<32x32xbf16>, vector<32x32xbf16>, vector<32x32xf32> -> vector<32x32xf32>
    %cst_53 = arith.constant 5.65685415 : f32
    %97 = vector.broadcast %cst_53 : f32 to vector<32x32xf32>
    %98 = arith.mulf %96, %97 : vector<32x32xf32>
    %99 = tpu.iota {dimensions = array<i32: 1>} : vector<32x32xi32>
    %c17_i32_54 = arith.constant 17 : i32
    %100 = vector.broadcast %c17_i32_54 : i32 to vector<32x32xi32>
    %101 = arith.cmpi slt, %99, %100 : vector<32x32xi32>
    %cst_55 = arith.constant -1.000000e+30 : f32
    %102 = vector.broadcast %cst_55 : f32 to vector<32x32xf32>
    %103 = arith.select %101, %98, %102 : vector<32x32xi1>, vector<32x32xf32>
    %cst_56 = arith.constant dense<0xFF800000> : vector<32xf32>
    %104 = vector.multi_reduction <maximumf>, %103, %cst_56 [1] : vector<32x32xf32> to vector<32xf32>
    %105 = vector.shape_cast %104 : vector<32xf32> to vector<32x1xf32>
    %106 = vector.broadcast %105 : vector<32x1xf32> to vector<32x32xf32>
    %107 = arith.subf %103, %106 : vector<32x32xf32>
    %108 = math.exp %107 : vector<32x32xf32>
    %cst_57 = arith.constant dense<0.000000e+00> : vector<32xf32>
    %109 = vector.multi_reduction <add>, %108, %cst_57 [1] : vector<32x32xf32> to vector<32xf32>
    %110 = vector.shape_cast %109 : vector<32xf32> to vector<32x1xf32>
    %111 = tpu.reciprocal %110 {approx = true} : vector<32x1xf32> -> vector<32x1xf32>
    %112 = vector.broadcast %111 : vector<32x1xf32> to vector<32x32xf32>
    %113 = arith.mulf %108, %112 : vector<32x32xf32>
    %114 = arith.truncf %113 : vector<32x32xf32> to vector<32x32xbf16>
    %cst_58 = arith.constant dense<0.000000e+00> : vector<32x32xf32>
    %115 = tpu.matmul %114, %95, %cst_58 {dimension_numbers = #tpu.dot_dimension_numbers<[1], [0], [0], [1], [0, 0, 1, 1], [], []>} : vector<32x32xbf16>, vector<32x32xbf16>, vector<32x32xf32> -> vector<32x32xf32>
    %116 = arith.truncf %115 : vector<32x32xf32> to vector<32x32xbf16>
    %c0_59 = arith.constant 0 : index
    %c0_60 = arith.constant 0 : index
    %c96_61 = arith.constant 96 : index
    %117 = vector.load %arg2[%c0_59, %c0_60, %c96_61] : memref<1x32x128xbf16, #tpu.memory_space<vmem>>, vector<1x32x32xbf16>
    %118 = vector.shape_cast %117 : vector<1x32x32xbf16> to vector<32x32xbf16>
    %119 = vector.shape_cast %116 : vector<32x32xbf16> to vector<1x32x32xbf16>
    tpu.vector_store %arg2[%c0_59, %c0_60, %c96_61], %119 {strides = array<i32>} : memref<1x32x128xbf16, #tpu.memory_space<vmem>>, vector<1x32x32xbf16>,
    return
  }
  func.func @transform_0(%arg0: i32) -> (i32, i32, i32) {
    %c0_i32 = arith.constant 0 : i32
    %c0_i32_0 = arith.constant 0 : i32
    %c0_i32_1 = arith.constant 0 : i32
    return %arg0, %c0_i32, %c0_i32_0 : i32, i32, i32
  }
  func.func @transform_1(%arg0: i32) -> (i32, i32, i32) {
    %c0_i32 = arith.constant 0 : i32
    %c0_i32_0 = arith.constant 0 : i32
    %c0_i32_1 = arith.constant 0 : i32
    return %arg0, %c0_i32, %c0_i32_0 : i32, i32, i32
  }
}

module attributes {stable_mosaic.version = 11 : i64} {
  func.func @_gemm_res_ln_kernel(%arg0: i32, %arg1: memref<32x128xbf16, #tpu.memory_space<vmem>>, %arg2: memref<128x128xbf16, #tpu.memory_space<vmem>>, %arg3: memref<1x128xf32, #tpu.memory_space<vmem>>, %arg4: memref<32x128xbf16, #tpu.memory_space<vmem>>, %arg5: memref<1x128xf32, #tpu.memory_space<vmem>>, %arg6: memref<1x128xf32, #tpu.memory_space<vmem>>, %arg7: memref<32x128xbf16, #tpu.memory_space<vmem>>) attributes {dimension_semantics = [#tpu.dimension_semantics<parallel>], iteration_bounds = array<i64: 2>, scalar_prefetch = 0 : i64, scratch_operands = 0 : i64, tpu.core_type = #tpu.core_type<tc>, window_params = [{transform_indices = @transform_0, window_bounds = array<i64: 32, 128>}, {pipeline_mode = #tpu.pipeline_mode<synchronous>, transform_indices = @transform_1, window_bounds = array<i64: 128, 128>}, {pipeline_mode = #tpu.pipeline_mode<synchronous>, transform_indices = @transform_2, window_bounds = array<i64: 1, 128>}, {transform_indices = @transform_3, window_bounds = array<i64: 32, 128>}, {pipeline_mode = #tpu.pipeline_mode<synchronous>, transform_indices = @transform_4, window_bounds = array<i64: 1, 128>}, {pipeline_mode = #tpu.pipeline_mode<synchronous>, transform_indices = @transform_5, window_bounds = array<i64: 1, 128>}, {transform_indices = @transform_6, window_bounds = array<i64: 32, 128>}]} {
    %c0 = arith.constant 0 : index
    %c0_0 = arith.constant 0 : index
    %0 = vector.load %arg1[%c0, %c0_0] : memref<32x128xbf16, #tpu.memory_space<vmem>>, vector<32x128xbf16>
    %c0_1 = arith.constant 0 : index
    %c0_2 = arith.constant 0 : index
    %1 = vector.load %arg2[%c0_1, %c0_2] : memref<128x128xbf16, #tpu.memory_space<vmem>>, vector<128x128xbf16>
    %cst = arith.constant dense<0.000000e+00> : vector<32x128xf32>
    %2 = tpu.matmul %0, %1, %cst {dimension_numbers = #tpu.dot_dimension_numbers<[1], [0], [0], [1], [0, 0, 1, 1], [], []>} : vector<32x128xbf16>, vector<128x128xbf16>, vector<32x128xf32> -> vector<32x128xf32>
    %c0_3 = arith.constant 0 : index
    %c0_4 = arith.constant 0 : index
    %3 = vector.load %arg3[%c0_3, %c0_4] : memref<1x128xf32, #tpu.memory_space<vmem>>, vector<1x128xf32>
    %4 = vector.broadcast %3 : vector<1x128xf32> to vector<32x128xf32>
    %5 = arith.addf %2, %4 : vector<32x128xf32>
    %c0_5 = arith.constant 0 : index
    %c0_6 = arith.constant 0 : index
    %6 = vector.load %arg4[%c0_5, %c0_6] : memref<32x128xbf16, #tpu.memory_space<vmem>>, vector<32x128xbf16>
    %7 = arith.extf %6 : vector<32x128xbf16> to vector<32x128xf32>
    %8 = arith.addf %5, %7 : vector<32x128xf32>
    %9 = tpu.iota {dimensions = array<i32: 1>} : vector<32x128xi32>
    %c128_i32 = arith.constant 128 : i32
    %10 = vector.broadcast %c128_i32 : i32 to vector<32x128xi32>
    %11 = arith.cmpi slt, %9, %10 : vector<32x128xi32>
    %cst_7 = arith.constant 0.000000e+00 : f32
    %12 = vector.broadcast %cst_7 : f32 to vector<32x128xf32>
    %13 = arith.select %11, %8, %12 : vector<32x128xi1>, vector<32x128xf32>
    %cst_8 = arith.constant dense<0.000000e+00> : vector<32xf32>
    %14 = vector.multi_reduction <add>, %13, %cst_8 [1] : vector<32x128xf32> to vector<32xf32>
    %15 = vector.shape_cast %14 : vector<32xf32> to vector<32x1xf32>
    %cst_9 = arith.constant 7.812500e-03 : f32
    %16 = vector.broadcast %cst_9 : f32 to vector<32x1xf32>
    %17 = arith.mulf %15, %16 : vector<32x1xf32>
    %18 = vector.broadcast %17 : vector<32x1xf32> to vector<32x128xf32>
    %19 = arith.subf %8, %18 : vector<32x128xf32>
    %cst_10 = arith.constant 0.000000e+00 : f32
    %20 = vector.broadcast %cst_10 : f32 to vector<32x128xf32>
    %21 = arith.select %11, %19, %20 : vector<32x128xi1>, vector<32x128xf32>
    %22 = arith.mulf %21, %21 : vector<32x128xf32>
    %cst_11 = arith.constant dense<0.000000e+00> : vector<32xf32>
    %23 = vector.multi_reduction <add>, %22, %cst_11 [1] : vector<32x128xf32> to vector<32xf32>
    %24 = vector.shape_cast %23 : vector<32xf32> to vector<32x1xf32>
    %cst_12 = arith.constant 7.812500e-03 : f32
    %25 = vector.broadcast %cst_12 : f32 to vector<32x1xf32>
    %26 = arith.mulf %24, %25 : vector<32x1xf32>
    %cst_13 = arith.constant 9.99999974E-6 : f32
    %27 = vector.broadcast %cst_13 : f32 to vector<32x1xf32>
    %28 = arith.addf %26, %27 : vector<32x1xf32>
    %29 = math.rsqrt %28 : vector<32x1xf32>
    %30 = vector.broadcast %29 : vector<32x1xf32> to vector<32x128xf32>
    %31 = arith.mulf %21, %30 : vector<32x128xf32>
    %c0_14 = arith.constant 0 : index
    %c0_15 = arith.constant 0 : index
    %32 = vector.load %arg5[%c0_14, %c0_15] : memref<1x128xf32, #tpu.memory_space<vmem>>, vector<1x128xf32>
    %33 = vector.broadcast %32 : vector<1x128xf32> to vector<32x128xf32>
    %34 = arith.mulf %31, %33 : vector<32x128xf32>
    %c0_16 = arith.constant 0 : index
    %c0_17 = arith.constant 0 : index
    %35 = vector.load %arg6[%c0_16, %c0_17] : memref<1x128xf32, #tpu.memory_space<vmem>>, vector<1x128xf32>
    %36 = vector.broadcast %35 : vector<1x128xf32> to vector<32x128xf32>
    %37 = arith.addf %34, %36 : vector<32x128xf32>
    %38 = arith.truncf %37 : vector<32x128xf32> to vector<32x128xbf16>
    %c0_18 = arith.constant 0 : index
    %c0_19 = arith.constant 0 : index
    %39 = vector.load %arg7[%c0_18, %c0_19] : memref<32x128xbf16, #tpu.memory_space<vmem>>, vector<32x128xbf16>
    tpu.vector_store %arg7[%c0_18, %c0_19], %38 {strides = array<i32>} : memref<32x128xbf16, #tpu.memory_space<vmem>>, vector<32x128xbf16>,
    return
  }
  func.func @transform_0(%arg0: i32) -> (i32, i32) {
    %c0_i32 = arith.constant 0 : i32
    %c0_i32_0 = arith.constant 0 : i32
    return %arg0, %c0_i32 : i32, i32
  }
  func.func @transform_1(%arg0: i32) -> (i32, i32) {
    %c0_i32 = arith.constant 0 : i32
    %c0_i32_0 = arith.constant 0 : i32
    %c0_i32_1 = arith.constant 0 : i32
    return %c0_i32, %c0_i32_0 : i32, i32
  }
  func.func @transform_2(%arg0: i32) -> (i32, i32) {
    %c0_i32 = arith.constant 0 : i32
    %c0_i32_0 = arith.constant 0 : i32
    %c0_i32_1 = arith.constant 0 : i32
    return %c0_i32, %c0_i32_0 : i32, i32
  }
  func.func @transform_3(%arg0: i32) -> (i32, i32) {
    %c0_i32 = arith.constant 0 : i32
    %c0_i32_0 = arith.constant 0 : i32
    return %arg0, %c0_i32 : i32, i32
  }
  func.func @transform_4(%arg0: i32) -> (i32, i32) {
    %c0_i32 = arith.constant 0 : i32
    %c0_i32_0 = arith.constant 0 : i32
    %c0_i32_1 = arith.constant 0 : i32
    return %c0_i32, %c0_i32_0 : i32, i32
  }
  func.func @transform_5(%arg0: i32) -> (i32, i32) {
    %c0_i32 = arith.constant 0 : i32
    %c0_i32_0 = arith.constant 0 : i32
    %c0_i32_1 = arith.constant 0 : i32
    return %c0_i32, %c0_i32_0 : i32, i32
  }
  func.func @transform_6(%arg0: i32) -> (i32, i32) {
    %c0_i32 = arith.constant 0 : i32
    %c0_i32_0 = arith.constant 0 : i32
    return %arg0, %c0_i32 : i32, i32
  }
}

module attributes {stable_mosaic.version = 11 : i64} {
  func.func @_gemm_bias_kernel(%arg0: i32, %arg1: i32, %arg2: memref<32x128xbf16, #tpu.memory_space<vmem>>, %arg3: memref<128x256xbf16, #tpu.memory_space<vmem>>, %arg4: memref<1x256xf32, #tpu.memory_space<vmem>>, %arg5: memref<32x256xbf16, #tpu.memory_space<vmem>>) attributes {dimension_semantics = [#tpu.dimension_semantics<parallel>, #tpu.dimension_semantics<parallel>], iteration_bounds = array<i64: 2, 1>, scalar_prefetch = 0 : i64, scratch_operands = 0 : i64, tpu.core_type = #tpu.core_type<tc>, window_params = [{transform_indices = @transform_0, window_bounds = array<i64: 32, 128>}, {transform_indices = @transform_1, window_bounds = array<i64: 128, 256>}, {transform_indices = @transform_2, window_bounds = array<i64: 1, 256>}, {transform_indices = @transform_3, window_bounds = array<i64: 32, 256>}]} {
    %c0 = arith.constant 0 : index
    %c0_0 = arith.constant 0 : index
    %0 = vector.load %arg2[%c0, %c0_0] : memref<32x128xbf16, #tpu.memory_space<vmem>>, vector<32x128xbf16>
    %c0_1 = arith.constant 0 : index
    %c0_2 = arith.constant 0 : index
    %1 = vector.load %arg3[%c0_1, %c0_2] : memref<128x256xbf16, #tpu.memory_space<vmem>>, vector<128x256xbf16>
    %cst = arith.constant dense<0.000000e+00> : vector<32x256xf32>
    %2 = tpu.matmul %0, %1, %cst {dimension_numbers = #tpu.dot_dimension_numbers<[1], [0], [0], [1], [0, 0, 1, 1], [], []>} : vector<32x128xbf16>, vector<128x256xbf16>, vector<32x256xf32> -> vector<32x256xf32>
    %c0_3 = arith.constant 0 : index
    %c0_4 = arith.constant 0 : index
    %3 = vector.load %arg4[%c0_3, %c0_4] : memref<1x256xf32, #tpu.memory_space<vmem>>, vector<1x256xf32>
    %4 = vector.broadcast %3 : vector<1x256xf32> to vector<32x256xf32>
    %5 = arith.addf %2, %4 : vector<32x256xf32>
    %cst_5 = arith.constant 5.000000e-01 : f32
    %6 = vector.broadcast %cst_5 : f32 to vector<32x256xf32>
    %7 = arith.mulf %6, %5 : vector<32x256xf32>
    %cst_6 = arith.constant 4.471500e-02 : f32
    %8 = vector.broadcast %cst_6 : f32 to vector<32x256xf32>
    %9 = arith.mulf %8, %5 : vector<32x256xf32>
    %10 = arith.mulf %9, %5 : vector<32x256xf32>
    %11 = arith.mulf %10, %5 : vector<32x256xf32>
    %12 = arith.addf %5, %11 : vector<32x256xf32>
    %cst_7 = arith.constant 0.797884583 : f32
    %13 = vector.broadcast %cst_7 : f32 to vector<32x256xf32>
    %14 = arith.mulf %13, %12 : vector<32x256xf32>
    %15 = math.tanh %14 : vector<32x256xf32>
    %cst_8 = arith.constant 1.000000e+00 : f32
    %16 = vector.broadcast %cst_8 : f32 to vector<32x256xf32>
    %17 = arith.addf %16, %15 : vector<32x256xf32>
    %18 = arith.mulf %7, %17 : vector<32x256xf32>
    %19 = arith.truncf %18 : vector<32x256xf32> to vector<32x256xbf16>
    %c0_9 = arith.constant 0 : index
    %c0_10 = arith.constant 0 : index
    %20 = vector.load %arg5[%c0_9, %c0_10] : memref<32x256xbf16, #tpu.memory_space<vmem>>, vector<32x256xbf16>
    tpu.vector_store %arg5[%c0_9, %c0_10], %19 {strides = array<i32>} : memref<32x256xbf16, #tpu.memory_space<vmem>>, vector<32x256xbf16>,
    return
  }
  func.func @transform_0(%arg0: i32, %arg1: i32) -> (i32, i32) {
    %c0_i32 = arith.constant 0 : i32
    %c0_i32_0 = arith.constant 0 : i32
    return %arg0, %c0_i32 : i32, i32
  }
  func.func @transform_1(%arg0: i32, %arg1: i32) -> (i32, i32) {
    %c0_i32 = arith.constant 0 : i32
    %c0_i32_0 = arith.constant 0 : i32
    return %c0_i32, %arg1 : i32, i32
  }
  func.func @transform_2(%arg0: i32, %arg1: i32) -> (i32, i32) {
    %c0_i32 = arith.constant 0 : i32
    %c0_i32_0 = arith.constant 0 : i32
    return %c0_i32, %arg1 : i32, i32
  }
  func.func @transform_3(%arg0: i32, %arg1: i32) -> (i32, i32) {
    %c0_i32 = arith.constant 0 : i32
    return %arg0, %arg1 : i32, i32
  }
}

module attributes {stable_mosaic.version = 11 : i64} {
  func.func @_gemm_res_ln_kernel(%arg0: i32, %arg1: memref<32x256xbf16, #tpu.memory_space<vmem>>, %arg2: memref<256x128xbf16, #tpu.memory_space<vmem>>, %arg3: memref<1x128xf32, #tpu.memory_space<vmem>>, %arg4: memref<32x128xbf16, #tpu.memory_space<vmem>>, %arg5: memref<1x128xf32, #tpu.memory_space<vmem>>, %arg6: memref<1x128xf32, #tpu.memory_space<vmem>>, %arg7: memref<32x128xbf16, #tpu.memory_space<vmem>>) attributes {dimension_semantics = [#tpu.dimension_semantics<parallel>], iteration_bounds = array<i64: 2>, scalar_prefetch = 0 : i64, scratch_operands = 0 : i64, tpu.core_type = #tpu.core_type<tc>, window_params = [{transform_indices = @transform_0, window_bounds = array<i64: 32, 256>}, {pipeline_mode = #tpu.pipeline_mode<synchronous>, transform_indices = @transform_1, window_bounds = array<i64: 256, 128>}, {pipeline_mode = #tpu.pipeline_mode<synchronous>, transform_indices = @transform_2, window_bounds = array<i64: 1, 128>}, {transform_indices = @transform_3, window_bounds = array<i64: 32, 128>}, {pipeline_mode = #tpu.pipeline_mode<synchronous>, transform_indices = @transform_4, window_bounds = array<i64: 1, 128>}, {pipeline_mode = #tpu.pipeline_mode<synchronous>, transform_indices = @transform_5, window_bounds = array<i64: 1, 128>}, {transform_indices = @transform_6, window_bounds = array<i64: 32, 128>}]} {
    %c0 = arith.constant 0 : index
    %c0_0 = arith.constant 0 : index
    %0 = vector.load %arg1[%c0, %c0_0] : memref<32x256xbf16, #tpu.memory_space<vmem>>, vector<32x256xbf16>
    %c0_1 = arith.constant 0 : index
    %c0_2 = arith.constant 0 : index
    %1 = vector.load %arg2[%c0_1, %c0_2] : memref<256x128xbf16, #tpu.memory_space<vmem>>, vector<256x128xbf16>
    %cst = arith.constant dense<0.000000e+00> : vector<32x128xf32>
    %2 = tpu.matmul %0, %1, %cst {dimension_numbers = #tpu.dot_dimension_numbers<[1], [0], [0], [1], [0, 0, 1, 1], [], []>} : vector<32x256xbf16>, vector<256x128xbf16>, vector<32x128xf32> -> vector<32x128xf32>
    %c0_3 = arith.constant 0 : index
    %c0_4 = arith.constant 0 : index
    %3 = vector.load %arg3[%c0_3, %c0_4] : memref<1x128xf32, #tpu.memory_space<vmem>>, vector<1x128xf32>
    %4 = vector.broadcast %3 : vector<1x128xf32> to vector<32x128xf32>
    %5 = arith.addf %2, %4 : vector<32x128xf32>
    %c0_5 = arith.constant 0 : index
    %c0_6 = arith.constant 0 : index
    %6 = vector.load %arg4[%c0_5, %c0_6] : memref<32x128xbf16, #tpu.memory_space<vmem>>, vector<32x128xbf16>
    %7 = arith.extf %6 : vector<32x128xbf16> to vector<32x128xf32>
    %8 = arith.addf %5, %7 : vector<32x128xf32>
    %9 = tpu.iota {dimensions = array<i32: 1>} : vector<32x128xi32>
    %c128_i32 = arith.constant 128 : i32
    %10 = vector.broadcast %c128_i32 : i32 to vector<32x128xi32>
    %11 = arith.cmpi slt, %9, %10 : vector<32x128xi32>
    %cst_7 = arith.constant 0.000000e+00 : f32
    %12 = vector.broadcast %cst_7 : f32 to vector<32x128xf32>
    %13 = arith.select %11, %8, %12 : vector<32x128xi1>, vector<32x128xf32>
    %cst_8 = arith.constant dense<0.000000e+00> : vector<32xf32>
    %14 = vector.multi_reduction <add>, %13, %cst_8 [1] : vector<32x128xf32> to vector<32xf32>
    %15 = vector.shape_cast %14 : vector<32xf32> to vector<32x1xf32>
    %cst_9 = arith.constant 7.812500e-03 : f32
    %16 = vector.broadcast %cst_9 : f32 to vector<32x1xf32>
    %17 = arith.mulf %15, %16 : vector<32x1xf32>
    %18 = vector.broadcast %17 : vector<32x1xf32> to vector<32x128xf32>
    %19 = arith.subf %8, %18 : vector<32x128xf32>
    %cst_10 = arith.constant 0.000000e+00 : f32
    %20 = vector.broadcast %cst_10 : f32 to vector<32x128xf32>
    %21 = arith.select %11, %19, %20 : vector<32x128xi1>, vector<32x128xf32>
    %22 = arith.mulf %21, %21 : vector<32x128xf32>
    %cst_11 = arith.constant dense<0.000000e+00> : vector<32xf32>
    %23 = vector.multi_reduction <add>, %22, %cst_11 [1] : vector<32x128xf32> to vector<32xf32>
    %24 = vector.shape_cast %23 : vector<32xf32> to vector<32x1xf32>
    %cst_12 = arith.constant 7.812500e-03 : f32
    %25 = vector.broadcast %cst_12 : f32 to vector<32x1xf32>
    %26 = arith.mulf %24, %25 : vector<32x1xf32>
    %cst_13 = arith.constant 9.99999974E-6 : f32
    %27 = vector.broadcast %cst_13 : f32 to vector<32x1xf32>
    %28 = arith.addf %26, %27 : vector<32x1xf32>
    %29 = math.rsqrt %28 : vector<32x1xf32>
    %30 = vector.broadcast %29 : vector<32x1xf32> to vector<32x128xf32>
    %31 = arith.mulf %21, %30 : vector<32x128xf32>
    %c0_14 = arith.constant 0 : index
    %c0_15 = arith.constant 0 : index
    %32 = vector.load %arg5[%c0_14, %c0_15] : memref<1x128xf32, #tpu.memory_space<vmem>>, vector<1x128xf32>
    %33 = vector.broadcast %32 : vector<1x128xf32> to vector<32x128xf32>
    %34 = arith.mulf %31, %33 : vector<32x128xf32>
    %c0_16 = arith.constant 0 : index
    %c0_17 = arith.constant 0 : index
    %35 = vector.load %arg6[%c0_16, %c0_17] : memref<1x128xf32, #tpu.memory_space<vmem>>, vector<1x128xf32>
    %36 = vector.broadcast %35 : vector<1x128xf32> to vector<32x128xf32>
    %37 = arith.addf %34, %36 : vector<32x128xf32>
    %38 = arith.truncf %37 : vector<32x128xf32> to vector<32x128xbf16>
    %c0_18 = arith.constant 0 : index
    %c0_19 = arith.constant 0 : index
    %39 = vector.load %arg7[%c0_18, %c0_19] : memref<32x128xbf16, #tpu.memory_space<vmem>>, vector<32x128xbf16>
    tpu.vector_store %arg7[%c0_18, %c0_19], %38 {strides = array<i32>} : memref<32x128xbf16, #tpu.memory_space<vmem>>, vector<32x128xbf16>,
    return
  }
  func.func @transform_0(%arg0: i32) -> (i32, i32) {
    %c0_i32 = arith.constant 0 : i32
    %c0_i32_0 = arith.constant 0 : i32
    return %arg0, %c0_i32 : i32, i32
  }
  func.func @transform_1(%arg0: i32) -> (i32, i32) {
    %c0_i32 = arith.constant 0 : i32
    %c0_i32_0 = arith.constant 0 : i32
    %c0_i32_1 = arith.constant 0 : i32
    return %c0_i32, %c0_i32_0 : i32, i32
  }
  func.func @transform_2(%arg0: i32) -> (i32, i32) {
    %c0_i32 = arith.constant 0 : i32
    %c0_i32_0 = arith.constant 0 : i32
    %c0_i32_1 = arith.constant 0 : i32
    return %c0_i32, %c0_i32_0 : i32, i32
  }
  func.func @transform_3(%arg0: i32) -> (i32, i32) {
    %c0_i32 = arith.constant 0 : i32
    %c0_i32_0 = arith.constant 0 : i32
    return %arg0, %c0_i32 : i32, i32
  }
  func.func @transform_4(%arg0: i32) -> (i32, i32) {
    %c0_i32 = arith.constant 0 : i32
    %c0_i32_0 = arith.constant 0 : i32
    %c0_i32_1 = arith.constant 0 : i32
    return %c0_i32, %c0_i32_0 : i32, i32
  }
  func.func @transform_5(%arg0: i32) -> (i32, i32) {
    %c0_i32 = arith.constant 0 : i32
    %c0_i32_0 = arith.constant 0 : i32
    %c0_i32_1 = arith.constant 0 : i32
    return %c0_i32, %c0_i32_0 : i32, i32
  }
  func.func @transform_6(%arg0: i32) -> (i32, i32) {
    %c0_i32 = arith.constant 0 : i32
    %c0_i32_0 = arith.constant 0 : i32
    return %arg0, %c0_i32 : i32, i32
  }
}

module attributes {stable_mosaic.version = 11 : i64} {
  func.func @_gemm_bias_kernel(%arg0: i32, %arg1: i32, %arg2: memref<16x128xbf16, #tpu.memory_space<vmem>>, %arg3: memref<128x128xbf16, #tpu.memory_space<vmem>>, %arg4: memref<1x128xf32, #tpu.memory_space<vmem>>, %arg5: memref<16x128xf32, #tpu.memory_space<vmem>>) attributes {dimension_semantics = [#tpu.dimension_semantics<parallel>, #tpu.dimension_semantics<parallel>], iteration_bounds = array<i64: 1, 1>, scalar_prefetch = 0 : i64, scratch_operands = 0 : i64, tpu.core_type = #tpu.core_type<tc>, window_params = [{transform_indices = @transform_0, window_bounds = array<i64: 16, 128>}, {transform_indices = @transform_1, window_bounds = array<i64: 128, 128>}, {transform_indices = @transform_2, window_bounds = array<i64: 1, 128>}, {transform_indices = @transform_3, window_bounds = array<i64: 16, 128>}]} {
    %c0 = arith.constant 0 : index
    %c0_0 = arith.constant 0 : index
    %0 = vector.load %arg2[%c0, %c0_0] : memref<16x128xbf16, #tpu.memory_space<vmem>>, vector<16x128xbf16>
    %c0_1 = arith.constant 0 : index
    %c0_2 = arith.constant 0 : index
    %1 = vector.load %arg3[%c0_1, %c0_2] : memref<128x128xbf16, #tpu.memory_space<vmem>>, vector<128x128xbf16>
    %cst = arith.constant dense<0.000000e+00> : vector<16x128xf32>
    %2 = tpu.matmul %0, %1, %cst {dimension_numbers = #tpu.dot_dimension_numbers<[1], [0], [0], [1], [0, 0, 1, 1], [], []>} : vector<16x128xbf16>, vector<128x128xbf16>, vector<16x128xf32> -> vector<16x128xf32>
    %c0_3 = arith.constant 0 : index
    %c0_4 = arith.constant 0 : index
    %3 = vector.load %arg4[%c0_3, %c0_4] : memref<1x128xf32, #tpu.memory_space<vmem>>, vector<1x128xf32>
    %4 = vector.broadcast %3 : vector<1x128xf32> to vector<16x128xf32>
    %5 = arith.addf %2, %4 : vector<16x128xf32>
    %c0_5 = arith.constant 0 : index
    %c0_6 = arith.constant 0 : index
    %6 = vector.load %arg5[%c0_5, %c0_6] : memref<16x128xf32, #tpu.memory_space<vmem>>, vector<16x128xf32>
    tpu.vector_store %arg5[%c0_5, %c0_6], %5 {strides = array<i32>} : memref<16x128xf32, #tpu.memory_space<vmem>>, vector<16x128xf32>,
    return
  }
  func.func @transform_0(%arg0: i32, %arg1: i32) -> (i32, i32) {
    %c0_i32 = arith.constant 0 : i32
    %c0_i32_0 = arith.constant 0 : i32
    return %arg0, %c0_i32 : i32, i32
  }
  func.func @transform_1(%arg0: i32, %arg1: i32) -> (i32, i32) {
    %c0_i32 = arith.constant 0 : i32
    %c0_i32_0 = arith.constant 0 : i32
    return %c0_i32, %arg1 : i32, i32
  }
  func.func @transform_2(%arg0: i32, %arg1: i32) -> (i32, i32) {
    %c0_i32 = arith.constant 0 : i32
    %c0_i32_0 = arith.constant 0 : i32
    return %c0_i32, %arg1 : i32, i32
  }
  func.func @transform_3(%arg0: i32, %arg1: i32) -> (i32, i32) {
    %c0_i32 = arith.constant 0 : i32
    return %arg0, %arg1 : i32, i32
  }
}

</mosaic_0001>

<llo_original>
// kernel: vit_forward.13
$region0: #{vit_forward.13}
  #allocation0 [shape = 'u32[]', space=smem, size = 0x4, offset = 0x4, fixed_abs, tag = 'smem constant byte address 0x4 - core index']
  #allocation1 [shape = 'u32[144,128]{1,0:T(1,128)}', space=vmem, size = 0x12000, scoped, tag = 'internal scratch']
  %s0 = inlined_call_operand.vmem [shape: bf16[64,128], index: 0, kind: input, shape index: {}]
  %s1 = inlined_call_operand.vmem [shape: bf16[128,384], index: 1, kind: input, shape index: {}]
  %s2 = inlined_call_operand.vmem [shape: f32[1,384], index: 2, kind: input, shape index: {}]
  %s3 = inlined_call_operand.vmem [shape: bf16[64,384], index: 3, kind: output, shape index: {}]
  %s4 = sld [smem:[#allocation0]]
  $region45: #{vit_forward.13} parent=0
    _
  %s6 = ssub.s32 1, %s4
  %s7 = scalar_select 0, %s6, %s4
  loop: start=0, step=1, limit=4
  $region2: #{vit_forward.13} parent=0 // loop_pre_header
    _
  $region3: #{vit_forward.13} parent=0 // loop_header
    %s9 = sphi 0, %s13
    %p10 = scmp.ge.s32.totalorder %s9, 4
    %s16 = sphi 0, %s28
    %s17 = sphi 0, %s24
    %s18 = sphi 0, %s16
    %s19 = sphi 0, %s17
    %s20 = sphi 0, %s18
    %s21 = sphi 0, %s19
    %s31 = sphi 0, %s33
    %s34 = sphi 0, %s31
    %s35 = sphi 0, %s34
    %s51 = sphi 0, %s35
    %s57 = sphi 0, %s59
    %s60 = sphi 0, %s57
    %s61 = sphi 0, %s60
    %s77 = sphi 0, %s61
    %s83 = sphi 0, %s85
    %s86 = sphi 0, %s83
    %s87 = sphi 0, %s86
    %s103 = sphi 0, %s87
    %s111 = sphi 0, %s113
    %s114 = sphi 0, %s111
    %s115 = sphi 0, %s114
    %s131 = sphi 0, %s115
  $region4: #{vit_forward.13} parent=0 // loop_header_branch
    %12 = sbr.rel (%p10) target = $region8
  $region5: #{vit_forward.13} parent=0 // loop_body
    %s14 = ssub.s32 %s9, 1
    %s15 = ssub.s32 %s9, 2
    %s22 = sadd.s32 1, %s17
    %p23 = scmp.ge.s32.totalorder %s22, 1
    %s24 = scalar_select %p23, 0, %s22
    %s25 = sadd.s32 1, %s16
    %s26 = scalar_select %p23, %s25, %s16
    %p27 = scmp.ge.s32.totalorder %s26, 2
    %s28 = scalar_select %p27, 0, %s26
    %s29 = ssub.s32 %s16, %s28
    %p30 = scmp.eq.s32.totalorder %s29, 0
    %s32 = sadd.s32 %s31, 1
    %s33 = scalar_select %p30, %s31, %s32
    %p36 = pneg %p30
    %p37 = scmp.eq.s32.totalorder %s9, 1
    %p38 = por %p36, %p37
    %p39 = scmp.ne.s32.totalorder %s31, %s34
    %p40 = scmp.eq.s32.totalorder %s9, 0
    %p41 = por %p39, %p40
    %p42 = scmp.ne.s32.totalorder %s31, %s34
    %p43 = scmp.eq.s32.totalorder %s14, 1
    %p44 = por %p42, %p43
    %p45 = scmp.ne.s32.totalorder %s34, %s35
    %p46 = scmp.eq.s32.totalorder %s14, 0
    %p47 = por %p45, %p46
    %p48 = scmp.ne.s32.totalorder %s34, %s35
    %p49 = scmp.eq.s32.totalorder %s15, 1
    %p50 = por %p48, %p49
    %p52 = scmp.ne.s32.totalorder %s35, %s51
    %p53 = scmp.eq.s32.totalorder %s15, 0
    %p54 = por %p52, %p53
    %s55 = ssub.s32 %s17, %s24
    %p56 = scmp.eq.s32.totalorder %s55, 0
    %s58 = sadd.s32 %s57, 1
    %s59 = scalar_select %p56, %s57, %s58
    %p62 = pneg %p56
    %p63 = scmp.eq.s32.totalorder %s9, 1
    %p64 = por %p62, %p63
    %p65 = scmp.ne.s32.totalorder %s57, %s60
    %p66 = scmp.eq.s32.totalorder %s9, 0
    %p67 = por %p65, %p66
    %p68 = scmp.ne.s32.totalorder %s57, %s60
    %p69 = scmp.eq.s32.totalorder %s14, 1
    %p70 = por %p68, %p69
    %p71 = scmp.ne.s32.totalorder %s60, %s61
    %p72 = scmp.eq.s32.totalorder %s14, 0
    %p73 = por %p71, %p72
    %p74 = scmp.ne.s32.totalorder %s60, %s61
    %p75 = scmp.eq.s32.totalorder %s15, 1
    %p76 = por %p74, %p75
    %p78 = scmp.ne.s32.totalorder %s61, %s77
    %p79 = scmp.eq.s32.totalorder %s15, 0
    %p80 = por %p78, %p79
    %s81 = ssub.s32 %s17, %s24
    %p82 = scmp.eq.s32.totalorder %s81, 0
    %s84 = sadd.s32 %s83, 1
    %s85 = scalar_select %p82, %s83, %s84
    %p88 = pneg %p82
    %p89 = scmp.eq.s32.totalorder %s9, 1
    %p90 = por %p88, %p89
    %p91 = scmp.ne.s32.totalorder %s83, %s86
    %p92 = scmp.eq.s32.totalorder %s9, 0
    %p93 = por %p91, %p92
    %p94 = scmp.ne.s32.totalorder %s83, %s86
    %p95 = scmp.eq.s32.totalorder %s14, 1
    %p96 = por %p94, %p95
    %p97 = scmp.ne.s32.totalorder %s86, %s87
    %p98 = scmp.eq.s32.totalorder %s14, 0
    %p99 = por %p97, %p98
    %p100 = scmp.ne.s32.totalorder %s86, %s87
    %p101 = scmp.eq.s32.totalorder %s15, 1
    %p102 = por %p100, %p101
    %p104 = scmp.ne.s32.totalorder %s87, %s103
    %p105 = scmp.eq.s32.totalorder %s15, 0
    %p106 = por %p104, %p105
    %s107 = ssub.s32 %s16, %s28
    %s108 = ssub.s32 %s17, %s24
    %s109 = sor.u32 %s107, %s108
    %p110 = scmp.eq.s32.totalorder %s109, 0
    %s112 = sadd.s32 %s111, 1
    %s113 = scalar_select %p110, %s111, %s112
    %p116 = pneg %p110
    %p117 = scmp.eq.s32.totalorder %s9, 1
    %p118 = por %p116, %p117
    %p119 = scmp.ne.s32.totalorder %s111, %s114
    %p120 = scmp.eq.s32.totalorder %s9, 0
    %p121 = por %p119, %p120
    %p122 = scmp.ne.s32.totalorder %s111, %s114
    %p123 = scmp.eq.s32.totalorder %s14, 1
    %p124 = por %p122, %p123
    %p125 = scmp.ne.s32.totalorder %s114, %s115
    %p126 = scmp.eq.s32.totalorder %s14, 0
    %p127 = por %p125, %p126
    %p128 = scmp.ne.s32.totalorder %s114, %s115
    %p129 = scmp.eq.s32.totalorder %s15, 1
    %p130 = por %p128, %p129
    %p132 = scmp.ne.s32.totalorder %s115, %s131
    %p133 = scmp.eq.s32.totalorder %s15, 0
    %p134 = por %p132, %p133
    %p135 = scmp.le.s32.totalorder 1, %s9
    %p136 = scmp.lt.s32.totalorder %s9, 3
    %p137 = pnand %p135, %p136
    %p138 = pneg %p137
    // Predicated region
    $region9: #{vit_forward.13} parent=5 // pred_check
      _
    $region10: #{vit_forward.13} parent=5 // pred_check_branch
      %140 = sbr.rel (%p137) target = $region12
    $region11: #{vit_forward.13} parent=5 // pred_region
      %s141 = ssub.s32 %s9, 1
      // Predicated region
      $region13: #{vit_forward.13} parent=11 // pred_check
        %p142 = pneg %p73
      $region14: #{vit_forward.13} parent=11 // pred_check_branch
        %144 = sbr.rel (%p142) target = $region16
      $region15: #{vit_forward.13} parent=11 // pred_region
        %s145 = smul.u32 3, %s19
        %p146 = scmp.lt.s32.totalorder %s145, 2
        %s147 = scalar_select %p146, %s145, 2
        %s148 = smul.addr %s147, 4
        %s149 = scalar_lea.vmem %s1, %s148
        %s150 = smul.u32 3, %s19
      $region16: #{vit_forward.13} parent=11 // pred_fallthru
        _
      // Predicated region
      $region17: #{vit_forward.13} parent=11 // pred_check
        %p151 = pneg %p99
      $region18: #{vit_forward.13} parent=11 // pred_check_branch
        %153 = sbr.rel (%p151) target = $region20
      $region19: #{vit_forward.13} parent=11 // pred_region
        %s154 = smul.u32 3, %s19
        %p155 = scmp.lt.s32.totalorder %s154, 2
        %s156 = scalar_select %p155, %s154, 2
        %s157 = scalar_lea.vmem %s2, %s156
        %s158 = smul.u32 3, %s19
      $region20: #{vit_forward.13} parent=11 // pred_fallthru
        _
    $region12: #{vit_forward.13} parent=5 // pred_fallthru
      _
    %p159 = scmp.lt.s32.totalorder %s9, 2
    // Predicated region
    $region21: #{vit_forward.13} parent=5 // pred_check
      %p160 = pneg %p159
    $region22: #{vit_forward.13} parent=5 // pred_check_branch
      %162 = sbr.rel (%p160) target = $region24
    $region23: #{vit_forward.13} parent=5 // pred_region
      // Predicated region
      $region25: #{vit_forward.13} parent=23 // pred_check
        %p163 = pneg %p41
      $region26: #{vit_forward.13} parent=23 // pred_check_branch
        %165 = sbr.rel (%p163) target = $region28
      $region27: #{vit_forward.13} parent=23 // pred_region
        %s166 = smul.u32 4, %s16
        %p167 = scmp.lt.s32.totalorder %s166, 7
        %s168 = scalar_select %p167, %s166, 7
        %s169 = smul.addr %s168, 4
        %s170 = scalar_lea.vmem %s0, %s169
        %s171 = smul.u32 4, %s16
      $region28: #{vit_forward.13} parent=23 // pred_fallthru
        _
    $region24: #{vit_forward.13} parent=5 // pred_fallthru
      _
    %p172 = scmp.le.s32.totalorder 1, %s9
    %p173 = scmp.lt.s32.totalorder %s9, 3
    %p174 = pnand %p172, %p173
    %p175 = pneg %p174
    // Predicated region
    $region29: #{vit_forward.13} parent=5 // pred_check
      _
    $region30: #{vit_forward.13} parent=5 // pred_check_branch
      %177 = sbr.rel (%p174) target = $region32
    $region31: #{vit_forward.13} parent=5 // pred_region
      %s178 = ssub.s32 %s9, 1
      %s179 = smul.u32 4, %s18
      %p180 = scmp.lt.s32.totalorder %s179, 7
      %s181 = scalar_select %p180, %s179, 7
      %s182 = smul.addr %s181, 4
      %s183 = scalar_lea.vmem %s0, %s182
      %p184 = pneg %p47
      %p185 = pneg %p44
      %s186 = smul.u32 3, %s19
      %p187 = scmp.lt.s32.totalorder %s186, 2
      %s188 = scalar_select %p187, %s186, 2
      %s189 = smul.addr %s188, 4
      %s190 = scalar_lea.vmem %s1, %s189
      %p191 = pneg %p73
      %p192 = pneg %p70
      %s193 = smul.u32 3, %s19
      %p194 = scmp.lt.s32.totalorder %s193, 2
      %s195 = scalar_select %p194, %s193, 2
      %s196 = scalar_lea.vmem %s2, %s195
      %p197 = pneg %p99
      %p198 = pneg %p96
      %p199 = pneg %p127
      %p200 = pneg %p124
      %s201 = smul.u32 4, %s18
      %s202 = smul.u32 3, %s19
      %p203 = scmp.lt.s32.totalorder %s201, 7
      %s204 = scalar_select %p203, %s201, 7
      %p205 = scmp.lt.s32.totalorder %s202, 2
      %s206 = scalar_select %p205, %s202, 2
      %s207 = smul.addr %s204, 3
      %s208 = sadd.s32 %s206, %s207
      %s209 = smul.addr %s208, 4
      %s210 = scalar_lea.vmem %s3, %s209
      %s211 = smul.u32 4, %s18
      %p212 = scmp.lt.s32.totalorder %s211, 7
      %s213 = scalar_select %p212, %s211, 7
      %s214 = smul.addr %s213, 4
      %s215 = scalar_lea.vmem %s0, %s214
      %s216 = smul.u32 4, %s18
      %s217 = smul.u32 3, %s19
      %p218 = scmp.lt.s32.totalorder %s217, 2
      %s219 = scalar_select %p218, %s217, 2
      %s220 = smul.addr %s219, 4
      %s221 = scalar_lea.vmem %s1, %s220
      %s222 = smul.u32 3, %s19
      %s223 = smul.u32 3, %s19
      %p224 = scmp.lt.s32.totalorder %s223, 2
      %s225 = scalar_select %p224, %s223, 2
      %s226 = scalar_lea.vmem %s2, %s225
      %s227 = smul.u32 3, %s19
      %s228 = smul.u32 4, %s18
      %s229 = smul.u32 3, %s19
      %p230 = scmp.lt.s32.totalorder %s228, 7
      %s231 = scalar_select %p230, %s228, 7
      %p232 = scmp.lt.s32.totalorder %s229, 2
      %s233 = scalar_select %p232, %s229, 2
      %s234 = smul.addr %s231, 3
      %s235 = sadd.s32 %s233, %s234
      %s236 = smul.addr %s235, 4
      %s237 = scalar_lea.vmem %s3, %s236
      %s238 = smul.u32 4, %s18
      %s239 = smul.u32 3, %s19
      %v241 = vld [vmem:[%s215] sm:$0xf]
      %v242 = vld [vmem:[%s215 + $0x4] sm:$0xf]
      %v243 = vld [vmem:[%s215 + $0x8] sm:$0xf]
      %v244 = vld [vmem:[%s215 + $0xc] sm:$0xf]
      %v245 = vld [vmem:[%s221] sm:$0xff]
      %v246 = vld [vmem:[%s221 + $0x8] sm:$0xf]
      %v247 = vld [vmem:[%s221 + $0xc] sm:$0xff]
      %v248 = vld [vmem:[%s221 + $0x14] sm:$0xf]
      %v249 = vld [vmem:[%s221 + $0x18] sm:$0xff]
      %v250 = vld [vmem:[%s221 + $0x20] sm:$0xf]
      %v251 = vld [vmem:[%s221 + $0x24] sm:$0xff]
      %v252 = vld [vmem:[%s221 + $0x2c] sm:$0xf]
      %v253 = vld [vmem:[%s221 + $0x30] sm:$0xff]
      %v254 = vld [vmem:[%s221 + $0x38] sm:$0xf]
      %v255 = vld [vmem:[%s221 + $0x3c] sm:$0xff]
      %v256 = vld [vmem:[%s221 + $0x44] sm:$0xf]
      %v257 = vld [vmem:[%s221 + $0x48] sm:$0xff]
      %v258 = vld [vmem:[%s221 + $0x50] sm:$0xf]
      %v259 = vld [vmem:[%s221 + $0x54] sm:$0xff]
      %v260 = vld [vmem:[%s221 + $0x5c] sm:$0xf]
      %v261 = vld [vmem:[%s221 + $0x60] sm:$0xff]
      %v262 = vld [vmem:[%s221 + $0x68] sm:$0xf]
      %v263 = vld [vmem:[%s221 + $0x6c] sm:$0xff]
      %v264 = vld [vmem:[%s221 + $0x74] sm:$0xf]
      %v265 = vld [vmem:[%s221 + $0x78] sm:$0xff]
      %v266 = vld [vmem:[%s221 + $0x80] sm:$0xf]
      %v267 = vld [vmem:[%s221 + $0x84] sm:$0xff]
      %v268 = vld [vmem:[%s221 + $0x8c] sm:$0xf]
      %v269 = vld [vmem:[%s221 + $0x90] sm:$0xff]
      %v270 = vld [vmem:[%s221 + $0x98] sm:$0xf]
      %v271 = vld [vmem:[%s221 + $0x9c] sm:$0xff]
      %v272 = vld [vmem:[%s221 + $0xa4] sm:$0xf]
      %v273 = vld [vmem:[%s221 + $0xa8] sm:$0xff]
      %v274 = vld [vmem:[%s221 + $0xb0] sm:$0xf]
      %v275 = vld [vmem:[%s221 + $0xb4] sm:$0xff]
      %v276 = vld [vmem:[%s221 + $0xbc] sm:$0xf]
      %v277 = vld [vmem:[%s226] sm:$0x7]
      %v279 = vlaneseq
      %v280 = vshrl.u32 %v279, 7
      %v281 = vsub.s32 0, %v280
      %v282 = vrot.slane %v277, %v281
      %v283 = vlaneseq
      %v284 = vshrl.u32 %v283, 7
      %v285 = vsub.s32 1, %v284
      %v286 = vrot.slane %v277, %v285
      %v287 = vlaneseq
      %v288 = vshrl.u32 %v287, 7
      %v289 = vsub.s32 2, %v288
      %v290 = vrot.slane %v277, %v289
      %v298 = vunpack.c.l.b16 %v241
      %v299 = vunpack.c.l.b16 %v242
      %v300 = vunpack.c.l.b16 %v243
      %v301 = vunpack.c.l.b16 %v244
      %v302 = vpack.c.b16 %v299, %v298
      %v303 = vpack.c.b16 %v301, %v300
      %v338 = vunpack.c.l.b16 %v245
      %v339 = vunpack.c.h.b16 %v245
      %v340 = vunpack.c.l.b16 %v246
      %v341 = vunpack.c.l.b16 %v247
      %v342 = vunpack.c.h.b16 %v247
      %v343 = vunpack.c.l.b16 %v248
      %v344 = vunpack.c.l.b16 %v249
      %v345 = vunpack.c.h.b16 %v249
      %v346 = vunpack.c.l.b16 %v250
      %v347 = vunpack.c.l.b16 %v251
      %v348 = vunpack.c.h.b16 %v251
      %v349 = vunpack.c.l.b16 %v252
      %v350 = vunpack.c.l.b16 %v253
      %v351 = vunpack.c.h.b16 %v253
      %v352 = vunpack.c.l.b16 %v254
      %v353 = vunpack.c.l.b16 %v255
      %v354 = vunpack.c.h.b16 %v255
      %v355 = vunpack.c.l.b16 %v256
      %v356 = vunpack.c.l.b16 %v257
      %v357 = vunpack.c.h.b16 %v257
      %v358 = vunpack.c.l.b16 %v258
      %v359 = vunpack.c.l.b16 %v259
      %v360 = vunpack.c.h.b16 %v259
      %v361 = vunpack.c.l.b16 %v260
      %v362 = vunpack.c.l.b16 %v261
      %v363 = vunpack.c.h.b16 %v261
      %v364 = vunpack.c.l.b16 %v262
      %v365 = vunpack.c.l.b16 %v263
      %v366 = vunpack.c.h.b16 %v263
      %v367 = vunpack.c.l.b16 %v264
      %v368 = vunpack.c.l.b16 %v265
      %v369 = vunpack.c.h.b16 %v265
      %v370 = vunpack.c.l.b16 %v266
      %v371 = vunpack.c.l.b16 %v267
      %v372 = vunpack.c.h.b16 %v267
      %v373 = vunpack.c.l.b16 %v268
      %v374 = vunpack.c.l.b16 %v269
      %v375 = vunpack.c.h.b16 %v269
      %v376 = vunpack.c.l.b16 %v270
      %v377 = vunpack.c.l.b16 %v271
      %v378 = vunpack.c.h.b16 %v271
      %v379 = vunpack.c.l.b16 %v272
      %v380 = vunpack.c.l.b16 %v273
      %v381 = vunpack.c.h.b16 %v273
      %v382 = vunpack.c.l.b16 %v274
      %v383 = vunpack.c.l.b16 %v275
      %v384 = vunpack.c.h.b16 %v275
      %v385 = vunpack.c.l.b16 %v276
      %v386 = vpack.c.b16 %v341, %v338
      %v387 = vpack.c.b16 %v342, %v339
      %v388 = vpack.c.b16 %v343, %v340
      %v389 = vpack.c.b16 %v347, %v344
      %v390 = vpack.c.b16 %v348, %v345
      %v391 = vpack.c.b16 %v349, %v346
      %v392 = vpack.c.b16 %v353, %v350
      %v393 = vpack.c.b16 %v354, %v351
      %v394 = vpack.c.b16 %v355, %v352
      %v395 = vpack.c.b16 %v359, %v356
      %v396 = vpack.c.b16 %v360, %v357
      %v397 = vpack.c.b16 %v361, %v358
      %v398 = vpack.c.b16 %v365, %v362
      %v399 = vpack.c.b16 %v366, %v363
      %v400 = vpack.c.b16 %v367, %v364
      %v401 = vpack.c.b16 %v371, %v368
      %v402 = vpack.c.b16 %v372, %v369
      %v403 = vpack.c.b16 %v373, %v370
      %v404 = vpack.c.b16 %v377, %v374
      %v405 = vpack.c.b16 %v378, %v375
      %v406 = vpack.c.b16 %v379, %v376
      %v407 = vpack.c.b16 %v383, %v380
      %v408 = vpack.c.b16 %v384, %v381
      %v409 = vpack.c.b16 %v385, %v382
      %434 = vmatprep.subr.bf16.mxu0 %v387
      %435 = vmatpush1.bf16.msra.mxu0 %v386
      %436 = vmatprep.subr.bf16.mxu0 %v390
      %437 = vmatpush1.bf16.msra.mxu0 %v389
      %438 = vmatprep.subr.bf16.mxu0 %v393
      %439 = vmatpush1.bf16.msra.mxu0 %v392
      %440 = vmatprep.subr.bf16.mxu0 %v396
      %441 = vmatpush1.bf16.msra.mxu0 %v395
      %442 = vmatprep.subr.bf16.mxu0 %v399
      %443 = vmatpush1.bf16.msra.mxu0 %v398
      %444 = vmatprep.subr.bf16.mxu0 %v402
      %445 = vmatpush1.bf16.msra.mxu0 %v401
      %446 = vmatprep.subr.bf16.mxu0 %v405
      %447 = vmatpush1.bf16.msra.mxu0 %v404
      %448 = vmatprep.subr.bf16.mxu0 %v408
      %449 = vmatpush1.bf16.msra.mxu0 %v407
      %450 = vmatprep.subr.bf16.mxu0 0
      %451 = vmatpush1.bf16.msra.mxu0 0
      %452 = vmatprep.subr.bf16.mxu0 0
      %453 = vmatpush1.bf16.msra.mxu0 0
      %454 = vmatprep.subr.bf16.mxu0 0
      %455 = vmatpush1.bf16.msra.mxu0 0
      %456 = vmatprep.subr.bf16.mxu0 0
      %457 = vmatpush1.bf16.msra.mxu0 0
      %458 = vmatprep.subr.bf16.mxu0 0
      %459 = vmatpush1.bf16.msra.mxu0 0
      %460 = vmatprep.subr.bf16.mxu0 0
      %461 = vmatpush1.bf16.msra.mxu0 0
      %462 = vmatprep.subr.bf16.mxu0 0
      %463 = vmatpush1.bf16.msra.mxu0 0
      %464 = vmatprep.subr.bf16.mxu0 0
      %465 = vmatpush1.bf16.msra.mxu0 0
      %466 = vmatprep.mubr.bf16.mxu0 0
      %467 = vmatmul.mubr.bf16.gmra.mrb[0].mxu0 %v302
      %v468 = vpop.f32.mrb[0].mxu0
      %v469 = vadd.f32 %v282, %v468
      %v470 = vpop.f32.mrb[0].mxu0
      %v471 = vadd.f32 %v286, %v470
      %v472 = vpop.f32.mrb[0].mxu0
      %v473 = vadd.f32 %v282, %v472
      %v474 = vpop.f32.mrb[0].mxu0
      %v475 = vadd.f32 %v286, %v474
      %476 = vmatprep.mubr.bf16.mxu0 0
      %477 = vmatmul.mubr.bf16.gmra.mrb[0].mxu0 %v303
      %v478 = vpop.f32.mrb[0].mxu0
      %v479 = vadd.f32 %v282, %v478
      %v480 = vpop.f32.mrb[0].mxu0
      %v481 = vadd.f32 %v286, %v480
      %v482 = vpop.f32.mrb[0].mxu0
      %v483 = vadd.f32 %v282, %v482
      %v484 = vpop.f32.mrb[0].mxu0
      %v485 = vadd.f32 %v286, %v484
      %486 = vdwg.mxu0
      %487 = vmatprep.subr.bf16.mxu0 0
      %488 = vmatpush1.bf16.msra.mxu0 %v388
      %489 = vmatprep.subr.bf16.mxu0 0
      %490 = vmatpush1.bf16.msra.mxu0 %v391
      %491 = vmatprep.subr.bf16.mxu0 0
      %492 = vmatpush1.bf16.msra.mxu0 %v394
      %493 = vmatprep.subr.bf16.mxu0 0
      %494 = vmatpush1.bf16.msra.mxu0 %v397
      %495 = vmatprep.subr.bf16.mxu0 0
      %496 = vmatpush1.bf16.msra.mxu0 %v400
      %497 = vmatprep.subr.bf16.mxu0 0
      %498 = vmatpush1.bf16.msra.mxu0 %v403
      %499 = vmatprep.subr.bf16.mxu0 0
      %500 = vmatpush1.bf16.msra.mxu0 %v406
      %501 = vmatprep.subr.bf16.mxu0 0
      %502 = vmatpush1.bf16.msra.mxu0 %v409
      %503 = vmatprep.subr.bf16.mxu0 0
      %504 = vmatpush1.bf16.msra.mxu0 0
      %505 = vmatprep.subr.bf16.mxu0 0
      %506 = vmatpush1.bf16.msra.mxu0 0
      %507 = vmatprep.subr.bf16.mxu0 0
      %508 = vmatpush1.bf16.msra.mxu0 0
      %509 = vmatprep.subr.bf16.mxu0 0
      %510 = vmatpush1.bf16.msra.mxu0 0
      %511 = vmatprep.subr.bf16.mxu0 0
      %512 = vmatpush1.bf16.msra.mxu0 0
      %513 = vmatprep.subr.bf16.mxu0 0
      %514 = vmatpush1.bf16.msra.mxu0 0
      %515 = vmatprep.subr.bf16.mxu0 0
      %516 = vmatpush1.bf16.msra.mxu0 0
      %517 = vmatprep.subr.bf16.mxu0 0
      %518 = vmatpush1.bf16.msra.mxu0 0
      %519 = vmatprep.mubr.bf16.mxu0 0
      %520 = vmatmul.mubr.bf16.gmra.mrb[0].mxu0 %v302
      %v521 = vpop.f32.mrb[0].mxu0
      %v522 = vadd.f32 %v290, %v521
      %v523 = vpop.f32.mrb[0].mxu0
      %v524 = vpop.f32.mrb[0].mxu0
      %v525 = vadd.f32 %v290, %v524
      %v526 = vpop.f32.mrb[0].mxu0
      %527 = vmatprep.mubr.bf16.mxu0 0
      %528 = vmatmul.mubr.bf16.gmra.mrb[0].mxu0 %v303
      %v529 = vpop.f32.mrb[0].mxu0
      %v530 = vadd.f32 %v290, %v529
      %v531 = vpop.f32.mrb[0].mxu0
      %v532 = vpop.f32.mrb[0].mxu0
      %v533 = vadd.f32 %v290, %v532
      %v534 = vpop.f32.mrb[0].mxu0
      %535 = vdwg.mxu0
      %v536 = vpack.c.bf16 %v473, %v469
      %v537 = vpack.c.bf16 %v475, %v471
      %v538 = vpack.c.bf16 %v525, %v522
      %v539 = vpack.c.bf16 %v483, %v479
      %v540 = vpack.c.bf16 %v485, %v481
      %v541 = vpack.c.bf16 %v533, %v530
      %v548 = vunpack.c.l.b16 %v536
      %v549 = vunpack.c.l.b16 %v537
      %v550 = vunpack.c.l.b16 %v538
      %v551 = vunpack.c.h.b16 %v536
      %v552 = vunpack.c.h.b16 %v537
      %v553 = vunpack.c.h.b16 %v538
      %v554 = vunpack.c.l.b16 %v539
      %v555 = vunpack.c.l.b16 %v540
      %v556 = vunpack.c.l.b16 %v541
      %v557 = vunpack.c.h.b16 %v539
      %v558 = vunpack.c.h.b16 %v540
      %v559 = vunpack.c.h.b16 %v541
      %v560 = vpack.c.b16 %v549, %v548
      %v561 = vpack.c.b16 %v550, %v550
      %v562 = vpack.c.b16 %v552, %v551
      %v563 = vpack.c.b16 %v553, %v553
      %v564 = vpack.c.b16 %v555, %v554
      %v565 = vpack.c.b16 %v556, %v556
      %v566 = vpack.c.b16 %v558, %v557
      %v567 = vpack.c.b16 %v559, %v559
      %576 = vst [vmem:[%s237] sm:$0xff] %v560
      %577 = vst [vmem:[%s237 + $0x8] sm:$0xf] %v561
      %578 = vst [vmem:[%s237 + $0xc] sm:$0xff] %v562
      %579 = vst [vmem:[%s237 + $0x14] sm:$0xf] %v563
      %580 = vst [vmem:[%s237 + $0x18] sm:$0xff] %v564
      %581 = vst [vmem:[%s237 + $0x20] sm:$0xf] %v565
      %582 = vst [vmem:[%s237 + $0x24] sm:$0xff] %v566
      %583 = vst [vmem:[%s237 + $0x2c] sm:$0xf] %v567
      %s584 = smul.u32 4, %s18
      %s585 = smul.u32 3, %s19
      %p586 = scmp.lt.s32.totalorder %s584, 7
      %s587 = scalar_select %p586, %s584, 7
      %p588 = scmp.lt.s32.totalorder %s585, 2
      %s589 = scalar_select %p588, %s585, 2
      %s590 = smul.addr %s587, 3
      %s591 = sadd.s32 %s589, %s590
      %s592 = smul.addr %s591, 4
      %s593 = scalar_lea.vmem %s3, %s592
      // Predicated region
      $region33: #{vit_forward.13} parent=31 // pred_check
        %p594 = pneg %p124
      $region34: #{vit_forward.13} parent=31 // pred_check_branch
        %596 = sbr.rel (%p594) target = $region36
      $region35: #{vit_forward.13} parent=31 // pred_region
        %s597 = smul.u32 4, %s18
        %s598 = smul.u32 3, %s19
      $region36: #{vit_forward.13} parent=31 // pred_fallthru
        _
    $region32: #{vit_forward.13} parent=5 // pred_fallthru
      _
    %p599 = scmp.le.s32.totalorder 2, %s9
    // Predicated region
    $region37: #{vit_forward.13} parent=5 // pred_check
      %p600 = pneg %p599
    $region38: #{vit_forward.13} parent=5 // pred_check_branch
      %602 = sbr.rel (%p600) target = $region40
    $region39: #{vit_forward.13} parent=5 // pred_region
      %s603 = ssub.s32 %s9, 2
      // Predicated region
      $region41: #{vit_forward.13} parent=39 // pred_check
        %p604 = pneg %p130
      $region42: #{vit_forward.13} parent=39 // pred_check_branch
        %606 = sbr.rel (%p604) target = $region44
      $region43: #{vit_forward.13} parent=39 // pred_region
        %s607 = smul.u32 4, %s20
        %s608 = smul.u32 3, %s21
        %p609 = scmp.lt.s32.totalorder %s607, 7
        %s610 = scalar_select %p609, %s607, 7
        %p611 = scmp.lt.s32.totalorder %s608, 2
        %s612 = scalar_select %p611, %s608, 2
        %s613 = smul.addr %s610, 3
        %s614 = sadd.s32 %s612, %s613
        %s615 = smul.addr %s614, 4
        %s616 = scalar_lea.vmem %s3, %s615
      $region44: #{vit_forward.13} parent=39 // pred_fallthru
        _
    $region40: #{vit_forward.13} parent=5 // pred_fallthru
      _
  $region6: #{vit_forward.13} parent=0 // loop_footer
    %s13 = sadd.s32 1, %s9
  $region7: #{vit_forward.13} parent=0 // loop_footer_branch
    %8 = sbr.rel target = $region3
  $region8: #{vit_forward.13} parent=0 // loop_exit
    _

// kernel: vit_forward.12
$region0: #{vit_forward.12}
  #allocation0 [shape = 'u32[]', space=smem, size = 0x4, offset = 0x4, fixed_abs, tag = 'smem constant byte address 0x4 - core index']
  #allocation1 [shape = 'u32[144,128]{1,0:T(1,128)}', space=vmem, size = 0x12000, scoped, tag = 'internal scratch']
  %s0 = inlined_call_operand.vmem [shape: bf16[32,48], index: 0, kind: input, shape index: {}]
  %s1 = inlined_call_operand.vmem [shape: bf16[48,128], index: 1, kind: input, shape index: {}]
  %s2 = inlined_call_operand.vmem [shape: f32[1,128], index: 2, kind: input, shape index: {}]
  %s3 = inlined_call_operand.vmem [shape: bf16[32,128], index: 3, kind: output, shape index: {}]
  %s4 = sld [smem:[#allocation0]]
  $region45: #{vit_forward.12} parent=0
    _
  %s6 = ssub.s32 1, %s4
  %s7 = scalar_select 0, %s6, %s4
  loop: start=0, step=1, limit=4
  $region2: #{vit_forward.12} parent=0 // loop_pre_header
    _
  $region3: #{vit_forward.12} parent=0 // loop_header
    %s9 = sphi 0, %s13
    %p10 = scmp.ge.s32.totalorder %s9, 4
    %s16 = sphi 0, %s28
    %s17 = sphi 0, %s24
    %s18 = sphi 0, %s16
    %s19 = sphi 0, %s17
    %s20 = sphi 0, %s18
    %s21 = sphi 0, %s19
    %s31 = sphi 0, %s33
    %s34 = sphi 0, %s31
    %s35 = sphi 0, %s34
    %s51 = sphi 0, %s35
    %s57 = sphi 0, %s59
    %s60 = sphi 0, %s57
    %s61 = sphi 0, %s60
    %s77 = sphi 0, %s61
    %s83 = sphi 0, %s85
    %s86 = sphi 0, %s83
    %s87 = sphi 0, %s86
    %s103 = sphi 0, %s87
    %s111 = sphi 0, %s113
    %s114 = sphi 0, %s111
    %s115 = sphi 0, %s114
    %s131 = sphi 0, %s115
  $region4: #{vit_forward.12} parent=0 // loop_header_branch
    %12 = sbr.rel (%p10) target = $region8
  $region5: #{vit_forward.12} parent=0 // loop_body
    %s14 = ssub.s32 %s9, 1
    %s15 = ssub.s32 %s9, 2
    %s22 = sadd.s32 1, %s17
    %p23 = scmp.ge.s32.totalorder %s22, 1
    %s24 = scalar_select %p23, 0, %s22
    %s25 = sadd.s32 1, %s16
    %s26 = scalar_select %p23, %s25, %s16
    %p27 = scmp.ge.s32.totalorder %s26, 2
    %s28 = scalar_select %p27, 0, %s26
    %s29 = ssub.s32 %s16, %s28
    %p30 = scmp.eq.s32.totalorder %s29, 0
    %s32 = sadd.s32 %s31, 1
    %s33 = scalar_select %p30, %s31, %s32
    %p36 = pneg %p30
    %p37 = scmp.eq.s32.totalorder %s9, 1
    %p38 = por %p36, %p37
    %p39 = scmp.ne.s32.totalorder %s31, %s34
    %p40 = scmp.eq.s32.totalorder %s9, 0
    %p41 = por %p39, %p40
    %p42 = scmp.ne.s32.totalorder %s31, %s34
    %p43 = scmp.eq.s32.totalorder %s14, 1
    %p44 = por %p42, %p43
    %p45 = scmp.ne.s32.totalorder %s34, %s35
    %p46 = scmp.eq.s32.totalorder %s14, 0
    %p47 = por %p45, %p46
    %p48 = scmp.ne.s32.totalorder %s34, %s35
    %p49 = scmp.eq.s32.totalorder %s15, 1
    %p50 = por %p48, %p49
    %p52 = scmp.ne.s32.totalorder %s35, %s51
    %p53 = scmp.eq.s32.totalorder %s15, 0
    %p54 = por %p52, %p53
    %s55 = ssub.s32 %s17, %s24
    %p56 = scmp.eq.s32.totalorder %s55, 0
    %s58 = sadd.s32 %s57, 1
    %s59 = scalar_select %p56, %s57, %s58
    %p62 = pneg %p56
    %p63 = scmp.eq.s32.totalorder %s9, 1
    %p64 = por %p62, %p63
    %p65 = scmp.ne.s32.totalorder %s57, %s60
    %p66 = scmp.eq.s32.totalorder %s9, 0
    %p67 = por %p65, %p66
    %p68 = scmp.ne.s32.totalorder %s57, %s60
    %p69 = scmp.eq.s32.totalorder %s14, 1
    %p70 = por %p68, %p69
    %p71 = scmp.ne.s32.totalorder %s60, %s61
    %p72 = scmp.eq.s32.totalorder %s14, 0
    %p73 = por %p71, %p72
    %p74 = scmp.ne.s32.totalorder %s60, %s61
    %p75 = scmp.eq.s32.totalorder %s15, 1
    %p76 = por %p74, %p75
    %p78 = scmp.ne.s32.totalorder %s61, %s77
    %p79 = scmp.eq.s32.totalorder %s15, 0
    %p80 = por %p78, %p79
    %s81 = ssub.s32 %s17, %s24
    %p82 = scmp.eq.s32.totalorder %s81, 0
    %s84 = sadd.s32 %s83, 1
    %s85 = scalar_select %p82, %s83, %s84
    %p88 = pneg %p82
    %p89 = scmp.eq.s32.totalorder %s9, 1
    %p90 = por %p88, %p89
    %p91 = scmp.ne.s32.totalorder %s83, %s86
    %p92 = scmp.eq.s32.totalorder %s9, 0
    %p93 = por %p91, %p92
    %p94 = scmp.ne.s32.totalorder %s83, %s86
    %p95 = scmp.eq.s32.totalorder %s14, 1
    %p96 = por %p94, %p95
    %p97 = scmp.ne.s32.totalorder %s86, %s87
    %p98 = scmp.eq.s32.totalorder %s14, 0
    %p99 = por %p97, %p98
    %p100 = scmp.ne.s32.totalorder %s86, %s87
    %p101 = scmp.eq.s32.totalorder %s15, 1
    %p102 = por %p100, %p101
    %p104 = scmp.ne.s32.totalorder %s87, %s103
    %p105 = scmp.eq.s32.totalorder %s15, 0
    %p106 = por %p104, %p105
    %s107 = ssub.s32 %s16, %s28
    %s108 = ssub.s32 %s17, %s24
    %s109 = sor.u32 %s107, %s108
    %p110 = scmp.eq.s32.totalorder %s109, 0
    %s112 = sadd.s32 %s111, 1
    %s113 = scalar_select %p110, %s111, %s112
    %p116 = pneg %p110
    %p117 = scmp.eq.s32.totalorder %s9, 1
    %p118 = por %p116, %p117
    %p119 = scmp.ne.s32.totalorder %s111, %s114
    %p120 = scmp.eq.s32.totalorder %s9, 0
    %p121 = por %p119, %p120
    %p122 = scmp.ne.s32.totalorder %s111, %s114
    %p123 = scmp.eq.s32.totalorder %s14, 1
    %p124 = por %p122, %p123
    %p125 = scmp.ne.s32.totalorder %s114, %s115
    %p126 = scmp.eq.s32.totalorder %s14, 0
    %p127 = por %p125, %p126
    %p128 = scmp.ne.s32.totalorder %s114, %s115
    %p129 = scmp.eq.s32.totalorder %s15, 1
    %p130 = por %p128, %p129
    %p132 = scmp.ne.s32.totalorder %s115, %s131
    %p133 = scmp.eq.s32.totalorder %s15, 0
    %p134 = por %p132, %p133
    %p135 = scmp.le.s32.totalorder 1, %s9
    %p136 = scmp.lt.s32.totalorder %s9, 3
    %p137 = pnand %p135, %p136
    %p138 = pneg %p137
    // Predicated region
    $region9: #{vit_forward.12} parent=5 // pred_check
      _
    $region10: #{vit_forward.12} parent=5 // pred_check_branch
      %140 = sbr.rel (%p137) target = $region12
    $region11: #{vit_forward.12} parent=5 // pred_region
      %s141 = ssub.s32 %s9, 1
      // Predicated region
      $region13: #{vit_forward.12} parent=11 // pred_check
        %p142 = pneg %p73
      $region14: #{vit_forward.12} parent=11 // pred_check_branch
        %144 = sbr.rel (%p142) target = $region16
      $region15: #{vit_forward.12} parent=11 // pred_region
        %p145 = scmp.lt.s32.totalorder %s19, 0
        %s146 = scalar_select %p145, %s19, 0
        %s147 = smul.addr %s146, 4
        %s148 = scalar_lea.vmem %s1, %s147
      $region16: #{vit_forward.12} parent=11 // pred_fallthru
        _
      // Predicated region
      $region17: #{vit_forward.12} parent=11 // pred_check
        %p149 = pneg %p99
      $region18: #{vit_forward.12} parent=11 // pred_check_branch
        %151 = sbr.rel (%p149) target = $region20
      $region19: #{vit_forward.12} parent=11 // pred_region
        %p152 = scmp.lt.s32.totalorder %s19, 0
        %s153 = scalar_select %p152, %s19, 0
        %s154 = scalar_lea.vmem %s2, %s153
      $region20: #{vit_forward.12} parent=11 // pred_fallthru
        _
    $region12: #{vit_forward.12} parent=5 // pred_fallthru
      _
    %p155 = scmp.lt.s32.totalorder %s9, 2
    // Predicated region
    $region21: #{vit_forward.12} parent=5 // pred_check
      %p156 = pneg %p155
    $region22: #{vit_forward.12} parent=5 // pred_check_branch
      %158 = sbr.rel (%p156) target = $region24
    $region23: #{vit_forward.12} parent=5 // pred_region
      // Predicated region
      $region25: #{vit_forward.12} parent=23 // pred_check
        %p159 = pneg %p41
      $region26: #{vit_forward.12} parent=23 // pred_check_branch
        %161 = sbr.rel (%p159) target = $region28
      $region27: #{vit_forward.12} parent=23 // pred_region
        %s162 = smul.u32 2, %s16
        %p163 = scmp.lt.s32.totalorder %s162, 3
        %s164 = scalar_select %p163, %s162, 3
        %s165 = smul.addr %s164, 4
        %s166 = scalar_lea.vmem %s0, %s165
        %s167 = smul.u32 2, %s16
      $region28: #{vit_forward.12} parent=23 // pred_fallthru
        _
    $region24: #{vit_forward.12} parent=5 // pred_fallthru
      _
    %p168 = scmp.le.s32.totalorder 1, %s9
    %p169 = scmp.lt.s32.totalorder %s9, 3
    %p170 = pnand %p168, %p169
    %p171 = pneg %p170
    // Predicated region
    $region29: #{vit_forward.12} parent=5 // pred_check
      _
    $region30: #{vit_forward.12} parent=5 // pred_check_branch
      %173 = sbr.rel (%p170) target = $region32
    $region31: #{vit_forward.12} parent=5 // pred_region
      %s174 = ssub.s32 %s9, 1
      %s175 = smul.u32 2, %s18
      %p176 = scmp.lt.s32.totalorder %s175, 3
      %s177 = scalar_select %p176, %s175, 3
      %s178 = smul.addr %s177, 4
      %s179 = scalar_lea.vmem %s0, %s178
      %p180 = pneg %p47
      %p181 = pneg %p44
      %p182 = scmp.lt.s32.totalorder %s19, 0
      %s183 = scalar_select %p182, %s19, 0
      %s184 = smul.addr %s183, 4
      %s185 = scalar_lea.vmem %s1, %s184
      %p186 = pneg %p73
      %p187 = pneg %p70
      %p188 = scmp.lt.s32.totalorder %s19, 0
      %s189 = scalar_select %p188, %s19, 0
      %s190 = scalar_lea.vmem %s2, %s189
      %p191 = pneg %p99
      %p192 = pneg %p96
      %p193 = pneg %p127
      %p194 = pneg %p124
      %s195 = smul.u32 2, %s18
      %p196 = scmp.lt.s32.totalorder %s195, 3
      %s197 = scalar_select %p196, %s195, 3
      %p198 = scmp.lt.s32.totalorder %s19, 0
      %s199 = scalar_select %p198, %s19, 0
      %s200 = sadd.s32 %s199, %s197
      %s201 = smul.addr %s200, 4
      %s202 = scalar_lea.vmem %s3, %s201
      %s203 = smul.u32 2, %s18
      %p204 = scmp.lt.s32.totalorder %s203, 3
      %s205 = scalar_select %p204, %s203, 3
      %s206 = smul.addr %s205, 4
      %s207 = scalar_lea.vmem %s0, %s206
      %s208 = smul.u32 2, %s18
      %p209 = scmp.lt.s32.totalorder %s19, 0
      %s210 = scalar_select %p209, %s19, 0
      %s211 = smul.addr %s210, 4
      %s212 = scalar_lea.vmem %s1, %s211
      %p213 = scmp.lt.s32.totalorder %s19, 0
      %s214 = scalar_select %p213, %s19, 0
      %s215 = scalar_lea.vmem %s2, %s214
      %s216 = smul.u32 2, %s18
      %p217 = scmp.lt.s32.totalorder %s216, 3
      %s218 = scalar_select %p217, %s216, 3
      %p219 = scmp.lt.s32.totalorder %s19, 0
      %s220 = scalar_select %p219, %s19, 0
      %s221 = sadd.s32 %s220, %s218
      %s222 = smul.addr %s221, 4
      %s223 = scalar_lea.vmem %s3, %s222
      %s224 = smul.u32 2, %s18
      %v226 = vld [vmem:[%s207] sm:$0xf]
      %v227 = vld [vmem:[%s207 + $0x4] sm:$0xf]
      %v228 = vld [vmem:[%s212] sm:$0xf]
      %v229 = vld [vmem:[%s212 + $0x4] sm:$0xf]
      %v230 = vld [vmem:[%s212 + $0x8] sm:$0xf]
      %v231 = vld [vmem:[%s212 + $0xc] sm:$0xf]
      %v232 = vld [vmem:[%s212 + $0x10] sm:$0xf]
      %v233 = vld [vmem:[%s212 + $0x14] sm:$0xf]
      %v234 = vld [vmem:[%s215] sm:$0x1]
      %v236 = vlaneseq
      %v237 = vshrl.u32 %v236, 7
      %v238 = vsub.s32 0, %v237
      %v239 = vrot.slane %v234, %v238
      %v243 = vunpack.c.l.b16 %v226
      %v244 = vunpack.c.l.b16 %v227
      %v245 = vpack.c.b16 %v244, %v243
      %v252 = vunpack.c.l.b16 %v228
      %v253 = vunpack.c.l.b16 %v229
      %v254 = vunpack.c.l.b16 %v230
      %v255 = vunpack.c.l.b16 %v231
      %v256 = vunpack.c.l.b16 %v232
      %v257 = vunpack.c.l.b16 %v233
      %v258 = vpack.c.b16 %v253, %v252
      %v259 = vpack.c.b16 %v255, %v254
      %v260 = vpack.c.b16 %v257, %v256
      %vm264 = vcmask 392192
      %v266 = vsel %vm264, %v245, 0
      %268 = vmatprep.subr.bf16.mxu0 0
      %269 = vmatpush1.bf16.msra.mxu0 %v258
      %270 = vmatprep.subr.bf16.mxu0 0
      %271 = vmatpush1.bf16.msra.mxu0 %v259
      %272 = vmatprep.subr.bf16.mxu0 0
      %273 = vmatpush1.bf16.msra.mxu0 %v260
      %274 = vmatprep.subr.bf16.mxu0 0
      %275 = vmatpush1.bf16.msra.mxu0 0
      %276 = vmatprep.subr.bf16.mxu0 0
      %277 = vmatpush1.bf16.msra.mxu0 0
      %278 = vmatprep.subr.bf16.mxu0 0
      %279 = vmatpush1.bf16.msra.mxu0 0
      %280 = vmatprep.subr.bf16.mxu0 0
      %281 = vmatpush1.bf16.msra.mxu0 0
      %282 = vmatprep.subr.bf16.mxu0 0
      %283 = vmatpush1.bf16.msra.mxu0 0
      %284 = vmatprep.subr.bf16.mxu0 0
      %285 = vmatpush1.bf16.msra.mxu0 0
      %286 = vmatprep.subr.bf16.mxu0 0
      %287 = vmatpush1.bf16.msra.mxu0 0
      %288 = vmatprep.subr.bf16.mxu0 0
      %289 = vmatpush1.bf16.msra.mxu0 0
      %290 = vmatprep.subr.bf16.mxu0 0
      %291 = vmatpush1.bf16.msra.mxu0 0
      %292 = vmatprep.subr.bf16.mxu0 0
      %293 = vmatpush1.bf16.msra.mxu0 0
      %294 = vmatprep.subr.bf16.mxu0 0
      %295 = vmatpush1.bf16.msra.mxu0 0
      %296 = vmatprep.subr.bf16.mxu0 0
      %297 = vmatpush1.bf16.msra.mxu0 0
      %298 = vmatprep.subr.bf16.mxu0 0
      %299 = vmatpush1.bf16.msra.mxu0 0
      %300 = vmatprep.mubr.bf16.mxu0 0
      %301 = vmatmul.mubr.bf16.gmra.mrb[0].mxu0 %v266
      %v302 = vpop.f32.mrb[0].mxu0
      %v303 = vadd.f32 %v239, %v302
      %v304 = vpop.f32.mrb[0].mxu0
      %v305 = vpop.f32.mrb[0].mxu0
      %v306 = vadd.f32 %v239, %v305
      %v307 = vpop.f32.mrb[0].mxu0
      %308 = vdwg.mxu0
      %v309 = vpack.c.bf16 %v306, %v303
      %v311 = vunpack.c.l.b16 %v309
      %v312 = vunpack.c.h.b16 %v309
      %v313 = vpack.c.b16 %v311, %v311
      %v314 = vpack.c.b16 %v312, %v312
      %317 = vst [vmem:[%s223] sm:$0xf] %v313
      %318 = vst [vmem:[%s223 + $0x4] sm:$0xf] %v314
      %s319 = smul.u32 2, %s18
      %p320 = scmp.lt.s32.totalorder %s319, 3
      %s321 = scalar_select %p320, %s319, 3
      %p322 = scmp.lt.s32.totalorder %s19, 0
      %s323 = scalar_select %p322, %s19, 0
      %s324 = sadd.s32 %s323, %s321
      %s325 = smul.addr %s324, 4
      %s326 = scalar_lea.vmem %s3, %s325
      // Predicated region
      $region33: #{vit_forward.12} parent=31 // pred_check
        %p327 = pneg %p124
      $region34: #{vit_forward.12} parent=31 // pred_check_branch
        %329 = sbr.rel (%p327) target = $region36
      $region35: #{vit_forward.12} parent=31 // pred_region
        %s330 = smul.u32 2, %s18
      $region36: #{vit_forward.12} parent=31 // pred_fallthru
        _
    $region32: #{vit_forward.12} parent=5 // pred_fallthru
      _
    %p331 = scmp.le.s32.totalorder 2, %s9
    // Predicated region
    $region37: #{vit_forward.12} parent=5 // pred_check
      %p332 = pneg %p331
    $region38: #{vit_forward.12} parent=5 // pred_check_branch
      %334 = sbr.rel (%p332) target = $region40
    $region39: #{vit_forward.12} parent=5 // pred_region
      %s335 = ssub.s32 %s9, 2
      // Predicated region
      $region41: #{vit_forward.12} parent=39 // pred_check
        %p336 = pneg %p130
      $region42: #{vit_forward.12} parent=39 // pred_check_branch
        %338 = sbr.rel (%p336) target = $region44
      $region43: #{vit_forward.12} parent=39 // pred_region
        %s339 = smul.u32 2, %s20
        %p340 = scmp.lt.s32.totalorder %s339, 3
        %s341 = scalar_select %p340, %s339, 3
        %p342 = scmp.lt.s32.totalorder %s21, 0
        %s343 = scalar_select %p342, %s21, 0
        %s344 = sadd.s32 %s343, %s341
        %s345 = smul.addr %s344, 4
        %s346 = scalar_lea.vmem %s3, %s345
      $region44: #{vit_forward.12} parent=39 // pred_fallthru
        _
    $region40: #{vit_forward.12} parent=5 // pred_fallthru
      _
  $region6: #{vit_forward.12} parent=0 // loop_footer
    %s13 = sadd.s32 1, %s9
  $region7: #{vit_forward.12} parent=0 // loop_footer_branch
    %8 = sbr.rel target = $region3
  $region8: #{vit_forward.12} parent=0 // loop_exit
    _

// kernel: vit_forward.15
$region0: #{vit_forward.15}
  #allocation0 [shape = 'u32[]', space=smem, size = 0x4, offset = 0x4, fixed_abs, tag = 'smem constant byte address 0x4 - core index']
  #allocation1 [shape = 'u32[144,128]{1,0:T(1,128)}', space=vmem, size = 0x12000, scoped, tag = 'internal scratch']
  %s0 = inlined_call_operand.vmem [shape: bf16[64,128], index: 0, kind: input, shape index: {}]
  %s1 = inlined_call_operand.vmem [shape: bf16[128,128], index: 1, kind: input, shape index: {}]
  %s2 = inlined_call_operand.vmem [shape: f32[1,128], index: 2, kind: input, shape index: {}]
  %s3 = inlined_call_operand.vmem [shape: bf16[64,128], index: 3, kind: input, shape index: {}]
  %s4 = inlined_call_operand.vmem [shape: f32[1,128], index: 4, kind: input, shape index: {}]
  %s5 = inlined_call_operand.vmem [shape: f32[1,128], index: 5, kind: input, shape index: {}]
  %s6 = inlined_call_operand.vmem [shape: bf16[64,128], index: 6, kind: output, shape index: {}]
  %s7 = sld [smem:[#allocation0]]
  $region57: #{vit_forward.15} parent=0
    _
  %s9 = ssub.s32 1, %s7
  %s10 = scalar_select 0, %s9, %s7
  loop: start=0, step=1, limit=4
  $region2: #{vit_forward.15} parent=0 // loop_pre_header
    _
  $region3: #{vit_forward.15} parent=0 // loop_header
    %s12 = sphi 0, %s16
    %p13 = scmp.ge.s32.totalorder %s12, 4
    %s22 = sphi 0, %s24
    %s25 = sphi 0, %s22
    %s26 = sphi 0, %s25
    %s42 = sphi 0, %s26
    %s46 = sphi 0, %s46
    %s48 = sphi 0, %s46
    %s49 = sphi 0, %s48
    %s63 = sphi 0, %s49
    %s67 = sphi 0, %s67
    %s69 = sphi 0, %s67
    %s70 = sphi 0, %s69
    %s84 = sphi 0, %s70
    %s90 = sphi 0, %s92
    %s93 = sphi 0, %s90
    %s94 = sphi 0, %s93
    %s110 = sphi 0, %s94
    %s114 = sphi 0, %s114
    %s116 = sphi 0, %s114
    %s117 = sphi 0, %s116
    %s131 = sphi 0, %s117
    %s135 = sphi 0, %s135
    %s137 = sphi 0, %s135
    %s138 = sphi 0, %s137
    %s152 = sphi 0, %s138
    %s158 = sphi 0, %s160
    %s161 = sphi 0, %s158
    %s162 = sphi 0, %s161
    %s178 = sphi 0, %s162
  $region4: #{vit_forward.15} parent=0 // loop_header_branch
    %15 = sbr.rel (%p13) target = $region8
  $region5: #{vit_forward.15} parent=0 // loop_body
    %s17 = ssub.s32 %s12, 1
    %s18 = ssub.s32 %s12, 2
    %s19 = sadd.s32 %s12, 1
    %s20 = ssub.s32 %s12, %s19
    %p21 = scmp.eq.s32.totalorder %s20, 0
    %s23 = sadd.s32 %s22, 1
    %s24 = scalar_select %p21, %s22, %s23
    %p27 = pneg %p21
    %p28 = scmp.eq.s32.totalorder %s12, 1
    %p29 = por %p27, %p28
    %p30 = scmp.ne.s32.totalorder %s22, %s25
    %p31 = scmp.eq.s32.totalorder %s12, 0
    %p32 = por %p30, %p31
    %p33 = scmp.ne.s32.totalorder %s22, %s25
    %p34 = scmp.eq.s32.totalorder %s17, 1
    %p35 = por %p33, %p34
    %p36 = scmp.ne.s32.totalorder %s25, %s26
    %p37 = scmp.eq.s32.totalorder %s17, 0
    %p38 = por %p36, %p37
    %p39 = scmp.ne.s32.totalorder %s25, %s26
    %p40 = scmp.eq.s32.totalorder %s18, 1
    %p41 = por %p39, %p40
    %p43 = scmp.ne.s32.totalorder %s26, %s42
    %p44 = scmp.eq.s32.totalorder %s18, 0
    %p45 = por %p43, %p44
    %s47 = sadd.s32 %s46, 1
    %p50 = scmp.eq.s32.totalorder %s12, 1
    %p51 = scmp.ne.s32.totalorder %s46, %s48
    %p52 = scmp.eq.s32.totalorder %s12, 0
    %p53 = por %p51, %p52
    %p54 = scmp.ne.s32.totalorder %s46, %s48
    %p55 = scmp.eq.s32.totalorder %s17, 1
    %p56 = por %p54, %p55
    %p57 = scmp.ne.s32.totalorder %s48, %s49
    %p58 = scmp.eq.s32.totalorder %s17, 0
    %p59 = por %p57, %p58
    %p60 = scmp.ne.s32.totalorder %s48, %s49
    %p61 = scmp.eq.s32.totalorder %s18, 1
    %p62 = por %p60, %p61
    %p64 = scmp.ne.s32.totalorder %s49, %s63
    %p65 = scmp.eq.s32.totalorder %s18, 0
    %p66 = por %p64, %p65
    %s68 = sadd.s32 %s67, 1
    %p71 = scmp.eq.s32.totalorder %s12, 1
    %p72 = scmp.ne.s32.totalorder %s67, %s69
    %p73 = scmp.eq.s32.totalorder %s12, 0
    %p74 = por %p72, %p73
    %p75 = scmp.ne.s32.totalorder %s67, %s69
    %p76 = scmp.eq.s32.totalorder %s17, 1
    %p77 = por %p75, %p76
    %p78 = scmp.ne.s32.totalorder %s69, %s70
    %p79 = scmp.eq.s32.totalorder %s17, 0
    %p80 = por %p78, %p79
    %p81 = scmp.ne.s32.totalorder %s69, %s70
    %p82 = scmp.eq.s32.totalorder %s18, 1
    %p83 = por %p81, %p82
    %p85 = scmp.ne.s32.totalorder %s70, %s84
    %p86 = scmp.eq.s32.totalorder %s18, 0
    %p87 = por %p85, %p86
    %s88 = ssub.s32 %s12, %s19
    %p89 = scmp.eq.s32.totalorder %s88, 0
    %s91 = sadd.s32 %s90, 1
    %s92 = scalar_select %p89, %s90, %s91
    %p95 = pneg %p89
    %p96 = scmp.eq.s32.totalorder %s12, 1
    %p97 = por %p95, %p96
    %p98 = scmp.ne.s32.totalorder %s90, %s93
    %p99 = scmp.eq.s32.totalorder %s12, 0
    %p100 = por %p98, %p99
    %p101 = scmp.ne.s32.totalorder %s90, %s93
    %p102 = scmp.eq.s32.totalorder %s17, 1
    %p103 = por %p101, %p102
    %p104 = scmp.ne.s32.totalorder %s93, %s94
    %p105 = scmp.eq.s32.totalorder %s17, 0
    %p106 = por %p104, %p105
    %p107 = scmp.ne.s32.totalorder %s93, %s94
    %p108 = scmp.eq.s32.totalorder %s18, 1
    %p109 = por %p107, %p108
    %p111 = scmp.ne.s32.totalorder %s94, %s110
    %p112 = scmp.eq.s32.totalorder %s18, 0
    %p113 = por %p111, %p112
    %s115 = sadd.s32 %s114, 1
    %p118 = scmp.eq.s32.totalorder %s12, 1
    %p119 = scmp.ne.s32.totalorder %s114, %s116
    %p120 = scmp.eq.s32.totalorder %s12, 0
    %p121 = por %p119, %p120
    %p122 = scmp.ne.s32.totalorder %s114, %s116
    %p123 = scmp.eq.s32.totalorder %s17, 1
    %p124 = por %p122, %p123
    %p125 = scmp.ne.s32.totalorder %s116, %s117
    %p126 = scmp.eq.s32.totalorder %s17, 0
    %p127 = por %p125, %p126
    %p128 = scmp.ne.s32.totalorder %s116, %s117
    %p129 = scmp.eq.s32.totalorder %s18, 1
    %p130 = por %p128, %p129
    %p132 = scmp.ne.s32.totalorder %s117, %s131
    %p133 = scmp.eq.s32.totalorder %s18, 0
    %p134 = por %p132, %p133
    %s136 = sadd.s32 %s135, 1
    %p139 = scmp.eq.s32.totalorder %s12, 1
    %p140 = scmp.ne.s32.totalorder %s135, %s137
    %p141 = scmp.eq.s32.totalorder %s12, 0
    %p142 = por %p140, %p141
    %p143 = scmp.ne.s32.totalorder %s135, %s137
    %p144 = scmp.eq.s32.totalorder %s17, 1
    %p145 = por %p143, %p144
    %p146 = scmp.ne.s32.totalorder %s137, %s138
    %p147 = scmp.eq.s32.totalorder %s17, 0
    %p148 = por %p146, %p147
    %p149 = scmp.ne.s32.totalorder %s137, %s138
    %p150 = scmp.eq.s32.totalorder %s18, 1
    %p151 = por %p149, %p150
    %p153 = scmp.ne.s32.totalorder %s138, %s152
    %p154 = scmp.eq.s32.totalorder %s18, 0
    %p155 = por %p153, %p154
    %s156 = ssub.s32 %s12, %s19
    %p157 = scmp.eq.s32.totalorder %s156, 0
    %s159 = sadd.s32 %s158, 1
    %s160 = scalar_select %p157, %s158, %s159
    %p163 = pneg %p157
    %p164 = scmp.eq.s32.totalorder %s12, 1
    %p165 = por %p163, %p164
    %p166 = scmp.ne.s32.totalorder %s158, %s161
    %p167 = scmp.eq.s32.totalorder %s12, 0
    %p168 = por %p166, %p167
    %p169 = scmp.ne.s32.totalorder %s158, %s161
    %p170 = scmp.eq.s32.totalorder %s17, 1
    %p171 = por %p169, %p170
    %p172 = scmp.ne.s32.totalorder %s161, %s162
    %p173 = scmp.eq.s32.totalorder %s17, 0
    %p174 = por %p172, %p173
    %p175 = scmp.ne.s32.totalorder %s161, %s162
    %p176 = scmp.eq.s32.totalorder %s18, 1
    %p177 = por %p175, %p176
    %p179 = scmp.ne.s32.totalorder %s162, %s178
    %p180 = scmp.eq.s32.totalorder %s18, 0
    %p181 = por %p179, %p180
    %p182 = scmp.le.s32.totalorder 1, %s12
    %p183 = scmp.lt.s32.totalorder %s12, 3
    %p184 = pnand %p182, %p183
    %p185 = pneg %p184
    // Predicated region
    $region9: #{vit_forward.15} parent=5 // pred_check
      _
    $region10: #{vit_forward.15} parent=5 // pred_check_branch
      %187 = sbr.rel (%p184) target = $region12
    $region11: #{vit_forward.15} parent=5 // pred_region
      %s188 = ssub.s32 %s12, 1
      // Predicated region
      $region13: #{vit_forward.15} parent=11 // pred_check
        %p189 = pneg %p59
      $region14: #{vit_forward.15} parent=11 // pred_check_branch
        %191 = sbr.rel (%p189) target = $region16
      $region15: #{vit_forward.15} parent=11 // pred_region
        _
      $region16: #{vit_forward.15} parent=11 // pred_fallthru
        _
      // Predicated region
      $region17: #{vit_forward.15} parent=11 // pred_check
        %p192 = pneg %p80
      $region18: #{vit_forward.15} parent=11 // pred_check_branch
        %194 = sbr.rel (%p192) target = $region20
      $region19: #{vit_forward.15} parent=11 // pred_region
        _
      $region20: #{vit_forward.15} parent=11 // pred_fallthru
        _
      // Predicated region
      $region21: #{vit_forward.15} parent=11 // pred_check
        %p195 = pneg %p127
      $region22: #{vit_forward.15} parent=11 // pred_check_branch
        %197 = sbr.rel (%p195) target = $region24
      $region23: #{vit_forward.15} parent=11 // pred_region
        _
      $region24: #{vit_forward.15} parent=11 // pred_fallthru
        _
      // Predicated region
      $region25: #{vit_forward.15} parent=11 // pred_check
        %p198 = pneg %p148
      $region26: #{vit_forward.15} parent=11 // pred_check_branch
        %200 = sbr.rel (%p198) target = $region28
      $region27: #{vit_forward.15} parent=11 // pred_region
        _
      $region28: #{vit_forward.15} parent=11 // pred_fallthru
        _
    $region12: #{vit_forward.15} parent=5 // pred_fallthru
      _
    %p201 = scmp.lt.s32.totalorder %s12, 2
    // Predicated region
    $region29: #{vit_forward.15} parent=5 // pred_check
      %p202 = pneg %p201
    $region30: #{vit_forward.15} parent=5 // pred_check_branch
      %204 = sbr.rel (%p202) target = $region32
    $region31: #{vit_forward.15} parent=5 // pred_region
      // Predicated region
      $region33: #{vit_forward.15} parent=31 // pred_check
        %p205 = pneg %p32
      $region34: #{vit_forward.15} parent=31 // pred_check_branch
        %207 = sbr.rel (%p205) target = $region36
      $region35: #{vit_forward.15} parent=31 // pred_region
        %s208 = smul.u32 4, %s12
        %p209 = scmp.lt.s32.totalorder %s208, 7
        %s210 = scalar_select %p209, %s208, 7
        %s211 = smul.addr %s210, 4
        %s212 = scalar_lea.vmem %s0, %s211
        %s213 = smul.u32 4, %s12
      $region36: #{vit_forward.15} parent=31 // pred_fallthru
        _
      // Predicated region
      $region37: #{vit_forward.15} parent=31 // pred_check
        %p214 = pneg %p100
      $region38: #{vit_forward.15} parent=31 // pred_check_branch
        %216 = sbr.rel (%p214) target = $region40
      $region39: #{vit_forward.15} parent=31 // pred_region
        %s217 = smul.u32 4, %s12
        %p218 = scmp.lt.s32.totalorder %s217, 7
        %s219 = scalar_select %p218, %s217, 7
        %s220 = smul.addr %s219, 4
        %s221 = scalar_lea.vmem %s3, %s220
        %s222 = smul.u32 4, %s12
      $region40: #{vit_forward.15} parent=31 // pred_fallthru
        _
    $region32: #{vit_forward.15} parent=5 // pred_fallthru
      _
    %p223 = scmp.le.s32.totalorder 1, %s12
    %p224 = scmp.lt.s32.totalorder %s12, 3
    %p225 = pnand %p223, %p224
    %p226 = pneg %p225
    // Predicated region
    $region41: #{vit_forward.15} parent=5 // pred_check
      _
    $region42: #{vit_forward.15} parent=5 // pred_check_branch
      %228 = sbr.rel (%p225) target = $region44
    $region43: #{vit_forward.15} parent=5 // pred_region
      %s229 = ssub.s32 %s12, 1
      %s230 = smul.u32 4, %s17
      %p231 = scmp.lt.s32.totalorder %s230, 7
      %s232 = scalar_select %p231, %s230, 7
      %s233 = smul.addr %s232, 4
      %s234 = scalar_lea.vmem %s0, %s233
      %p235 = pneg %p38
      %p236 = pneg %p35
      %p237 = pneg %p59
      %p238 = pneg %p56
      %p239 = pneg %p80
      %p240 = pneg %p77
      %s241 = smul.u32 4, %s17
      %p242 = scmp.lt.s32.totalorder %s241, 7
      %s243 = scalar_select %p242, %s241, 7
      %s244 = smul.addr %s243, 4
      %s245 = scalar_lea.vmem %s3, %s244
      %p246 = pneg %p106
      %p247 = pneg %p103
      %p248 = pneg %p127
      %p249 = pneg %p124
      %p250 = pneg %p148
      %p251 = pneg %p145
      %p252 = pneg %p174
      %p253 = pneg %p171
      %s254 = smul.u32 4, %s17
      %p255 = scmp.lt.s32.totalorder %s254, 7
      %s256 = scalar_select %p255, %s254, 7
      %s257 = smul.addr %s256, 4
      %s258 = scalar_lea.vmem %s6, %s257
      %s259 = smul.u32 4, %s17
      %p260 = scmp.lt.s32.totalorder %s259, 7
      %s261 = scalar_select %p260, %s259, 7
      %s262 = smul.addr %s261, 4
      %s263 = scalar_lea.vmem %s0, %s262
      %s264 = smul.u32 4, %s17
      %s265 = smul.u32 4, %s17
      %p266 = scmp.lt.s32.totalorder %s265, 7
      %s267 = scalar_select %p266, %s265, 7
      %s268 = smul.addr %s267, 4
      %s269 = scalar_lea.vmem %s3, %s268
      %s270 = smul.u32 4, %s17
      %s271 = smul.u32 4, %s17
      %p272 = scmp.lt.s32.totalorder %s271, 7
      %s273 = scalar_select %p272, %s271, 7
      %s274 = smul.addr %s273, 4
      %s275 = scalar_lea.vmem %s6, %s274
      %s276 = smul.u32 4, %s17
      %v278 = vld [vmem:[%s263] sm:$0xf]
      %v279 = vld [vmem:[%s263 + $0x4] sm:$0xf]
      %v280 = vld [vmem:[%s263 + $0x8] sm:$0xf]
      %v281 = vld [vmem:[%s263 + $0xc] sm:$0xf]
      %v282 = vld [vmem:[%s1] sm:$0xf]
      %v283 = vld [vmem:[%s1 + $0x4] sm:$0xf]
      %v284 = vld [vmem:[%s1 + $0x8] sm:$0xf]
      %v285 = vld [vmem:[%s1 + $0xc] sm:$0xf]
      %v286 = vld [vmem:[%s1 + $0x10] sm:$0xf]
      %v287 = vld [vmem:[%s1 + $0x14] sm:$0xf]
      %v288 = vld [vmem:[%s1 + $0x18] sm:$0xf]
      %v289 = vld [vmem:[%s1 + $0x1c] sm:$0xf]
      %v290 = vld [vmem:[%s1 + $0x20] sm:$0xf]
      %v291 = vld [vmem:[%s1 + $0x24] sm:$0xf]
      %v292 = vld [vmem:[%s1 + $0x28] sm:$0xf]
      %v293 = vld [vmem:[%s1 + $0x2c] sm:$0xf]
      %v294 = vld [vmem:[%s1 + $0x30] sm:$0xf]
      %v295 = vld [vmem:[%s1 + $0x34] sm:$0xf]
      %v296 = vld [vmem:[%s1 + $0x38] sm:$0xf]
      %v297 = vld [vmem:[%s1 + $0x3c] sm:$0xf]
      %v298 = vld [vmem:[%s2] sm:$0x1]
      %v300 = vlaneseq
      %v301 = vshrl.u32 %v300, 7
      %v302 = vsub.s32 0, %v301
      %v303 = vrot.slane %v298, %v302
      %v309 = vunpack.c.l.b16 %v278
      %v310 = vunpack.c.l.b16 %v279
      %v311 = vunpack.c.l.b16 %v280
      %v312 = vunpack.c.l.b16 %v281
      %v313 = vpack.c.b16 %v310, %v309
      %v314 = vpack.c.b16 %v312, %v311
      %v333 = vunpack.c.l.b16 %v282
      %v334 = vunpack.c.l.b16 %v283
      %v335 = vunpack.c.l.b16 %v284
      %v336 = vunpack.c.l.b16 %v285
      %v337 = vunpack.c.l.b16 %v286
      %v338 = vunpack.c.l.b16 %v287
      %v339 = vunpack.c.l.b16 %v288
      %v340 = vunpack.c.l.b16 %v289
      %v341 = vunpack.c.l.b16 %v290
      %v342 = vunpack.c.l.b16 %v291
      %v343 = vunpack.c.l.b16 %v292
      %v344 = vunpack.c.l.b16 %v293
      %v345 = vunpack.c.l.b16 %v294
      %v346 = vunpack.c.l.b16 %v295
      %v347 = vunpack.c.l.b16 %v296
      %v348 = vunpack.c.l.b16 %v297
      %v349 = vpack.c.b16 %v334, %v333
      %v350 = vpack.c.b16 %v336, %v335
      %v351 = vpack.c.b16 %v338, %v337
      %v352 = vpack.c.b16 %v340, %v339
      %v353 = vpack.c.b16 %v342, %v341
      %v354 = vpack.c.b16 %v344, %v343
      %v355 = vpack.c.b16 %v346, %v345
      %v356 = vpack.c.b16 %v348, %v347
      %365 = vmatprep.subr.bf16.mxu0 0
      %366 = vmatpush1.bf16.msra.mxu0 %v349
      %367 = vmatprep.subr.bf16.mxu0 0
      %368 = vmatpush1.bf16.msra.mxu0 %v350
      %369 = vmatprep.subr.bf16.mxu0 0
      %370 = vmatpush1.bf16.msra.mxu0 %v351
      %371 = vmatprep.subr.bf16.mxu0 0
      %372 = vmatpush1.bf16.msra.mxu0 %v352
      %373 = vmatprep.subr.bf16.mxu0 0
      %374 = vmatpush1.bf16.msra.mxu0 %v353
      %375 = vmatprep.subr.bf16.mxu0 0
      %376 = vmatpush1.bf16.msra.mxu0 %v354
      %377 = vmatprep.subr.bf16.mxu0 0
      %378 = vmatpush1.bf16.msra.mxu0 %v355
      %379 = vmatprep.subr.bf16.mxu0 0
      %380 = vmatpush1.bf16.msra.mxu0 %v356
      %381 = vmatprep.subr.bf16.mxu0 0
      %382 = vmatpush1.bf16.msra.mxu0 0
      %383 = vmatprep.subr.bf16.mxu0 0
      %384 = vmatpush1.bf16.msra.mxu0 0
      %385 = vmatprep.subr.bf16.mxu0 0
      %386 = vmatpush1.bf16.msra.mxu0 0
      %387 = vmatprep.subr.bf16.mxu0 0
      %388 = vmatpush1.bf16.msra.mxu0 0
      %389 = vmatprep.subr.bf16.mxu0 0
      %390 = vmatpush1.bf16.msra.mxu0 0
      %391 = vmatprep.subr.bf16.mxu0 0
      %392 = vmatpush1.bf16.msra.mxu0 0
      %393 = vmatprep.subr.bf16.mxu0 0
      %394 = vmatpush1.bf16.msra.mxu0 0
      %395 = vmatprep.subr.bf16.mxu0 0
      %396 = vmatpush1.bf16.msra.mxu0 0
      %397 = vmatprep.mubr.bf16.mxu0 0
      %398 = vmatmul.mubr.bf16.gmra.mrb[0].mxu0 %v313
      %v399 = vpop.f32.mrb[0].mxu0
      %v400 = vadd.f32 %v303, %v399
      %v401 = vpop.f32.mrb[0].mxu0
      %v402 = vpop.f32.mrb[0].mxu0
      %v403 = vadd.f32 %v303, %v402
      %v404 = vpop.f32.mrb[0].mxu0
      %405 = vmatprep.mubr.bf16.mxu0 0
      %406 = vmatmul.mubr.bf16.gmra.mrb[0].mxu0 %v314
      %v407 = vpop.f32.mrb[0].mxu0
      %v408 = vadd.f32 %v303, %v407
      %v409 = vpop.f32.mrb[0].mxu0
      %v410 = vpop.f32.mrb[0].mxu0
      %v411 = vadd.f32 %v303, %v410
      %v412 = vpop.f32.mrb[0].mxu0
      %413 = vdwg.mxu0
      %v414 = vld [vmem:[%s269] sm:$0xf]
      %v415 = vld [vmem:[%s269 + $0x4] sm:$0xf]
      %v416 = vld [vmem:[%s269 + $0x8] sm:$0xf]
      %v417 = vld [vmem:[%s269 + $0xc] sm:$0xf]
      %v418 = vunpack.c.l.bf16 %v414
      %v419 = vunpack.c.l.bf16 %v415
      %v420 = vunpack.c.l.bf16 %v416
      %v421 = vunpack.c.l.bf16 %v417
      %v422 = vadd.f32 %v400, %v418
      %v423 = vadd.f32 %v403, %v419
      %v424 = vadd.f32 %v408, %v420
      %v425 = vadd.f32 %v411, %v421
      %v426 = vlaneseq
      %v427 = vand.u32 %v426, 127
      %vm428 = vcmp.lt.s32.totalorder %v427, 128
      %v429 = vsel %vm428, %v422, 0.0
      %v430 = vsel %vm428, %v423, 0.0
      %v431 = vsel %vm428, %v424, 0.0
      %v432 = vsel %vm428, %v425, 0.0
      %433 = vadd.xlane.f32.xlu0 %v429
      %v434 = vpop.xlane.xlu0 %433
      %435 = vadd.xlane.f32.xlu0 %v430
      %v436 = vpop.xlane.xlu0 %435
      %437 = vadd.xlane.f32.xlu0 %v431
      %v438 = vpop.xlane.xlu0 %437
      %439 = vadd.xlane.f32.xlu0 %v432
      %v440 = vpop.xlane.xlu0 %439
      %v441 = vmul.f32 %v434, 0.0078125
      %v442 = vmul.f32 %v436, 0.0078125
      %v443 = vmul.f32 %v438, 0.0078125
      %v444 = vmul.f32 %v440, 0.0078125
      %v445 = vsub.f32 %v422, %v441
      %v446 = vsub.f32 %v423, %v442
      %v447 = vsub.f32 %v424, %v443
      %v448 = vsub.f32 %v425, %v444
      %v449 = vsel %vm428, %v445, 0.0
      %v450 = vsel %vm428, %v446, 0.0
      %v451 = vsel %vm428, %v447, 0.0
      %v452 = vsel %vm428, %v448, 0.0
      %v453 = vmul.f32 %v449, %v449
      %v454 = vmul.f32 %v450, %v450
      %v455 = vmul.f32 %v451, %v451
      %v456 = vmul.f32 %v452, %v452
      %457 = vadd.xlane.f32.xlu0 %v453
      %v458 = vpop.xlane.xlu0 %457
      %459 = vadd.xlane.f32.xlu0 %v454
      %v460 = vpop.xlane.xlu0 %459
      %461 = vadd.xlane.f32.xlu0 %v455
      %v462 = vpop.xlane.xlu0 %461
      %463 = vadd.xlane.f32.xlu0 %v456
      %v464 = vpop.xlane.xlu0 %463
      %v465 = vmul.f32 %v458, 0.0078125
      %v466 = vmul.f32 %v460, 0.0078125
      %v467 = vmul.f32 %v462, 0.0078125
      %v468 = vmul.f32 %v464, 0.0078125
      %v469 = vadd.f32 %v465, 1e-05
      %v470 = vadd.f32 %v466, 1e-05
      %v471 = vadd.f32 %v467, 1e-05
      %v472 = vadd.f32 %v468, 1e-05
      %v473 = vrsqrt.pop %v469
      %v474 = vrsqrt.pop %v470
      %v475 = vrsqrt.pop %v471
      %v476 = vrsqrt.pop %v472
      %v477 = vmul.f32 %v449, %v473
      %v478 = vmul.f32 %v450, %v474
      %v479 = vmul.f32 %v451, %v475
      %v480 = vmul.f32 %v452, %v476
      %v481 = vld [vmem:[%s4] sm:$0x1]
      %v483 = vlaneseq
      %v484 = vshrl.u32 %v483, 7
      %v485 = vsub.s32 0, %v484
      %v486 = vrot.slane %v481, %v485
      %v488 = vmul.f32 %v477, %v486
      %v489 = vmul.f32 %v478, %v486
      %v490 = vmul.f32 %v479, %v486
      %v491 = vmul.f32 %v480, %v486
      %v492 = vld [vmem:[%s5] sm:$0x1]
      %v494 = vlaneseq
      %v495 = vshrl.u32 %v494, 7
      %v496 = vsub.s32 0, %v495
      %v497 = vrot.slane %v492, %v496
      %v499 = vadd.f32 %v488, %v497
      %v500 = vadd.f32 %v489, %v497
      %v501 = vadd.f32 %v490, %v497
      %v502 = vadd.f32 %v491, %v497
      %v503 = vpack.c.bf16 %v500, %v499
      %v504 = vpack.c.bf16 %v502, %v501
      %v507 = vunpack.c.l.b16 %v503
      %v508 = vunpack.c.h.b16 %v503
      %v509 = vunpack.c.l.b16 %v504
      %v510 = vunpack.c.h.b16 %v504
      %v511 = vpack.c.b16 %v507, %v507
      %v512 = vpack.c.b16 %v508, %v508
      %v513 = vpack.c.b16 %v509, %v509
      %v514 = vpack.c.b16 %v510, %v510
      %519 = vst [vmem:[%s275] sm:$0xf] %v511
      %520 = vst [vmem:[%s275 + $0x4] sm:$0xf] %v512
      %521 = vst [vmem:[%s275 + $0x8] sm:$0xf] %v513
      %522 = vst [vmem:[%s275 + $0xc] sm:$0xf] %v514
      %s523 = smul.u32 4, %s17
      %p524 = scmp.lt.s32.totalorder %s523, 7
      %s525 = scalar_select %p524, %s523, 7
      %s526 = smul.addr %s525, 4
      %s527 = scalar_lea.vmem %s6, %s526
      // Predicated region
      $region45: #{vit_forward.15} parent=43 // pred_check
        %p528 = pneg %p171
      $region46: #{vit_forward.15} parent=43 // pred_check_branch
        %530 = sbr.rel (%p528) target = $region48
      $region47: #{vit_forward.15} parent=43 // pred_region
        %s531 = smul.u32 4, %s17
      $region48: #{vit_forward.15} parent=43 // pred_fallthru
        _
    $region44: #{vit_forward.15} parent=5 // pred_fallthru
      _
    %p532 = scmp.le.s32.totalorder 2, %s12
    // Predicated region
    $region49: #{vit_forward.15} parent=5 // pred_check
      %p533 = pneg %p532
    $region50: #{vit_forward.15} parent=5 // pred_check_branch
      %535 = sbr.rel (%p533) target = $region52
    $region51: #{vit_forward.15} parent=5 // pred_region
      %s536 = ssub.s32 %s12, 2
      // Predicated region
      $region53: #{vit_forward.15} parent=51 // pred_check
        %p537 = pneg %p177
      $region54: #{vit_forward.15} parent=51 // pred_check_branch
        %539 = sbr.rel (%p537) target = $region56
      $region55: #{vit_forward.15} parent=51 // pred_region
        %s540 = smul.u32 4, %s18
        %p541 = scmp.lt.s32.totalorder %s540, 7
        %s542 = scalar_select %p541, %s540, 7
        %s543 = smul.addr %s542, 4
        %s544 = scalar_lea.vmem %s6, %s543
      $region56: #{vit_forward.15} parent=51 // pred_fallthru
        _
    $region52: #{vit_forward.15} parent=5 // pred_fallthru
      _
  $region6: #{vit_forward.15} parent=0 // loop_footer
    %s16 = sadd.s32 1, %s12
  $region7: #{vit_forward.15} parent=0 // loop_footer_branch
    %11 = sbr.rel target = $region3
  $region8: #{vit_forward.15} parent=0 // loop_exit
    _

// kernel: vit_forward.14
$region0: #{vit_forward.14}
  #allocation0 [shape = 'u32[]', space=smem, size = 0x4, offset = 0x4, fixed_abs, tag = 'smem constant byte address 0x4 - core index']
  #allocation1 [shape = 'u32[144,128]{1,0:T(1,128)}', space=vmem, size = 0x12000, scoped, tag = 'internal scratch']
  %s0 = inlined_call_operand.vmem [shape: bf16[2,32,384], index: 0, kind: input, shape index: {}]
  %s1 = inlined_call_operand.vmem [shape: bf16[2,32,128], index: 1, kind: output, shape index: {}]
  %s2 = sld [smem:[#allocation0]]
  $region37: #{vit_forward.14} parent=0
    _
  %s4 = ssub.s32 1, %s2
  %s5 = scalar_select 0, %s4, %s2
  loop: start=0, step=1, limit=4
  $region2: #{vit_forward.14} parent=0 // loop_pre_header
    _
  $region3: #{vit_forward.14} parent=0 // loop_header
    %s7 = sphi 0, %s11
    %p8 = scmp.ge.s32.totalorder %s7, 4
    %s17 = sphi 0, %s19
    %s20 = sphi 0, %s17
    %s21 = sphi 0, %s20
    %s37 = sphi 0, %s21
    %s43 = sphi 0, %s45
    %s46 = sphi 0, %s43
    %s47 = sphi 0, %s46
    %s63 = sphi 0, %s47
  $region4: #{vit_forward.14} parent=0 // loop_header_branch
    %10 = sbr.rel (%p8) target = $region8
  $region5: #{vit_forward.14} parent=0 // loop_body
    %s12 = ssub.s32 %s7, 1
    %s13 = ssub.s32 %s7, 2
    %s14 = sadd.s32 %s7, 1
    %s15 = ssub.s32 %s7, %s14
    %p16 = scmp.eq.s32.totalorder %s15, 0
    %s18 = sadd.s32 %s17, 1
    %s19 = scalar_select %p16, %s17, %s18
    %p22 = pneg %p16
    %p23 = scmp.eq.s32.totalorder %s7, 1
    %p24 = por %p22, %p23
    %p25 = scmp.ne.s32.totalorder %s17, %s20
    %p26 = scmp.eq.s32.totalorder %s7, 0
    %p27 = por %p25, %p26
    %p28 = scmp.ne.s32.totalorder %s17, %s20
    %p29 = scmp.eq.s32.totalorder %s12, 1
    %p30 = por %p28, %p29
    %p31 = scmp.ne.s32.totalorder %s20, %s21
    %p32 = scmp.eq.s32.totalorder %s12, 0
    %p33 = por %p31, %p32
    %p34 = scmp.ne.s32.totalorder %s20, %s21
    %p35 = scmp.eq.s32.totalorder %s13, 1
    %p36 = por %p34, %p35
    %p38 = scmp.ne.s32.totalorder %s21, %s37
    %p39 = scmp.eq.s32.totalorder %s13, 0
    %p40 = por %p38, %p39
    %s41 = ssub.s32 %s7, %s14
    %p42 = scmp.eq.s32.totalorder %s41, 0
    %s44 = sadd.s32 %s43, 1
    %s45 = scalar_select %p42, %s43, %s44
    %p48 = pneg %p42
    %p49 = scmp.eq.s32.totalorder %s7, 1
    %p50 = por %p48, %p49
    %p51 = scmp.ne.s32.totalorder %s43, %s46
    %p52 = scmp.eq.s32.totalorder %s7, 0
    %p53 = por %p51, %p52
    %p54 = scmp.ne.s32.totalorder %s43, %s46
    %p55 = scmp.eq.s32.totalorder %s12, 1
    %p56 = por %p54, %p55
    %p57 = scmp.ne.s32.totalorder %s46, %s47
    %p58 = scmp.eq.s32.totalorder %s12, 0
    %p59 = por %p57, %p58
    %p60 = scmp.ne.s32.totalorder %s46, %s47
    %p61 = scmp.eq.s32.totalorder %s13, 1
    %p62 = por %p60, %p61
    %p64 = scmp.ne.s32.totalorder %s47, %s63
    %p65 = scmp.eq.s32.totalorder %s13, 0
    %p66 = por %p64, %p65
    %p67 = scmp.le.s32.totalorder 1, %s7
    %p68 = scmp.lt.s32.totalorder %s7, 3
    %p69 = pnand %p67, %p68
    %p70 = pneg %p69
    // Predicated region
    $region9: #{vit_forward.14} parent=5 // pred_check
      _
    $region10: #{vit_forward.14} parent=5 // pred_check_branch
      %72 = sbr.rel (%p69) target = $region12
    $region11: #{vit_forward.14} parent=5 // pred_region
      %s73 = ssub.s32 %s7, 1
    $region12: #{vit_forward.14} parent=5 // pred_fallthru
      _
    %p74 = scmp.lt.s32.totalorder %s7, 2
    // Predicated region
    $region13: #{vit_forward.14} parent=5 // pred_check
      %p75 = pneg %p74
    $region14: #{vit_forward.14} parent=5 // pred_check_branch
      %77 = sbr.rel (%p75) target = $region16
    $region15: #{vit_forward.14} parent=5 // pred_region
      // Predicated region
      $region17: #{vit_forward.14} parent=15 // pred_check
        %p78 = pneg %p27
      $region18: #{vit_forward.14} parent=15 // pred_check_branch
        %80 = sbr.rel (%p78) target = $region20
      $region19: #{vit_forward.14} parent=15 // pred_region
        %p81 = scmp.lt.s32.totalorder %s7, 1
        %s82 = scalar_select %p81, %s7, 1
        %s83 = smul.addr %s82, 12
        %s84 = smul.addr %s83, 4
        %s85 = scalar_lea.vmem %s0, %s84
      $region20: #{vit_forward.14} parent=15 // pred_fallthru
        _
    $region16: #{vit_forward.14} parent=5 // pred_fallthru
      _
    %p86 = scmp.le.s32.totalorder 1, %s7
    %p87 = scmp.lt.s32.totalorder %s7, 3
    %p88 = pnand %p86, %p87
    %p89 = pneg %p88
    // Predicated region
    $region21: #{vit_forward.14} parent=5 // pred_check
      _
    $region22: #{vit_forward.14} parent=5 // pred_check_branch
      %91 = sbr.rel (%p88) target = $region24
    $region23: #{vit_forward.14} parent=5 // pred_region
      %s92 = ssub.s32 %s7, 1
      %p93 = scmp.lt.s32.totalorder %s12, 1
      %s94 = scalar_select %p93, %s12, 1
      %s95 = smul.addr %s94, 12
      %s96 = smul.addr %s95, 4
      %s97 = scalar_lea.vmem %s0, %s96
      %p98 = pneg %p33
      %p99 = pneg %p30
      %p100 = pneg %p59
      %p101 = pneg %p56
      %p102 = scmp.lt.s32.totalorder %s12, 1
      %s103 = scalar_select %p102, %s12, 1
      %s104 = smul.addr %s103, 4
      %s105 = smul.addr %s104, 4
      %s106 = scalar_lea.vmem %s1, %s105
      %p107 = scmp.lt.s32.totalorder %s12, 1
      %s108 = scalar_select %p107, %s12, 1
      %s109 = smul.addr %s108, 12
      %s110 = smul.addr %s109, 4
      %s111 = scalar_lea.vmem %s0, %s110
      %p112 = scmp.lt.s32.totalorder %s12, 1
      %s113 = scalar_select %p112, %s12, 1
      %s114 = smul.addr %s113, 4
      %s115 = smul.addr %s114, 4
      %s116 = scalar_lea.vmem %s1, %s115
      %v118 = vld [vmem:[%s111] sm:$0xf]
      %v119 = vld [vmem:[%s111 + $0xc] sm:$0xf]
      %v120 = vld [vmem:[%s111 + $0x18] sm:$0xf]
      %v121 = vld [vmem:[%s111 + $0x24] sm:$0xf]
      %v122 = vld [vmem:[%s111 + $0x4] sm:$0xf]
      %v123 = vld [vmem:[%s111 + $0x10] sm:$0xf]
      %v124 = vld [vmem:[%s111 + $0x1c] sm:$0xf]
      %v125 = vld [vmem:[%s111 + $0x28] sm:$0xf]
      %v126 = vld [vmem:[%s111 + $0x8] sm:$0xf]
      %v127 = vld [vmem:[%s111 + $0x14] sm:$0xf]
      %v128 = vld [vmem:[%s111 + $0x20] sm:$0xf]
      %v129 = vld [vmem:[%s111 + $0x2c] sm:$0xf]
      %v134 = vunpack.c.l.b16 %v118
      %v135 = vunpack.c.l.b16 %v119
      %v136 = vunpack.c.l.b16 %v120
      %v137 = vunpack.c.l.b16 %v121
      %v138 = vpack.c.b16 %v135, %v134
      %v139 = vpack.c.b16 %v137, %v136
      %v144 = vunpack.c.l.b16 %v122
      %v145 = vunpack.c.l.b16 %v123
      %v146 = vunpack.c.l.b16 %v124
      %v147 = vunpack.c.l.b16 %v125
      %v148 = vpack.c.b16 %v145, %v144
      %v149 = vpack.c.b16 %v147, %v146
      %vm150 = vcmask 261120
      %v152 = vsel %vm150, %v138, 0
      %v155 = vsel %vm150, %v139, 0
      %v158 = vsel %vm150, %v148, 0
      %v161 = vsel %vm150, %v149, 0
      %163 = vmatprep.subr.bf16.mxu0 0
      %164 = vmatpush1.bf16.xpose.msra.mxu0 %v158
      %165 = vmatprep.subr.bf16.mxu0 0
      %166 = vmatpush1.bf16.xpose.msra.mxu0 %v161
      %167 = vmatprep.subr.bf16.mxu0 0
      %168 = vmatpush1.bf16.xpose.msra.mxu0 0
      %169 = vmatprep.subr.bf16.mxu0 0
      %170 = vmatpush1.bf16.xpose.msra.mxu0 0
      %171 = vmatprep.subr.bf16.mxu0 0
      %172 = vmatpush1.bf16.xpose.msra.mxu0 0
      %173 = vmatprep.subr.bf16.mxu0 0
      %174 = vmatpush1.bf16.xpose.msra.mxu0 0
      %175 = vmatprep.subr.bf16.mxu0 0
      %176 = vmatpush1.bf16.xpose.msra.mxu0 0
      %177 = vmatprep.subr.bf16.mxu0 0
      %178 = vmatpush1.bf16.xpose.msra.mxu0 0
      %179 = vmatprep.subr.bf16.mxu0 0
      %180 = vmatpush1.bf16.xpose.msra.mxu0 0
      %181 = vmatprep.subr.bf16.mxu0 0
      %182 = vmatpush1.bf16.xpose.msra.mxu0 0
      %183 = vmatprep.subr.bf16.mxu0 0
      %184 = vmatpush1.bf16.xpose.msra.mxu0 0
      %185 = vmatprep.subr.bf16.mxu0 0
      %186 = vmatpush1.bf16.xpose.msra.mxu0 0
      %187 = vmatprep.subr.bf16.mxu0 0
      %188 = vmatpush1.bf16.xpose.msra.mxu0 0
      %189 = vmatprep.subr.bf16.mxu0 0
      %190 = vmatpush1.bf16.xpose.msra.mxu0 0
      %191 = vmatprep.subr.bf16.mxu0 0
      %192 = vmatpush1.bf16.xpose.msra.mxu0 0
      %193 = vmatprep.subr.bf16.mxu0 0
      %194 = vmatpush1.bf16.xpose.msra.mxu0 0
      %195 = vmatprep.mubr.bf16.mxu0 0
      %196 = vmatmul.mubr.bf16.gmra.mrb[0].mxu0 %v152
      %v197 = vpop.f32.mrb[0].mxu0
      %v198 = vadd.f32 0.0, %v197
      %v199 = vpop.f32.mrb[0].mxu0
      %v200 = vpop.f32.mrb[0].mxu0
      %v201 = vadd.f32 0.0, %v200
      %v202 = vpop.f32.mrb[0].mxu0
      %203 = vmatprep.mubr.bf16.mxu0 0
      %204 = vmatmul.mubr.bf16.gmra.mrb[0].mxu0 %v155
      %v205 = vpop.f32.mrb[0].mxu0
      %v206 = vadd.f32 0.0, %v205
      %v207 = vpop.f32.mrb[0].mxu0
      %v208 = vpop.f32.mrb[0].mxu0
      %v209 = vadd.f32 0.0, %v208
      %v210 = vpop.f32.mrb[0].mxu0
      %211 = vdwg.mxu0
      %v212 = vmul.f32 %v198, 5.656854
      %v213 = vmul.f32 %v201, 5.656854
      %v214 = vmul.f32 %v206, 5.656854
      %v215 = vmul.f32 %v209, 5.656854
      %v216 = vlaneseq
      %v217 = vand.u32 %v216, 127
      %vm218 = vcmp.lt.s32.totalorder %v217, 17
      %v219 = vsel %vm218, %v212, -1e+30
      %v220 = vsel %vm218, %v213, -1e+30
      %v221 = vsel %vm218, %v214, -1e+30
      %v222 = vsel %vm218, %v215, -1e+30
      %v223 = vsel %vm150, %v219, -inf
      %224 = vmax.xlane.f32.xlu0 %v223
      %v225 = vpop.xlane.xlu0 %224
      %v226 = vsel %vm150, %v220, -inf
      %227 = vmax.xlane.f32.xlu0 %v226
      %v228 = vpop.xlane.xlu0 %227
      %v229 = vsel %vm150, %v221, -inf
      %230 = vmax.xlane.f32.xlu0 %v229
      %v231 = vpop.xlane.xlu0 %230
      %v232 = vsel %vm150, %v222, -inf
      %233 = vmax.xlane.f32.xlu0 %v232
      %v234 = vpop.xlane.xlu0 %233
      %v235 = vsub.f32 %v219, %v225
      %v236 = vsub.f32 %v220, %v228
      %v237 = vsub.f32 %v221, %v231
      %v238 = vsub.f32 %v222, %v234
      %v239 = vmul.f32 %v235, 1.442695
      %v240 = vpow.pop %v239
      %v241 = vmul.f32 %v236, 1.442695
      %v242 = vpow.pop %v241
      %v243 = vmul.f32 %v237, 1.442695
      %v244 = vpow.pop %v243
      %v245 = vmul.f32 %v238, 1.442695
      %v246 = vpow.pop %v245
      %v247 = vsel %vm150, %v240, 0.0
      %248 = vadd.xlane.f32.xlu0 %v247
      %v249 = vpop.xlane.xlu0 %248
      %v250 = vsel %vm150, %v242, 0.0
      %251 = vadd.xlane.f32.xlu0 %v250
      %v252 = vpop.xlane.xlu0 %251
      %v253 = vsel %vm150, %v244, 0.0
      %254 = vadd.xlane.f32.xlu0 %v253
      %v255 = vpop.xlane.xlu0 %254
      %v256 = vsel %vm150, %v246, 0.0
      %257 = vadd.xlane.f32.xlu0 %v256
      %v258 = vpop.xlane.xlu0 %257
      %v259 = vrcp.pop %v249
      %v260 = vrcp.pop %v252
      %v261 = vrcp.pop %v255
      %v262 = vrcp.pop %v258
      %v263 = vmul.f32 %v240, %v259
      %v264 = vmul.f32 %v242, %v260
      %v265 = vmul.f32 %v244, %v261
      %v266 = vmul.f32 %v246, %v262
      %v267 = vpack.c.bf16 %v264, %v263
      %v268 = vpack.c.bf16 %v266, %v265
      %v273 = vunpack.c.l.b16 %v126
      %v274 = vunpack.c.l.b16 %v127
      %v275 = vunpack.c.l.b16 %v128
      %v276 = vunpack.c.l.b16 %v129
      %v277 = vpack.c.b16 %v274, %v273
      %v278 = vpack.c.b16 %v276, %v275
      %v282 = vsel %vm150, %v267, 0
      %v285 = vsel %vm150, %v268, 0
      %287 = vmatprep.subr.bf16.mxu0 0
      %288 = vmatpush1.bf16.msra.mxu0 %v277
      %289 = vmatprep.subr.bf16.mxu0 0
      %290 = vmatpush1.bf16.msra.mxu0 %v278
      %291 = vmatprep.subr.bf16.mxu0 0
      %292 = vmatpush1.bf16.msra.mxu0 0
      %293 = vmatprep.subr.bf16.mxu0 0
      %294 = vmatpush1.bf16.msra.mxu0 0
      %295 = vmatprep.subr.bf16.mxu0 0
      %296 = vmatpush1.bf16.msra.mxu0 0
      %297 = vmatprep.subr.bf16.mxu0 0
      %298 = vmatpush1.bf16.msra.mxu0 0
      %299 = vmatprep.subr.bf16.mxu0 0
      %300 = vmatpush1.bf16.msra.mxu0 0
      %301 = vmatprep.subr.bf16.mxu0 0
      %302 = vmatpush1.bf16.msra.mxu0 0
      %303 = vmatprep.subr.bf16.mxu0 0
      %304 = vmatpush1.bf16.msra.mxu0 0
      %305 = vmatprep.subr.bf16.mxu0 0
      %306 = vmatpush1.bf16.msra.mxu0 0
      %307 = vmatprep.subr.bf16.mxu0 0
      %308 = vmatpush1.bf16.msra.mxu0 0
      %309 = vmatprep.subr.bf16.mxu0 0
      %310 = vmatpush1.bf16.msra.mxu0 0
      %311 = vmatprep.subr.bf16.mxu0 0
      %312 = vmatpush1.bf16.msra.mxu0 0
      %313 = vmatprep.subr.bf16.mxu0 0
      %314 = vmatpush1.bf16.msra.mxu0 0
      %315 = vmatprep.subr.bf16.mxu0 0
      %316 = vmatpush1.bf16.msra.mxu0 0
      %317 = vmatprep.subr.bf16.mxu0 0
      %318 = vmatpush1.bf16.msra.mxu0 0
      %319 = vmatprep.mubr.bf16.mxu0 0
      %320 = vmatmul.mubr.bf16.gmra.mrb[0].mxu0 %v282
      %v321 = vpop.f32.mrb[0].mxu0
      %v322 = vadd.f32 0.0, %v321
      %v323 = vpop.f32.mrb[0].mxu0
      %v324 = vpop.f32.mrb[0].mxu0
      %v325 = vadd.f32 0.0, %v324
      %v326 = vpop.f32.mrb[0].mxu0
      %327 = vmatprep.mubr.bf16.mxu0 0
      %328 = vmatmul.mubr.bf16.gmra.mrb[0].mxu0 %v285
      %v329 = vpop.f32.mrb[0].mxu0
      %v330 = vadd.f32 0.0, %v329
      %v331 = vpop.f32.mrb[0].mxu0
      %v332 = vpop.f32.mrb[0].mxu0
      %v333 = vadd.f32 0.0, %v332
      %v334 = vpop.f32.mrb[0].mxu0
      %335 = vdwg.mxu0
      %v336 = vpack.c.bf16 %v325, %v322
      %v337 = vpack.c.bf16 %v333, %v330
      %v340 = vunpack.c.l.b16 %v336
      %v341 = vunpack.c.h.b16 %v336
      %v342 = vunpack.c.l.b16 %v337
      %v343 = vunpack.c.h.b16 %v337
      %v344 = vpack.c.b16 %v340, %v340
      %v345 = vpack.c.b16 %v341, %v341
      %v346 = vpack.c.b16 %v342, %v342
      %v347 = vpack.c.b16 %v343, %v343
      %vm352 = vcmask 257024
      %353 = vst.msk [vmem:[%s116] sm:$0xf] %vm352, %v344
      %354 = vst.msk [vmem:[%s116 + $0x4] sm:$0xf] %vm352, %v345
      %355 = vst.msk [vmem:[%s116 + $0x8] sm:$0xf] %vm352, %v346
      %356 = vst.msk [vmem:[%s116 + $0xc] sm:$0xf] %vm352, %v347
      %v357 = vld [vmem:[%s111] sm:$0xf]
      %v358 = vld [vmem:[%s111 + $0xc] sm:$0xf]
      %v359 = vld [vmem:[%s111 + $0x18] sm:$0xf]
      %v360 = vld [vmem:[%s111 + $0x24] sm:$0xf]
      %v361 = vld [vmem:[%s111 + $0x4] sm:$0xf]
      %v362 = vld [vmem:[%s111 + $0x10] sm:$0xf]
      %v363 = vld [vmem:[%s111 + $0x1c] sm:$0xf]
      %v364 = vld [vmem:[%s111 + $0x28] sm:$0xf]
      %v365 = vld [vmem:[%s111 + $0x8] sm:$0xf]
      %v366 = vld [vmem:[%s111 + $0x14] sm:$0xf]
      %v367 = vld [vmem:[%s111 + $0x20] sm:$0xf]
      %v368 = vld [vmem:[%s111 + $0x2c] sm:$0xf]
      %v373 = vunpack.c.l.b16 %v357
      %v374 = vunpack.c.l.b16 %v358
      %v375 = vunpack.c.l.b16 %v359
      %v376 = vunpack.c.l.b16 %v360
      %v377 = vpack.c.b16 %v374, %v373
      %v378 = vpack.c.b16 %v376, %v375
      %379 = vrot.lane.b32.xlu0 %v377, 96
      %v380 = vpop.permute.xlu0 %379
      %381 = vrot.lane.b32.xlu0 %v378, 96
      %v382 = vpop.permute.xlu0 %381
      %v387 = vunpack.c.l.b16 %v361
      %v388 = vunpack.c.l.b16 %v362
      %v389 = vunpack.c.l.b16 %v363
      %v390 = vunpack.c.l.b16 %v364
      %v391 = vpack.c.b16 %v388, %v387
      %v392 = vpack.c.b16 %v390, %v389
      %393 = vrot.lane.b32.xlu0 %v391, 96
      %v394 = vpop.permute.xlu0 %393
      %395 = vrot.lane.b32.xlu0 %v392, 96
      %v396 = vpop.permute.xlu0 %395
      %v398 = vsel %vm150, %v380, 0
      %v401 = vsel %vm150, %v382, 0
      %v404 = vsel %vm150, %v394, 0
      %v407 = vsel %vm150, %v396, 0
      %409 = vmatprep.subr.bf16.mxu0 0
      %410 = vmatpush1.bf16.xpose.msra.mxu0 %v404
      %411 = vmatprep.subr.bf16.mxu0 0
      %412 = vmatpush1.bf16.xpose.msra.mxu0 %v407
      %413 = vmatprep.subr.bf16.mxu0 0
      %414 = vmatpush1.bf16.xpose.msra.mxu0 0
      %415 = vmatprep.subr.bf16.mxu0 0
      %416 = vmatpush1.bf16.xpose.msra.mxu0 0
      %417 = vmatprep.subr.bf16.mxu0 0
      %418 = vmatpush1.bf16.xpose.msra.mxu0 0
      %419 = vmatprep.subr.bf16.mxu0 0
      %420 = vmatpush1.bf16.xpose.msra.mxu0 0
      %421 = vmatprep.subr.bf16.mxu0 0
      %422 = vmatpush1.bf16.xpose.msra.mxu0 0
      %423 = vmatprep.subr.bf16.mxu0 0
      %424 = vmatpush1.bf16.xpose.msra.mxu0 0
      %425 = vmatprep.subr.bf16.mxu0 0
      %426 = vmatpush1.bf16.xpose.msra.mxu0 0
      %427 = vmatprep.subr.bf16.mxu0 0
      %428 = vmatpush1.bf16.xpose.msra.mxu0 0
      %429 = vmatprep.subr.bf16.mxu0 0
      %430 = vmatpush1.bf16.xpose.msra.mxu0 0
      %431 = vmatprep.subr.bf16.mxu0 0
      %432 = vmatpush1.bf16.xpose.msra.mxu0 0
      %433 = vmatprep.subr.bf16.mxu0 0
      %434 = vmatpush1.bf16.xpose.msra.mxu0 0
      %435 = vmatprep.subr.bf16.mxu0 0
      %436 = vmatpush1.bf16.xpose.msra.mxu0 0
      %437 = vmatprep.subr.bf16.mxu0 0
      %438 = vmatpush1.bf16.xpose.msra.mxu0 0
      %439 = vmatprep.subr.bf16.mxu0 0
      %440 = vmatpush1.bf16.xpose.msra.mxu0 0
      %441 = vmatprep.mubr.bf16.mxu0 0
      %442 = vmatmul.mubr.bf16.gmra.mrb[0].mxu0 %v398
      %v443 = vpop.f32.mrb[0].mxu0
      %v444 = vadd.f32 0.0, %v443
      %v445 = vpop.f32.mrb[0].mxu0
      %v446 = vpop.f32.mrb[0].mxu0
      %v447 = vadd.f32 0.0, %v446
      %v448 = vpop.f32.mrb[0].mxu0
      %449 = vmatprep.mubr.bf16.mxu0 0
      %450 = vmatmul.mubr.bf16.gmra.mrb[0].mxu0 %v401
      %v451 = vpop.f32.mrb[0].mxu0
      %v452 = vadd.f32 0.0, %v451
      %v453 = vpop.f32.mrb[0].mxu0
      %v454 = vpop.f32.mrb[0].mxu0
      %v455 = vadd.f32 0.0, %v454
      %v456 = vpop.f32.mrb[0].mxu0
      %457 = vdwg.mxu0
      %v458 = vmul.f32 %v444, 5.656854
      %v459 = vmul.f32 %v447, 5.656854
      %v460 = vmul.f32 %v452, 5.656854
      %v461 = vmul.f32 %v455, 5.656854
      %v462 = vsel %vm218, %v458, -1e+30
      %v463 = vsel %vm218, %v459, -1e+30
      %v464 = vsel %vm218, %v460, -1e+30
      %v465 = vsel %vm218, %v461, -1e+30
      %v466 = vsel %vm150, %v462, -inf
      %467 = vmax.xlane.f32.xlu0 %v466
      %v468 = vpop.xlane.xlu0 %467
      %v469 = vsel %vm150, %v463, -inf
      %470 = vmax.xlane.f32.xlu0 %v469
      %v471 = vpop.xlane.xlu0 %470
      %v472 = vsel %vm150, %v464, -inf
      %473 = vmax.xlane.f32.xlu0 %v472
      %v474 = vpop.xlane.xlu0 %473
      %v475 = vsel %vm150, %v465, -inf
      %476 = vmax.xlane.f32.xlu0 %v475
      %v477 = vpop.xlane.xlu0 %476
      %v478 = vsub.f32 %v462, %v468
      %v479 = vsub.f32 %v463, %v471
      %v480 = vsub.f32 %v464, %v474
      %v481 = vsub.f32 %v465, %v477
      %v482 = vmul.f32 %v478, 1.442695
      %v483 = vpow.pop %v482
      %v484 = vmul.f32 %v479, 1.442695
      %v485 = vpow.pop %v484
      %v486 = vmul.f32 %v480, 1.442695
      %v487 = vpow.pop %v486
      %v488 = vmul.f32 %v481, 1.442695
      %v489 = vpow.pop %v488
      %v490 = vsel %vm150, %v483, 0.0
      %491 = vadd.xlane.f32.xlu0 %v490
      %v492 = vpop.xlane.xlu0 %491
      %v493 = vsel %vm150, %v485, 0.0
      %494 = vadd.xlane.f32.xlu0 %v493
      %v495 = vpop.xlane.xlu0 %494
      %v496 = vsel %vm150, %v487, 0.0
      %497 = vadd.xlane.f32.xlu0 %v496
      %v498 = vpop.xlane.xlu0 %497
      %v499 = vsel %vm150, %v489, 0.0
      %500 = vadd.xlane.f32.xlu0 %v499
      %v501 = vpop.xlane.xlu0 %500
      %v502 = vrcp.pop %v492
      %v503 = vrcp.pop %v495
      %v504 = vrcp.pop %v498
      %v505 = vrcp.pop %v501
      %v506 = vmul.f32 %v483, %v502
      %v507 = vmul.f32 %v485, %v503
      %v508 = vmul.f32 %v487, %v504
      %v509 = vmul.f32 %v489, %v505
      %v510 = vpack.c.bf16 %v507, %v506
      %v511 = vpack.c.bf16 %v509, %v508
      %v516 = vunpack.c.l.b16 %v365
      %v517 = vunpack.c.l.b16 %v366
      %v518 = vunpack.c.l.b16 %v367
      %v519 = vunpack.c.l.b16 %v368
      %v520 = vpack.c.b16 %v517, %v516
      %v521 = vpack.c.b16 %v519, %v518
      %522 = vrot.lane.b32.xlu0 %v520, 96
      %v523 = vpop.permute.xlu0 %522
      %524 = vrot.lane.b32.xlu0 %v521, 96
      %v525 = vpop.permute.xlu0 %524
      %v529 = vsel %vm150, %v510, 0
      %v532 = vsel %vm150, %v511, 0
      %534 = vmatprep.subr.bf16.mxu0 0
      %535 = vmatpush1.bf16.msra.mxu0 %v523
      %536 = vmatprep.subr.bf16.mxu0 0
      %537 = vmatpush1.bf16.msra.mxu0 %v525
      %538 = vmatprep.subr.bf16.mxu0 0
      %539 = vmatpush1.bf16.msra.mxu0 0
      %540 = vmatprep.subr.bf16.mxu0 0
      %541 = vmatpush1.bf16.msra.mxu0 0
      %542 = vmatprep.subr.bf16.mxu0 0
      %543 = vmatpush1.bf16.msra.mxu0 0
      %544 = vmatprep.subr.bf16.mxu0 0
      %545 = vmatpush1.bf16.msra.mxu0 0
      %546 = vmatprep.subr.bf16.mxu0 0
      %547 = vmatpush1.bf16.msra.mxu0 0
      %548 = vmatprep.subr.bf16.mxu0 0
      %549 = vmatpush1.bf16.msra.mxu0 0
      %550 = vmatprep.subr.bf16.mxu0 0
      %551 = vmatpush1.bf16.msra.mxu0 0
      %552 = vmatprep.subr.bf16.mxu0 0
      %553 = vmatpush1.bf16.msra.mxu0 0
      %554 = vmatprep.subr.bf16.mxu0 0
      %555 = vmatpush1.bf16.msra.mxu0 0
      %556 = vmatprep.subr.bf16.mxu0 0
      %557 = vmatpush1.bf16.msra.mxu0 0
      %558 = vmatprep.subr.bf16.mxu0 0
      %559 = vmatpush1.bf16.msra.mxu0 0
      %560 = vmatprep.subr.bf16.mxu0 0
      %561 = vmatpush1.bf16.msra.mxu0 0
      %562 = vmatprep.subr.bf16.mxu0 0
      %563 = vmatpush1.bf16.msra.mxu0 0
      %564 = vmatprep.subr.bf16.mxu0 0
      %565 = vmatpush1.bf16.msra.mxu0 0
      %566 = vmatprep.mubr.bf16.mxu0 0
      %567 = vmatmul.mubr.bf16.gmra.mrb[0].mxu0 %v529
      %v568 = vpop.f32.mrb[0].mxu0
      %v569 = vadd.f32 0.0, %v568
      %v570 = vpop.f32.mrb[0].mxu0
      %v571 = vpop.f32.mrb[0].mxu0
      %v572 = vadd.f32 0.0, %v571
      %v573 = vpop.f32.mrb[0].mxu0
      %574 = vmatprep.mubr.bf16.mxu0 0
      %575 = vmatmul.mubr.bf16.gmra.mrb[0].mxu0 %v532
      %v576 = vpop.f32.mrb[0].mxu0
      %v577 = vadd.f32 0.0, %v576
      %v578 = vpop.f32.mrb[0].mxu0
      %v579 = vpop.f32.mrb[0].mxu0
      %v580 = vadd.f32 0.0, %v579
      %v581 = vpop.f32.mrb[0].mxu0
      %582 = vdwg.mxu0
      %v583 = vpack.c.bf16 %v572, %v569
      %v584 = vpack.c.bf16 %v580, %v577
      %v587 = vunpack.c.l.b16 %v583
      %v588 = vunpack.c.h.b16 %v583
      %v589 = vunpack.c.l.b16 %v584
      %v590 = vunpack.c.h.b16 %v584
      %v591 = vpack.c.b16 %v587, %v587
      %v592 = vpack.c.b16 %v588, %v588
      %v593 = vpack.c.b16 %v589, %v589
      %v594 = vpack.c.b16 %v590, %v590
      %595 = vrot.lane.b32.xlu0 %v591, 32
      %v596 = vpop.permute.xlu0 %595
      %597 = vrot.lane.b32.xlu0 %v592, 32
      %v598 = vpop.permute.xlu0 %597
      %599 = vrot.lane.b32.xlu0 %v593, 32
      %v600 = vpop.permute.xlu0 %599
      %601 = vrot.lane.b32.xlu0 %v594, 32
      %v602 = vpop.permute.xlu0 %601
      %vm607 = vcmask 519424
      %608 = vst.msk [vmem:[%s116] sm:$0xf] %vm607, %v596
      %609 = vst.msk [vmem:[%s116 + $0x4] sm:$0xf] %vm607, %v598
      %610 = vst.msk [vmem:[%s116 + $0x8] sm:$0xf] %vm607, %v600
      %611 = vst.msk [vmem:[%s116 + $0xc] sm:$0xf] %vm607, %v602
      %v612 = vld [vmem:[%s111] sm:$0xf]
      %v613 = vld [vmem:[%s111 + $0xc] sm:$0xf]
      %v614 = vld [vmem:[%s111 + $0x18] sm:$0xf]
      %v615 = vld [vmem:[%s111 + $0x24] sm:$0xf]
      %v616 = vld [vmem:[%s111 + $0x4] sm:$0xf]
      %v617 = vld [vmem:[%s111 + $0x10] sm:$0xf]
      %v618 = vld [vmem:[%s111 + $0x1c] sm:$0xf]
      %v619 = vld [vmem:[%s111 + $0x28] sm:$0xf]
      %v620 = vld [vmem:[%s111 + $0x8] sm:$0xf]
      %v621 = vld [vmem:[%s111 + $0x14] sm:$0xf]
      %v622 = vld [vmem:[%s111 + $0x20] sm:$0xf]
      %v623 = vld [vmem:[%s111 + $0x2c] sm:$0xf]
      %v628 = vunpack.c.l.b16 %v612
      %v629 = vunpack.c.l.b16 %v613
      %v630 = vunpack.c.l.b16 %v614
      %v631 = vunpack.c.l.b16 %v615
      %v632 = vpack.c.b16 %v629, %v628
      %v633 = vpack.c.b16 %v631, %v630
      %634 = vrot.lane.b32.xlu0 %v632, 64
      %v635 = vpop.permute.xlu0 %634
      %636 = vrot.lane.b32.xlu0 %v633, 64
      %v637 = vpop.permute.xlu0 %636
      %v642 = vunpack.c.l.b16 %v616
      %v643 = vunpack.c.l.b16 %v617
      %v644 = vunpack.c.l.b16 %v618
      %v645 = vunpack.c.l.b16 %v619
      %v646 = vpack.c.b16 %v643, %v642
      %v647 = vpack.c.b16 %v645, %v644
      %648 = vrot.lane.b32.xlu0 %v646, 64
      %v649 = vpop.permute.xlu0 %648
      %650 = vrot.lane.b32.xlu0 %v647, 64
      %v651 = vpop.permute.xlu0 %650
      %v653 = vsel %vm150, %v635, 0
      %v656 = vsel %vm150, %v637, 0
      %v659 = vsel %vm150, %v649, 0
      %v662 = vsel %vm150, %v651, 0
      %664 = vmatprep.subr.bf16.mxu0 0
      %665 = vmatpush1.bf16.xpose.msra.mxu0 %v659
      %666 = vmatprep.subr.bf16.mxu0 0
      %667 = vmatpush1.bf16.xpose.msra.mxu0 %v662
      %668 = vmatprep.subr.bf16.mxu0 0
      %669 = vmatpush1.bf16.xpose.msra.mxu0 0
      %670 = vmatprep.subr.bf16.mxu0 0
      %671 = vmatpush1.bf16.xpose.msra.mxu0 0
      %672 = vmatprep.subr.bf16.mxu0 0
      %673 = vmatpush1.bf16.xpose.msra.mxu0 0
      %674 = vmatprep.subr.bf16.mxu0 0
      %675 = vmatpush1.bf16.xpose.msra.mxu0 0
      %676 = vmatprep.subr.bf16.mxu0 0
      %677 = vmatpush1.bf16.xpose.msra.mxu0 0
      %678 = vmatprep.subr.bf16.mxu0 0
      %679 = vmatpush1.bf16.xpose.msra.mxu0 0
      %680 = vmatprep.subr.bf16.mxu0 0
      %681 = vmatpush1.bf16.xpose.msra.mxu0 0
      %682 = vmatprep.subr.bf16.mxu0 0
      %683 = vmatpush1.bf16.xpose.msra.mxu0 0
      %684 = vmatprep.subr.bf16.mxu0 0
      %685 = vmatpush1.bf16.xpose.msra.mxu0 0
      %686 = vmatprep.subr.bf16.mxu0 0
      %687 = vmatpush1.bf16.xpose.msra.mxu0 0
      %688 = vmatprep.subr.bf16.mxu0 0
      %689 = vmatpush1.bf16.xpose.msra.mxu0 0
      %690 = vmatprep.subr.bf16.mxu0 0
      %691 = vmatpush1.bf16.xpose.msra.mxu0 0
      %692 = vmatprep.subr.bf16.mxu0 0
      %693 = vmatpush1.bf16.xpose.msra.mxu0 0
      %694 = vmatprep.subr.bf16.mxu0 0
      %695 = vmatpush1.bf16.xpose.msra.mxu0 0
      %696 = vmatprep.mubr.bf16.mxu0 0
      %697 = vmatmul.mubr.bf16.gmra.mrb[0].mxu0 %v653
      %v698 = vpop.f32.mrb[0].mxu0
      %v699 = vadd.f32 0.0, %v698
      %v700 = vpop.f32.mrb[0].mxu0
      %v701 = vpop.f32.mrb[0].mxu0
      %v702 = vadd.f32 0.0, %v701
      %v703 = vpop.f32.mrb[0].mxu0
      %704 = vmatprep.mubr.bf16.mxu0 0
      %705 = vmatmul.mubr.bf16.gmra.mrb[0].mxu0 %v656
      %v706 = vpop.f32.mrb[0].mxu0
      %v707 = vadd.f32 0.0, %v706
      %v708 = vpop.f32.mrb[0].mxu0
      %v709 = vpop.f32.mrb[0].mxu0
      %v710 = vadd.f32 0.0, %v709
      %v711 = vpop.f32.mrb[0].mxu0
      %712 = vdwg.mxu0
      %v713 = vmul.f32 %v699, 5.656854
      %v714 = vmul.f32 %v702, 5.656854
      %v715 = vmul.f32 %v707, 5.656854
      %v716 = vmul.f32 %v710, 5.656854
      %v717 = vsel %vm218, %v713, -1e+30
      %v718 = vsel %vm218, %v714, -1e+30
      %v719 = vsel %vm218, %v715, -1e+30
      %v720 = vsel %vm218, %v716, -1e+30
      %v721 = vsel %vm150, %v717, -inf
      %722 = vmax.xlane.f32.xlu0 %v721
      %v723 = vpop.xlane.xlu0 %722
      %v724 = vsel %vm150, %v718, -inf
      %725 = vmax.xlane.f32.xlu0 %v724
      %v726 = vpop.xlane.xlu0 %725
      %v727 = vsel %vm150, %v719, -inf
      %728 = vmax.xlane.f32.xlu0 %v727
      %v729 = vpop.xlane.xlu0 %728
      %v730 = vsel %vm150, %v720, -inf
      %731 = vmax.xlane.f32.xlu0 %v730
      %v732 = vpop.xlane.xlu0 %731
      %v733 = vsub.f32 %v717, %v723
      %v734 = vsub.f32 %v718, %v726
      %v735 = vsub.f32 %v719, %v729
      %v736 = vsub.f32 %v720, %v732
      %v737 = vmul.f32 %v733, 1.442695
      %v738 = vpow.pop %v737
      %v739 = vmul.f32 %v734, 1.442695
      %v740 = vpow.pop %v739
      %v741 = vmul.f32 %v735, 1.442695
      %v742 = vpow.pop %v741
      %v743 = vmul.f32 %v736, 1.442695
      %v744 = vpow.pop %v743
      %v745 = vsel %vm150, %v738, 0.0
      %746 = vadd.xlane.f32.xlu0 %v745
      %v747 = vpop.xlane.xlu0 %746
      %v748 = vsel %vm150, %v740, 0.0
      %749 = vadd.xlane.f32.xlu0 %v748
      %v750 = vpop.xlane.xlu0 %749
      %v751 = vsel %vm150, %v742, 0.0
      %752 = vadd.xlane.f32.xlu0 %v751
      %v753 = vpop.xlane.xlu0 %752
      %v754 = vsel %vm150, %v744, 0.0
      %755 = vadd.xlane.f32.xlu0 %v754
      %v756 = vpop.xlane.xlu0 %755
      %v757 = vrcp.pop %v747
      %v758 = vrcp.pop %v750
      %v759 = vrcp.pop %v753
      %v760 = vrcp.pop %v756
      %v761 = vmul.f32 %v738, %v757
      %v762 = vmul.f32 %v740, %v758
      %v763 = vmul.f32 %v742, %v759
      %v764 = vmul.f32 %v744, %v760
      %v765 = vpack.c.bf16 %v762, %v761
      %v766 = vpack.c.bf16 %v764, %v763
      %v771 = vunpack.c.l.b16 %v620
      %v772 = vunpack.c.l.b16 %v621
      %v773 = vunpack.c.l.b16 %v622
      %v774 = vunpack.c.l.b16 %v623
      %v775 = vpack.c.b16 %v772, %v771
      %v776 = vpack.c.b16 %v774, %v773
      %777 = vrot.lane.b32.xlu0 %v775, 64
      %v778 = vpop.permute.xlu0 %777
      %779 = vrot.lane.b32.xlu0 %v776, 64
      %v780 = vpop.permute.xlu0 %779
      %v784 = vsel %vm150, %v765, 0
      %v787 = vsel %vm150, %v766, 0
      %789 = vmatprep.subr.bf16.mxu0 0
      %790 = vmatpush1.bf16.msra.mxu0 %v778
      %791 = vmatprep.subr.bf16.mxu0 0
      %792 = vmatpush1.bf16.msra.mxu0 %v780
      %793 = vmatprep.subr.bf16.mxu0 0
      %794 = vmatpush1.bf16.msra.mxu0 0
      %795 = vmatprep.subr.bf16.mxu0 0
      %796 = vmatpush1.bf16.msra.mxu0 0
      %797 = vmatprep.subr.bf16.mxu0 0
      %798 = vmatpush1.bf16.msra.mxu0 0
      %799 = vmatprep.subr.bf16.mxu0 0
      %800 = vmatpush1.bf16.msra.mxu0 0
      %801 = vmatprep.subr.bf16.mxu0 0
      %802 = vmatpush1.bf16.msra.mxu0 0
      %803 = vmatprep.subr.bf16.mxu0 0
      %804 = vmatpush1.bf16.msra.mxu0 0
      %805 = vmatprep.subr.bf16.mxu0 0
      %806 = vmatpush1.bf16.msra.mxu0 0
      %807 = vmatprep.subr.bf16.mxu0 0
      %808 = vmatpush1.bf16.msra.mxu0 0
      %809 = vmatprep.subr.bf16.mxu0 0
      %810 = vmatpush1.bf16.msra.mxu0 0
      %811 = vmatprep.subr.bf16.mxu0 0
      %812 = vmatpush1.bf16.msra.mxu0 0
      %813 = vmatprep.subr.bf16.mxu0 0
      %814 = vmatpush1.bf16.msra.mxu0 0
      %815 = vmatprep.subr.bf16.mxu0 0
      %816 = vmatpush1.bf16.msra.mxu0 0
      %817 = vmatprep.subr.bf16.mxu0 0
      %818 = vmatpush1.bf16.msra.mxu0 0
      %819 = vmatprep.subr.bf16.mxu0 0
      %820 = vmatpush1.bf16.msra.mxu0 0
      %821 = vmatprep.mubr.bf16.mxu0 0
      %822 = vmatmul.mubr.bf16.gmra.mrb[0].mxu0 %v784
      %v823 = vpop.f32.mrb[0].mxu0
      %v824 = vadd.f32 0.0, %v823
      %v825 = vpop.f32.mrb[0].mxu0
      %v826 = vpop.f32.mrb[0].mxu0
      %v827 = vadd.f32 0.0, %v826
      %v828 = vpop.f32.mrb[0].mxu0
      %829 = vmatprep.mubr.bf16.mxu0 0
      %830 = vmatmul.mubr.bf16.gmra.mrb[0].mxu0 %v787
      %v831 = vpop.f32.mrb[0].mxu0
      %v832 = vadd.f32 0.0, %v831
      %v833 = vpop.f32.mrb[0].mxu0
      %v834 = vpop.f32.mrb[0].mxu0
      %v835 = vadd.f32 0.0, %v834
      %v836 = vpop.f32.mrb[0].mxu0
      %837 = vdwg.mxu0
      %v838 = vpack.c.bf16 %v827, %v824
      %v839 = vpack.c.bf16 %v835, %v832
      %v842 = vunpack.c.l.b16 %v838
      %v843 = vunpack.c.h.b16 %v838
      %v844 = vunpack.c.l.b16 %v839
      %v845 = vunpack.c.h.b16 %v839
      %v846 = vpack.c.b16 %v842, %v842
      %v847 = vpack.c.b16 %v843, %v843
      %v848 = vpack.c.b16 %v844, %v844
      %v849 = vpack.c.b16 %v845, %v845
      %850 = vrot.lane.b32.xlu0 %v846, 64
      %v851 = vpop.permute.xlu0 %850
      %852 = vrot.lane.b32.xlu0 %v847, 64
      %v853 = vpop.permute.xlu0 %852
      %854 = vrot.lane.b32.xlu0 %v848, 64
      %v855 = vpop.permute.xlu0 %854
      %856 = vrot.lane.b32.xlu0 %v849, 64
      %v857 = vpop.permute.xlu0 %856
      %vm862 = vcmask 781824
      %863 = vst.msk [vmem:[%s116] sm:$0xf] %vm862, %v851
      %864 = vst.msk [vmem:[%s116 + $0x4] sm:$0xf] %vm862, %v853
      %865 = vst.msk [vmem:[%s116 + $0x8] sm:$0xf] %vm862, %v855
      %866 = vst.msk [vmem:[%s116 + $0xc] sm:$0xf] %vm862, %v857
      %v867 = vld [vmem:[%s111] sm:$0xf]
      %v868 = vld [vmem:[%s111 + $0xc] sm:$0xf]
      %v869 = vld [vmem:[%s111 + $0x18] sm:$0xf]
      %v870 = vld [vmem:[%s111 + $0x24] sm:$0xf]
      %v871 = vld [vmem:[%s111 + $0x4] sm:$0xf]
      %v872 = vld [vmem:[%s111 + $0x10] sm:$0xf]
      %v873 = vld [vmem:[%s111 + $0x1c] sm:$0xf]
      %v874 = vld [vmem:[%s111 + $0x28] sm:$0xf]
      %v875 = vld [vmem:[%s111 + $0x8] sm:$0xf]
      %v876 = vld [vmem:[%s111 + $0x14] sm:$0xf]
      %v877 = vld [vmem:[%s111 + $0x20] sm:$0xf]
      %v878 = vld [vmem:[%s111 + $0x2c] sm:$0xf]
      %v883 = vunpack.c.l.b16 %v867
      %v884 = vunpack.c.l.b16 %v868
      %v885 = vunpack.c.l.b16 %v869
      %v886 = vunpack.c.l.b16 %v870
      %v887 = vpack.c.b16 %v884, %v883
      %v888 = vpack.c.b16 %v886, %v885
      %889 = vrot.lane.b32.xlu0 %v887, 32
      %v890 = vpop.permute.xlu0 %889
      %891 = vrot.lane.b32.xlu0 %v888, 32
      %v892 = vpop.permute.xlu0 %891
      %v897 = vunpack.c.l.b16 %v871
      %v898 = vunpack.c.l.b16 %v872
      %v899 = vunpack.c.l.b16 %v873
      %v900 = vunpack.c.l.b16 %v874
      %v901 = vpack.c.b16 %v898, %v897
      %v902 = vpack.c.b16 %v900, %v899
      %903 = vrot.lane.b32.xlu0 %v901, 32
      %v904 = vpop.permute.xlu0 %903
      %905 = vrot.lane.b32.xlu0 %v902, 32
      %v906 = vpop.permute.xlu0 %905
      %v908 = vsel %vm150, %v890, 0
      %v911 = vsel %vm150, %v892, 0
      %v914 = vsel %vm150, %v904, 0
      %v917 = vsel %vm150, %v906, 0
      %919 = vmatprep.subr.bf16.mxu0 0
      %920 = vmatpush1.bf16.xpose.msra.mxu0 %v914
      %921 = vmatprep.subr.bf16.mxu0 0
      %922 = vmatpush1.bf16.xpose.msra.mxu0 %v917
      %923 = vmatprep.subr.bf16.mxu0 0
      %924 = vmatpush1.bf16.xpose.msra.mxu0 0
      %925 = vmatprep.subr.bf16.mxu0 0
      %926 = vmatpush1.bf16.xpose.msra.mxu0 0
      %927 = vmatprep.subr.bf16.mxu0 0
      %928 = vmatpush1.bf16.xpose.msra.mxu0 0
      %929 = vmatprep.subr.bf16.mxu0 0
      %930 = vmatpush1.bf16.xpose.msra.mxu0 0
      %931 = vmatprep.subr.bf16.mxu0 0
      %932 = vmatpush1.bf16.xpose.msra.mxu0 0
      %933 = vmatprep.subr.bf16.mxu0 0
      %934 = vmatpush1.bf16.xpose.msra.mxu0 0
      %935 = vmatprep.subr.bf16.mxu0 0
      %936 = vmatpush1.bf16.xpose.msra.mxu0 0
      %937 = vmatprep.subr.bf16.mxu0 0
      %938 = vmatpush1.bf16.xpose.msra.mxu0 0
      %939 = vmatprep.subr.bf16.mxu0 0
      %940 = vmatpush1.bf16.xpose.msra.mxu0 0
      %941 = vmatprep.subr.bf16.mxu0 0
      %942 = vmatpush1.bf16.xpose.msra.mxu0 0
      %943 = vmatprep.subr.bf16.mxu0 0
      %944 = vmatpush1.bf16.xpose.msra.mxu0 0
      %945 = vmatprep.subr.bf16.mxu0 0
      %946 = vmatpush1.bf16.xpose.msra.mxu0 0
      %947 = vmatprep.subr.bf16.mxu0 0
      %948 = vmatpush1.bf16.xpose.msra.mxu0 0
      %949 = vmatprep.subr.bf16.mxu0 0
      %950 = vmatpush1.bf16.xpose.msra.mxu0 0
      %951 = vmatprep.mubr.bf16.mxu0 0
      %952 = vmatmul.mubr.bf16.gmra.mrb[0].mxu0 %v908
      %v953 = vpop.f32.mrb[0].mxu0
      %v954 = vadd.f32 0.0, %v953
      %v955 = vpop.f32.mrb[0].mxu0
      %v956 = vpop.f32.mrb[0].mxu0
      %v957 = vadd.f32 0.0, %v956
      %v958 = vpop.f32.mrb[0].mxu0
      %959 = vmatprep.mubr.bf16.mxu0 0
      %960 = vmatmul.mubr.bf16.gmra.mrb[0].mxu0 %v911
      %v961 = vpop.f32.mrb[0].mxu0
      %v962 = vadd.f32 0.0, %v961
      %v963 = vpop.f32.mrb[0].mxu0
      %v964 = vpop.f32.mrb[0].mxu0
      %v965 = vadd.f32 0.0, %v964
      %v966 = vpop.f32.mrb[0].mxu0
      %967 = vdwg.mxu0
      %v968 = vmul.f32 %v954, 5.656854
      %v969 = vmul.f32 %v957, 5.656854
      %v970 = vmul.f32 %v962, 5.656854
      %v971 = vmul.f32 %v965, 5.656854
      %v972 = vsel %vm218, %v968, -1e+30
      %v973 = vsel %vm218, %v969, -1e+30
      %v974 = vsel %vm218, %v970, -1e+30
      %v975 = vsel %vm218, %v971, -1e+30
      %v976 = vsel %vm150, %v972, -inf
      %977 = vmax.xlane.f32.xlu0 %v976
      %v978 = vpop.xlane.xlu0 %977
      %v979 = vsel %vm150, %v973, -inf
      %980 = vmax.xlane.f32.xlu0 %v979
      %v981 = vpop.xlane.xlu0 %980
      %v982 = vsel %vm150, %v974, -inf
      %983 = vmax.xlane.f32.xlu0 %v982
      %v984 = vpop.xlane.xlu0 %983
      %v985 = vsel %vm150, %v975, -inf
      %986 = vmax.xlane.f32.xlu0 %v985
      %v987 = vpop.xlane.xlu0 %986
      %v988 = vsub.f32 %v972, %v978
      %v989 = vsub.f32 %v973, %v981
      %v990 = vsub.f32 %v974, %v984
      %v991 = vsub.f32 %v975, %v987
      %v992 = vmul.f32 %v988, 1.442695
      %v993 = vpow.pop %v992
      %v994 = vmul.f32 %v989, 1.442695
      %v995 = vpow.pop %v994
      %v996 = vmul.f32 %v990, 1.442695
      %v997 = vpow.pop %v996
      %v998 = vmul.f32 %v991, 1.442695
      %v999 = vpow.pop %v998
      %v1000 = vsel %vm150, %v993, 0.0
      %1001 = vadd.xlane.f32.xlu0 %v1000
      %v1002 = vpop.xlane.xlu0 %1001
      %v1003 = vsel %vm150, %v995, 0.0
      %1004 = vadd.xlane.f32.xlu0 %v1003
      %v1005 = vpop.xlane.xlu0 %1004
      %v1006 = vsel %vm150, %v997, 0.0
      %1007 = vadd.xlane.f32.xlu0 %v1006
      %v1008 = vpop.xlane.xlu0 %1007
      %v1009 = vsel %vm150, %v999, 0.0
      %1010 = vadd.xlane.f32.xlu0 %v1009
      %v1011 = vpop.xlane.xlu0 %1010
      %v1012 = vrcp.pop %v1002
      %v1013 = vrcp.pop %v1005
      %v1014 = vrcp.pop %v1008
      %v1015 = vrcp.pop %v1011
      %v1016 = vmul.f32 %v993, %v1012
      %v1017 = vmul.f32 %v995, %v1013
      %v1018 = vmul.f32 %v997, %v1014
      %v1019 = vmul.f32 %v999, %v1015
      %v1020 = vpack.c.bf16 %v1017, %v1016
      %v1021 = vpack.c.bf16 %v1019, %v1018
      %v1026 = vunpack.c.l.b16 %v875
      %v1027 = vunpack.c.l.b16 %v876
      %v1028 = vunpack.c.l.b16 %v877
      %v1029 = vunpack.c.l.b16 %v878
      %v1030 = vpack.c.b16 %v1027, %v1026
      %v1031 = vpack.c.b16 %v1029, %v1028
      %1032 = vrot.lane.b32.xlu0 %v1030, 32
      %v1033 = vpop.permute.xlu0 %1032
      %1034 = vrot.lane.b32.xlu0 %v1031, 32
      %v1035 = vpop.permute.xlu0 %1034
      %v1039 = vsel %vm150, %v1020, 0
      %v1042 = vsel %vm150, %v1021, 0
      %1044 = vmatprep.subr.bf16.mxu0 0
      %1045 = vmatpush1.bf16.msra.mxu0 %v1033
      %1046 = vmatprep.subr.bf16.mxu0 0
      %1047 = vmatpush1.bf16.msra.mxu0 %v1035
      %1048 = vmatprep.subr.bf16.mxu0 0
      %1049 = vmatpush1.bf16.msra.mxu0 0
      %1050 = vmatprep.subr.bf16.mxu0 0
      %1051 = vmatpush1.bf16.msra.mxu0 0
      %1052 = vmatprep.subr.bf16.mxu0 0
      %1053 = vmatpush1.bf16.msra.mxu0 0
      %1054 = vmatprep.subr.bf16.mxu0 0
      %1055 = vmatpush1.bf16.msra.mxu0 0
      %1056 = vmatprep.subr.bf16.mxu0 0
      %1057 = vmatpush1.bf16.msra.mxu0 0
      %1058 = vmatprep.subr.bf16.mxu0 0
      %1059 = vmatpush1.bf16.msra.mxu0 0
      %1060 = vmatprep.subr.bf16.mxu0 0
      %1061 = vmatpush1.bf16.msra.mxu0 0
      %1062 = vmatprep.subr.bf16.mxu0 0
      %1063 = vmatpush1.bf16.msra.mxu0 0
      %1064 = vmatprep.subr.bf16.mxu0 0
      %1065 = vmatpush1.bf16.msra.mxu0 0
      %1066 = vmatprep.subr.bf16.mxu0 0
      %1067 = vmatpush1.bf16.msra.mxu0 0
      %1068 = vmatprep.subr.bf16.mxu0 0
      %1069 = vmatpush1.bf16.msra.mxu0 0
      %1070 = vmatprep.subr.bf16.mxu0 0
      %1071 = vmatpush1.bf16.msra.mxu0 0
      %1072 = vmatprep.subr.bf16.mxu0 0
      %1073 = vmatpush1.bf16.msra.mxu0 0
      %1074 = vmatprep.subr.bf16.mxu0 0
      %1075 = vmatpush1.bf16.msra.mxu0 0
      %1076 = vmatprep.mubr.bf16.mxu0 0
      %1077 = vmatmul.mubr.bf16.gmra.mrb[0].mxu0 %v1039
      %v1078 = vpop.f32.mrb[0].mxu0
      %v1079 = vadd.f32 0.0, %v1078
      %v1080 = vpop.f32.mrb[0].mxu0
      %v1081 = vpop.f32.mrb[0].mxu0
      %v1082 = vadd.f32 0.0, %v1081
      %v1083 = vpop.f32.mrb[0].mxu0
      %1084 = vmatprep.mubr.bf16.mxu0 0
      %1085 = vmatmul.mubr.bf16.gmra.mrb[0].mxu0 %v1042
      %v1086 = vpop.f32.mrb[0].mxu0
      %v1087 = vadd.f32 0.0, %v1086
      %v1088 = vpop.f32.mrb[0].mxu0
      %v1089 = vpop.f32.mrb[0].mxu0
      %v1090 = vadd.f32 0.0, %v1089
      %v1091 = vpop.f32.mrb[0].mxu0
      %1092 = vdwg.mxu0
      %v1093 = vpack.c.bf16 %v1082, %v1079
      %v1094 = vpack.c.bf16 %v1090, %v1087
      %v1097 = vunpack.c.l.b16 %v1093
      %v1098 = vunpack.c.h.b16 %v1093
      %v1099 = vunpack.c.l.b16 %v1094
      %v1100 = vunpack.c.h.b16 %v1094
      %v1101 = vpack.c.b16 %v1097, %v1097
      %v1102 = vpack.c.b16 %v1098, %v1098
      %v1103 = vpack.c.b16 %v1099, %v1099
      %v1104 = vpack.c.b16 %v1100, %v1100
      %1105 = vrot.lane.b32.xlu0 %v1101, 96
      %v1106 = vpop.permute.xlu0 %1105
      %1107 = vrot.lane.b32.xlu0 %v1102, 96
      %v1108 = vpop.permute.xlu0 %1107
      %1109 = vrot.lane.b32.xlu0 %v1103, 96
      %v1110 = vpop.permute.xlu0 %1109
      %1111 = vrot.lane.b32.xlu0 %v1104, 96
      %v1112 = vpop.permute.xlu0 %1111
      %vm1117 = vcmask 1044224
      %1118 = vst.msk [vmem:[%s116] sm:$0xf] %vm1117, %v1106
      %1119 = vst.msk [vmem:[%s116 + $0x4] sm:$0xf] %vm1117, %v1108
      %1120 = vst.msk [vmem:[%s116 + $0x8] sm:$0xf] %vm1117, %v1110
      %1121 = vst.msk [vmem:[%s116 + $0xc] sm:$0xf] %vm1117, %v1112
      %p1122 = scmp.lt.s32.totalorder %s12, 1
      %s1123 = scalar_select %p1122, %s12, 1
      %s1124 = smul.addr %s1123, 4
      %s1125 = smul.addr %s1124, 4
      %s1126 = scalar_lea.vmem %s1, %s1125
      // Predicated region
      $region25: #{vit_forward.14} parent=23 // pred_check
        %p1127 = pneg %p56
      $region26: #{vit_forward.14} parent=23 // pred_check_branch
        %1129 = sbr.rel (%p1127) target = $region28
      $region27: #{vit_forward.14} parent=23 // pred_region
        _
      $region28: #{vit_forward.14} parent=23 // pred_fallthru
        _
    $region24: #{vit_forward.14} parent=5 // pred_fallthru
      _
    %p1130 = scmp.le.s32.totalorder 2, %s7
    // Predicated region
    $region29: #{vit_forward.14} parent=5 // pred_check
      %p1131 = pneg %p1130
    $region30: #{vit_forward.14} parent=5 // pred_check_branch
      %1133 = sbr.rel (%p1131) target = $region32
    $region31: #{vit_forward.14} parent=5 // pred_region
      %s1134 = ssub.s32 %s7, 2
      // Predicated region
      $region33: #{vit_forward.14} parent=31 // pred_check
        %p1135 = pneg %p62
      $region34: #{vit_forward.14} parent=31 // pred_check_branch
        %1137 = sbr.rel (%p1135) target = $region36
      $region35: #{vit_forward.14} parent=31 // pred_region
        %p1138 = scmp.lt.s32.totalorder %s13, 1
        %s1139 = scalar_select %p1138, %s13, 1
        %s1140 = smul.addr %s1139, 4
        %s1141 = smul.addr %s1140, 4
        %s1142 = scalar_lea.vmem %s1, %s1141
      $region36: #{vit_forward.14} parent=31 // pred_fallthru
        _
    $region32: #{vit_forward.14} parent=5 // pred_fallthru
      _
  $region6: #{vit_forward.14} parent=0 // loop_footer
    %s11 = sadd.s32 1, %s7
  $region7: #{vit_forward.14} parent=0 // loop_footer_branch
    %6 = sbr.rel target = $region3
  $region8: #{vit_forward.14} parent=0 // loop_exit
    _

// kernel: vit_forward.16
$region0: #{vit_forward.16}
  #allocation0 [shape = 'u32[]', space=smem, size = 0x4, offset = 0x4, fixed_abs, tag = 'smem constant byte address 0x4 - core index']
  #allocation1 [shape = 'u32[144,128]{1,0:T(1,128)}', space=vmem, size = 0x12000, scoped, tag = 'internal scratch']
  %s0 = inlined_call_operand.vmem [shape: bf16[64,128], index: 0, kind: input, shape index: {}]
  %s1 = inlined_call_operand.vmem [shape: bf16[128,256], index: 1, kind: input, shape index: {}]
  %s2 = inlined_call_operand.vmem [shape: f32[1,256], index: 2, kind: input, shape index: {}]
  %s3 = inlined_call_operand.vmem [shape: bf16[64,256], index: 3, kind: output, shape index: {}]
  %s4 = sld [smem:[#allocation0]]
  $region45: #{vit_forward.16} parent=0
    _
  %s6 = ssub.s32 1, %s4
  %s7 = scalar_select 0, %s6, %s4
  loop: start=0, step=1, limit=4
  $region2: #{vit_forward.16} parent=0 // loop_pre_header
    _
  $region3: #{vit_forward.16} parent=0 // loop_header
    %s9 = sphi 0, %s13
    %p10 = scmp.ge.s32.totalorder %s9, 4
    %s16 = sphi 0, %s28
    %s17 = sphi 0, %s24
    %s18 = sphi 0, %s16
    %s19 = sphi 0, %s17
    %s20 = sphi 0, %s18
    %s21 = sphi 0, %s19
    %s31 = sphi 0, %s33
    %s34 = sphi 0, %s31
    %s35 = sphi 0, %s34
    %s51 = sphi 0, %s35
    %s57 = sphi 0, %s59
    %s60 = sphi 0, %s57
    %s61 = sphi 0, %s60
    %s77 = sphi 0, %s61
    %s83 = sphi 0, %s85
    %s86 = sphi 0, %s83
    %s87 = sphi 0, %s86
    %s103 = sphi 0, %s87
    %s111 = sphi 0, %s113
    %s114 = sphi 0, %s111
    %s115 = sphi 0, %s114
    %s131 = sphi 0, %s115
  $region4: #{vit_forward.16} parent=0 // loop_header_branch
    %12 = sbr.rel (%p10) target = $region8
  $region5: #{vit_forward.16} parent=0 // loop_body
    %s14 = ssub.s32 %s9, 1
    %s15 = ssub.s32 %s9, 2
    %s22 = sadd.s32 1, %s17
    %p23 = scmp.ge.s32.totalorder %s22, 1
    %s24 = scalar_select %p23, 0, %s22
    %s25 = sadd.s32 1, %s16
    %s26 = scalar_select %p23, %s25, %s16
    %p27 = scmp.ge.s32.totalorder %s26, 2
    %s28 = scalar_select %p27, 0, %s26
    %s29 = ssub.s32 %s16, %s28
    %p30 = scmp.eq.s32.totalorder %s29, 0
    %s32 = sadd.s32 %s31, 1
    %s33 = scalar_select %p30, %s31, %s32
    %p36 = pneg %p30
    %p37 = scmp.eq.s32.totalorder %s9, 1
    %p38 = por %p36, %p37
    %p39 = scmp.ne.s32.totalorder %s31, %s34
    %p40 = scmp.eq.s32.totalorder %s9, 0
    %p41 = por %p39, %p40
    %p42 = scmp.ne.s32.totalorder %s31, %s34
    %p43 = scmp.eq.s32.totalorder %s14, 1
    %p44 = por %p42, %p43
    %p45 = scmp.ne.s32.totalorder %s34, %s35
    %p46 = scmp.eq.s32.totalorder %s14, 0
    %p47 = por %p45, %p46
    %p48 = scmp.ne.s32.totalorder %s34, %s35
    %p49 = scmp.eq.s32.totalorder %s15, 1
    %p50 = por %p48, %p49
    %p52 = scmp.ne.s32.totalorder %s35, %s51
    %p53 = scmp.eq.s32.totalorder %s15, 0
    %p54 = por %p52, %p53
    %s55 = ssub.s32 %s17, %s24
    %p56 = scmp.eq.s32.totalorder %s55, 0
    %s58 = sadd.s32 %s57, 1
    %s59 = scalar_select %p56, %s57, %s58
    %p62 = pneg %p56
    %p63 = scmp.eq.s32.totalorder %s9, 1
    %p64 = por %p62, %p63
    %p65 = scmp.ne.s32.totalorder %s57, %s60
    %p66 = scmp.eq.s32.totalorder %s9, 0
    %p67 = por %p65, %p66
    %p68 = scmp.ne.s32.totalorder %s57, %s60
    %p69 = scmp.eq.s32.totalorder %s14, 1
    %p70 = por %p68, %p69
    %p71 = scmp.ne.s32.totalorder %s60, %s61
    %p72 = scmp.eq.s32.totalorder %s14, 0
    %p73 = por %p71, %p72
    %p74 = scmp.ne.s32.totalorder %s60, %s61
    %p75 = scmp.eq.s32.totalorder %s15, 1
    %p76 = por %p74, %p75
    %p78 = scmp.ne.s32.totalorder %s61, %s77
    %p79 = scmp.eq.s32.totalorder %s15, 0
    %p80 = por %p78, %p79
    %s81 = ssub.s32 %s17, %s24
    %p82 = scmp.eq.s32.totalorder %s81, 0
    %s84 = sadd.s32 %s83, 1
    %s85 = scalar_select %p82, %s83, %s84
    %p88 = pneg %p82
    %p89 = scmp.eq.s32.totalorder %s9, 1
    %p90 = por %p88, %p89
    %p91 = scmp.ne.s32.totalorder %s83, %s86
    %p92 = scmp.eq.s32.totalorder %s9, 0
    %p93 = por %p91, %p92
    %p94 = scmp.ne.s32.totalorder %s83, %s86
    %p95 = scmp.eq.s32.totalorder %s14, 1
    %p96 = por %p94, %p95
    %p97 = scmp.ne.s32.totalorder %s86, %s87
    %p98 = scmp.eq.s32.totalorder %s14, 0
    %p99 = por %p97, %p98
    %p100 = scmp.ne.s32.totalorder %s86, %s87
    %p101 = scmp.eq.s32.totalorder %s15, 1
    %p102 = por %p100, %p101
    %p104 = scmp.ne.s32.totalorder %s87, %s103
    %p105 = scmp.eq.s32.totalorder %s15, 0
    %p106 = por %p104, %p105
    %s107 = ssub.s32 %s16, %s28
    %s108 = ssub.s32 %s17, %s24
    %s109 = sor.u32 %s107, %s108
    %p110 = scmp.eq.s32.totalorder %s109, 0
    %s112 = sadd.s32 %s111, 1
    %s113 = scalar_select %p110, %s111, %s112
    %p116 = pneg %p110
    %p117 = scmp.eq.s32.totalorder %s9, 1
    %p118 = por %p116, %p117
    %p119 = scmp.ne.s32.totalorder %s111, %s114
    %p120 = scmp.eq.s32.totalorder %s9, 0
    %p121 = por %p119, %p120
    %p122 = scmp.ne.s32.totalorder %s111, %s114
    %p123 = scmp.eq.s32.totalorder %s14, 1
    %p124 = por %p122, %p123
    %p125 = scmp.ne.s32.totalorder %s114, %s115
    %p126 = scmp.eq.s32.totalorder %s14, 0
    %p127 = por %p125, %p126
    %p128 = scmp.ne.s32.totalorder %s114, %s115
    %p129 = scmp.eq.s32.totalorder %s15, 1
    %p130 = por %p128, %p129
    %p132 = scmp.ne.s32.totalorder %s115, %s131
    %p133 = scmp.eq.s32.totalorder %s15, 0
    %p134 = por %p132, %p133
    %p135 = scmp.le.s32.totalorder 1, %s9
    %p136 = scmp.lt.s32.totalorder %s9, 3
    %p137 = pnand %p135, %p136
    %p138 = pneg %p137
    // Predicated region
    $region9: #{vit_forward.16} parent=5 // pred_check
      _
    $region10: #{vit_forward.16} parent=5 // pred_check_branch
      %140 = sbr.rel (%p137) target = $region12
    $region11: #{vit_forward.16} parent=5 // pred_region
      %s141 = ssub.s32 %s9, 1
      // Predicated region
      $region13: #{vit_forward.16} parent=11 // pred_check
        %p142 = pneg %p73
      $region14: #{vit_forward.16} parent=11 // pred_check_branch
        %144 = sbr.rel (%p142) target = $region16
      $region15: #{vit_forward.16} parent=11 // pred_region
        %s145 = smul.u32 2, %s19
        %p146 = scmp.lt.s32.totalorder %s145, 1
        %s147 = scalar_select %p146, %s145, 1
        %s148 = smul.addr %s147, 4
        %s149 = scalar_lea.vmem %s1, %s148
        %s150 = smul.u32 2, %s19
      $region16: #{vit_forward.16} parent=11 // pred_fallthru
        _
      // Predicated region
      $region17: #{vit_forward.16} parent=11 // pred_check
        %p151 = pneg %p99
      $region18: #{vit_forward.16} parent=11 // pred_check_branch
        %153 = sbr.rel (%p151) target = $region20
      $region19: #{vit_forward.16} parent=11 // pred_region
        %s154 = smul.u32 2, %s19
        %p155 = scmp.lt.s32.totalorder %s154, 1
        %s156 = scalar_select %p155, %s154, 1
        %s157 = scalar_lea.vmem %s2, %s156
        %s158 = smul.u32 2, %s19
      $region20: #{vit_forward.16} parent=11 // pred_fallthru
        _
    $region12: #{vit_forward.16} parent=5 // pred_fallthru
      _
    %p159 = scmp.lt.s32.totalorder %s9, 2
    // Predicated region
    $region21: #{vit_forward.16} parent=5 // pred_check
      %p160 = pneg %p159
    $region22: #{vit_forward.16} parent=5 // pred_check_branch
      %162 = sbr.rel (%p160) target = $region24
    $region23: #{vit_forward.16} parent=5 // pred_region
      // Predicated region
      $region25: #{vit_forward.16} parent=23 // pred_check
        %p163 = pneg %p41
      $region26: #{vit_forward.16} parent=23 // pred_check_branch
        %165 = sbr.rel (%p163) target = $region28
      $region27: #{vit_forward.16} parent=23 // pred_region
        %s166 = smul.u32 4, %s16
        %p167 = scmp.lt.s32.totalorder %s166, 7
        %s168 = scalar_select %p167, %s166, 7
        %s169 = smul.addr %s168, 4
        %s170 = scalar_lea.vmem %s0, %s169
        %s171 = smul.u32 4, %s16
      $region28: #{vit_forward.16} parent=23 // pred_fallthru
        _
    $region24: #{vit_forward.16} parent=5 // pred_fallthru
      _
    %p172 = scmp.le.s32.totalorder 1, %s9
    %p173 = scmp.lt.s32.totalorder %s9, 3
    %p174 = pnand %p172, %p173
    %p175 = pneg %p174
    // Predicated region
    $region29: #{vit_forward.16} parent=5 // pred_check
      _
    $region30: #{vit_forward.16} parent=5 // pred_check_branch
      %177 = sbr.rel (%p174) target = $region32
    $region31: #{vit_forward.16} parent=5 // pred_region
      %s178 = ssub.s32 %s9, 1
      %s179 = smul.u32 4, %s18
      %p180 = scmp.lt.s32.totalorder %s179, 7
      %s181 = scalar_select %p180, %s179, 7
      %s182 = smul.addr %s181, 4
      %s183 = scalar_lea.vmem %s0, %s182
      %p184 = pneg %p47
      %p185 = pneg %p44
      %s186 = smul.u32 2, %s19
      %p187 = scmp.lt.s32.totalorder %s186, 1
      %s188 = scalar_select %p187, %s186, 1
      %s189 = smul.addr %s188, 4
      %s190 = scalar_lea.vmem %s1, %s189
      %p191 = pneg %p73
      %p192 = pneg %p70
      %s193 = smul.u32 2, %s19
      %p194 = scmp.lt.s32.totalorder %s193, 1
      %s195 = scalar_select %p194, %s193, 1
      %s196 = scalar_lea.vmem %s2, %s195
      %p197 = pneg %p99
      %p198 = pneg %p96
      %p199 = pneg %p127
      %p200 = pneg %p124
      %s201 = smul.u32 4, %s18
      %s202 = smul.u32 2, %s19
      %p203 = scmp.lt.s32.totalorder %s201, 7
      %s204 = scalar_select %p203, %s201, 7
      %p205 = scmp.lt.s32.totalorder %s202, 1
      %s206 = scalar_select %p205, %s202, 1
      %s207 = smul.addr %s204, 2
      %s208 = sadd.s32 %s206, %s207
      %s209 = smul.addr %s208, 4
      %s210 = scalar_lea.vmem %s3, %s209
      %s211 = smul.u32 4, %s18
      %p212 = scmp.lt.s32.totalorder %s211, 7
      %s213 = scalar_select %p212, %s211, 7
      %s214 = smul.addr %s213, 4
      %s215 = scalar_lea.vmem %s0, %s214
      %s216 = smul.u32 4, %s18
      %s217 = smul.u32 2, %s19
      %p218 = scmp.lt.s32.totalorder %s217, 1
      %s219 = scalar_select %p218, %s217, 1
      %s220 = smul.addr %s219, 4
      %s221 = scalar_lea.vmem %s1, %s220
      %s222 = smul.u32 2, %s19
      %s223 = smul.u32 2, %s19
      %p224 = scmp.lt.s32.totalorder %s223, 1
      %s225 = scalar_select %p224, %s223, 1
      %s226 = scalar_lea.vmem %s2, %s225
      %s227 = smul.u32 2, %s19
      %s228 = smul.u32 4, %s18
      %s229 = smul.u32 2, %s19
      %p230 = scmp.lt.s32.totalorder %s228, 7
      %s231 = scalar_select %p230, %s228, 7
      %p232 = scmp.lt.s32.totalorder %s229, 1
      %s233 = scalar_select %p232, %s229, 1
      %s234 = smul.addr %s231, 2
      %s235 = sadd.s32 %s233, %s234
      %s236 = smul.addr %s235, 4
      %s237 = scalar_lea.vmem %s3, %s236
      %s238 = smul.u32 4, %s18
      %s239 = smul.u32 2, %s19
      %v241 = vld [vmem:[%s215] sm:$0xf]
      %v242 = vld [vmem:[%s215 + $0x4] sm:$0xf]
      %v243 = vld [vmem:[%s215 + $0x8] sm:$0xf]
      %v244 = vld [vmem:[%s215 + $0xc] sm:$0xf]
      %v245 = vld [vmem:[%s221] sm:$0xff]
      %v246 = vld [vmem:[%s221 + $0x8] sm:$0xff]
      %v247 = vld [vmem:[%s221 + $0x10] sm:$0xff]
      %v248 = vld [vmem:[%s221 + $0x18] sm:$0xff]
      %v249 = vld [vmem:[%s221 + $0x20] sm:$0xff]
      %v250 = vld [vmem:[%s221 + $0x28] sm:$0xff]
      %v251 = vld [vmem:[%s221 + $0x30] sm:$0xff]
      %v252 = vld [vmem:[%s221 + $0x38] sm:$0xff]
      %v253 = vld [vmem:[%s221 + $0x40] sm:$0xff]
      %v254 = vld [vmem:[%s221 + $0x48] sm:$0xff]
      %v255 = vld [vmem:[%s221 + $0x50] sm:$0xff]
      %v256 = vld [vmem:[%s221 + $0x58] sm:$0xff]
      %v257 = vld [vmem:[%s221 + $0x60] sm:$0xff]
      %v258 = vld [vmem:[%s221 + $0x68] sm:$0xff]
      %v259 = vld [vmem:[%s221 + $0x70] sm:$0xff]
      %v260 = vld [vmem:[%s221 + $0x78] sm:$0xff]
      %v261 = vld [vmem:[%s226] sm:$0x3]
      %v263 = vlaneseq
      %v264 = vshrl.u32 %v263, 7
      %v265 = vsub.s32 0, %v264
      %v266 = vrot.slane %v261, %v265
      %v267 = vlaneseq
      %v268 = vshrl.u32 %v267, 7
      %v269 = vsub.s32 1, %v268
      %v270 = vrot.slane %v261, %v269
      %v277 = vunpack.c.l.b16 %v241
      %v278 = vunpack.c.l.b16 %v242
      %v279 = vunpack.c.l.b16 %v243
      %v280 = vunpack.c.l.b16 %v244
      %v281 = vpack.c.b16 %v278, %v277
      %v282 = vpack.c.b16 %v280, %v279
      %v301 = vunpack.c.l.b16 %v245
      %v302 = vunpack.c.h.b16 %v245
      %v303 = vunpack.c.l.b16 %v246
      %v304 = vunpack.c.h.b16 %v246
      %v305 = vunpack.c.l.b16 %v247
      %v306 = vunpack.c.h.b16 %v247
      %v307 = vunpack.c.l.b16 %v248
      %v308 = vunpack.c.h.b16 %v248
      %v309 = vunpack.c.l.b16 %v249
      %v310 = vunpack.c.h.b16 %v249
      %v311 = vunpack.c.l.b16 %v250
      %v312 = vunpack.c.h.b16 %v250
      %v313 = vunpack.c.l.b16 %v251
      %v314 = vunpack.c.h.b16 %v251
      %v315 = vunpack.c.l.b16 %v252
      %v316 = vunpack.c.h.b16 %v252
      %v317 = vunpack.c.l.b16 %v253
      %v318 = vunpack.c.h.b16 %v253
      %v319 = vunpack.c.l.b16 %v254
      %v320 = vunpack.c.h.b16 %v254
      %v321 = vunpack.c.l.b16 %v255
      %v322 = vunpack.c.h.b16 %v255
      %v323 = vunpack.c.l.b16 %v256
      %v324 = vunpack.c.h.b16 %v256
      %v325 = vunpack.c.l.b16 %v257
      %v326 = vunpack.c.h.b16 %v257
      %v327 = vunpack.c.l.b16 %v258
      %v328 = vunpack.c.h.b16 %v258
      %v329 = vunpack.c.l.b16 %v259
      %v330 = vunpack.c.h.b16 %v259
      %v331 = vunpack.c.l.b16 %v260
      %v332 = vunpack.c.h.b16 %v260
      %v333 = vpack.c.b16 %v303, %v301
      %v334 = vpack.c.b16 %v304, %v302
      %v335 = vpack.c.b16 %v307, %v305
      %v336 = vpack.c.b16 %v308, %v306
      %v337 = vpack.c.b16 %v311, %v309
      %v338 = vpack.c.b16 %v312, %v310
      %v339 = vpack.c.b16 %v315, %v313
      %v340 = vpack.c.b16 %v316, %v314
      %v341 = vpack.c.b16 %v319, %v317
      %v342 = vpack.c.b16 %v320, %v318
      %v343 = vpack.c.b16 %v323, %v321
      %v344 = vpack.c.b16 %v324, %v322
      %v345 = vpack.c.b16 %v327, %v325
      %v346 = vpack.c.b16 %v328, %v326
      %v347 = vpack.c.b16 %v331, %v329
      %v348 = vpack.c.b16 %v332, %v330
      %365 = vmatprep.subr.bf16.mxu0 %v334
      %366 = vmatpush1.bf16.msra.mxu0 %v333
      %367 = vmatprep.subr.bf16.mxu0 %v336
      %368 = vmatpush1.bf16.msra.mxu0 %v335
      %369 = vmatprep.subr.bf16.mxu0 %v338
      %370 = vmatpush1.bf16.msra.mxu0 %v337
      %371 = vmatprep.subr.bf16.mxu0 %v340
      %372 = vmatpush1.bf16.msra.mxu0 %v339
      %373 = vmatprep.subr.bf16.mxu0 %v342
      %374 = vmatpush1.bf16.msra.mxu0 %v341
      %375 = vmatprep.subr.bf16.mxu0 %v344
      %376 = vmatpush1.bf16.msra.mxu0 %v343
      %377 = vmatprep.subr.bf16.mxu0 %v346
      %378 = vmatpush1.bf16.msra.mxu0 %v345
      %379 = vmatprep.subr.bf16.mxu0 %v348
      %380 = vmatpush1.bf16.msra.mxu0 %v347
      %381 = vmatprep.subr.bf16.mxu0 0
      %382 = vmatpush1.bf16.msra.mxu0 0
      %383 = vmatprep.subr.bf16.mxu0 0
      %384 = vmatpush1.bf16.msra.mxu0 0
      %385 = vmatprep.subr.bf16.mxu0 0
      %386 = vmatpush1.bf16.msra.mxu0 0
      %387 = vmatprep.subr.bf16.mxu0 0
      %388 = vmatpush1.bf16.msra.mxu0 0
      %389 = vmatprep.subr.bf16.mxu0 0
      %390 = vmatpush1.bf16.msra.mxu0 0
      %391 = vmatprep.subr.bf16.mxu0 0
      %392 = vmatpush1.bf16.msra.mxu0 0
      %393 = vmatprep.subr.bf16.mxu0 0
      %394 = vmatpush1.bf16.msra.mxu0 0
      %395 = vmatprep.subr.bf16.mxu0 0
      %396 = vmatpush1.bf16.msra.mxu0 0
      %397 = vmatprep.mubr.bf16.mxu0 0
      %398 = vmatmul.mubr.bf16.gmra.mrb[0].mxu0 %v281
      %v399 = vpop.f32.mrb[0].mxu0
      %v400 = vadd.f32 %v266, %v399
      %v401 = vpop.f32.mrb[0].mxu0
      %v402 = vadd.f32 %v270, %v401
      %v403 = vpop.f32.mrb[0].mxu0
      %v404 = vadd.f32 %v266, %v403
      %v405 = vpop.f32.mrb[0].mxu0
      %v406 = vadd.f32 %v270, %v405
      %407 = vmatprep.mubr.bf16.mxu0 0
      %408 = vmatmul.mubr.bf16.gmra.mrb[0].mxu0 %v282
      %v409 = vpop.f32.mrb[0].mxu0
      %v410 = vadd.f32 %v266, %v409
      %v411 = vpop.f32.mrb[0].mxu0
      %v412 = vadd.f32 %v270, %v411
      %v413 = vpop.f32.mrb[0].mxu0
      %v414 = vadd.f32 %v266, %v413
      %v415 = vpop.f32.mrb[0].mxu0
      %v416 = vadd.f32 %v270, %v415
      %417 = vdwg.mxu0
      %v418 = vmul.f32 %v400, 0.5
      %v419 = vmul.f32 %v402, 0.5
      %v420 = vmul.f32 %v404, 0.5
      %v421 = vmul.f32 %v406, 0.5
      %v422 = vmul.f32 %v410, 0.5
      %v423 = vmul.f32 %v412, 0.5
      %v424 = vmul.f32 %v414, 0.5
      %v425 = vmul.f32 %v416, 0.5
      %v426 = vmul.f32 %v400, 0.044715
      %v427 = vmul.f32 %v402, 0.044715
      %v428 = vmul.f32 %v404, 0.044715
      %v429 = vmul.f32 %v406, 0.044715
      %v430 = vmul.f32 %v410, 0.044715
      %v431 = vmul.f32 %v412, 0.044715
      %v432 = vmul.f32 %v414, 0.044715
      %v433 = vmul.f32 %v416, 0.044715
      %v434 = vmul.f32 %v426, %v400
      %v435 = vmul.f32 %v427, %v402
      %v436 = vmul.f32 %v428, %v404
      %v437 = vmul.f32 %v429, %v406
      %v438 = vmul.f32 %v430, %v410
      %v439 = vmul.f32 %v431, %v412
      %v440 = vmul.f32 %v432, %v414
      %v441 = vmul.f32 %v433, %v416
      %v442 = vmul.f32 %v434, %v400
      %v443 = vmul.f32 %v435, %v402
      %v444 = vmul.f32 %v436, %v404
      %v445 = vmul.f32 %v437, %v406
      %v446 = vmul.f32 %v438, %v410
      %v447 = vmul.f32 %v439, %v412
      %v448 = vmul.f32 %v440, %v414
      %v449 = vmul.f32 %v441, %v416
      %v450 = vadd.f32 %v400, %v442
      %v451 = vadd.f32 %v402, %v443
      %v452 = vadd.f32 %v404, %v444
      %v453 = vadd.f32 %v406, %v445
      %v454 = vadd.f32 %v410, %v446
      %v455 = vadd.f32 %v412, %v447
      %v456 = vadd.f32 %v414, %v448
      %v457 = vadd.f32 %v416, %v449
      %v458 = vmul.f32 %v450, 0.7978846
      %v459 = vmul.f32 %v451, 0.7978846
      %v460 = vmul.f32 %v452, 0.7978846
      %v461 = vmul.f32 %v453, 0.7978846
      %v462 = vmul.f32 %v454, 0.7978846
      %v463 = vmul.f32 %v455, 0.7978846
      %v464 = vmul.f32 %v456, 0.7978846
      %v465 = vmul.f32 %v457, 0.7978846
      %v466 = vtanh.pop %v458
      %v467 = vtanh.pop %v459
      %v468 = vtanh.pop %v460
      %v469 = vtanh.pop %v461
      %v470 = vtanh.pop %v462
      %v471 = vtanh.pop %v463
      %v472 = vtanh.pop %v464
      %v473 = vtanh.pop %v465
      %v474 = vadd.f32 %v466, 1.0
      %v475 = vadd.f32 %v467, 1.0
      %v476 = vadd.f32 %v468, 1.0
      %v477 = vadd.f32 %v469, 1.0
      %v478 = vadd.f32 %v470, 1.0
      %v479 = vadd.f32 %v471, 1.0
      %v480 = vadd.f32 %v472, 1.0
      %v481 = vadd.f32 %v473, 1.0
      %v482 = vmul.f32 %v418, %v474
      %v483 = vmul.f32 %v419, %v475
      %v484 = vmul.f32 %v420, %v476
      %v485 = vmul.f32 %v421, %v477
      %v486 = vmul.f32 %v422, %v478
      %v487 = vmul.f32 %v423, %v479
      %v488 = vmul.f32 %v424, %v480
      %v489 = vmul.f32 %v425, %v481
      %v490 = vpack.c.bf16 %v484, %v482
      %v491 = vpack.c.bf16 %v485, %v483
      %v492 = vpack.c.bf16 %v488, %v486
      %v493 = vpack.c.bf16 %v489, %v487
      %v498 = vunpack.c.l.b16 %v490
      %v499 = vunpack.c.l.b16 %v491
      %v500 = vunpack.c.h.b16 %v490
      %v501 = vunpack.c.h.b16 %v491
      %v502 = vunpack.c.l.b16 %v492
      %v503 = vunpack.c.l.b16 %v493
      %v504 = vunpack.c.h.b16 %v492
      %v505 = vunpack.c.h.b16 %v493
      %v506 = vpack.c.b16 %v499, %v498
      %v507 = vpack.c.b16 %v501, %v500
      %v508 = vpack.c.b16 %v503, %v502
      %v509 = vpack.c.b16 %v505, %v504
      %514 = vst [vmem:[%s237] sm:$0xff] %v506
      %515 = vst [vmem:[%s237 + $0x8] sm:$0xff] %v507
      %516 = vst [vmem:[%s237 + $0x10] sm:$0xff] %v508
      %517 = vst [vmem:[%s237 + $0x18] sm:$0xff] %v509
      %s518 = smul.u32 4, %s18
      %s519 = smul.u32 2, %s19
      %p520 = scmp.lt.s32.totalorder %s518, 7
      %s521 = scalar_select %p520, %s518, 7
      %p522 = scmp.lt.s32.totalorder %s519, 1
      %s523 = scalar_select %p522, %s519, 1
      %s524 = smul.addr %s521, 2
      %s525 = sadd.s32 %s523, %s524
      %s526 = smul.addr %s525, 4
      %s527 = scalar_lea.vmem %s3, %s526
      // Predicated region
      $region33: #{vit_forward.16} parent=31 // pred_check
        %p528 = pneg %p124
      $region34: #{vit_forward.16} parent=31 // pred_check_branch
        %530 = sbr.rel (%p528) target = $region36
      $region35: #{vit_forward.16} parent=31 // pred_region
        %s531 = smul.u32 4, %s18
        %s532 = smul.u32 2, %s19
      $region36: #{vit_forward.16} parent=31 // pred_fallthru
        _
    $region32: #{vit_forward.16} parent=5 // pred_fallthru
      _
    %p533 = scmp.le.s32.totalorder 2, %s9
    // Predicated region
    $region37: #{vit_forward.16} parent=5 // pred_check
      %p534 = pneg %p533
    $region38: #{vit_forward.16} parent=5 // pred_check_branch
      %536 = sbr.rel (%p534) target = $region40
    $region39: #{vit_forward.16} parent=5 // pred_region
      %s537 = ssub.s32 %s9, 2
      // Predicated region
      $region41: #{vit_forward.16} parent=39 // pred_check
        %p538 = pneg %p130
      $region42: #{vit_forward.16} parent=39 // pred_check_branch
        %540 = sbr.rel (%p538) target = $region44
      $region43: #{vit_forward.16} parent=39 // pred_region
        %s541 = smul.u32 4, %s20
        %s542 = smul.u32 2, %s21
        %p543 = scmp.lt.s32.totalorder %s541, 7
        %s544 = scalar_select %p543, %s541, 7
        %p545 = scmp.lt.s32.totalorder %s542, 1
        %s546 = scalar_select %p545, %s542, 1
        %s547 = smul.addr %s544, 2
        %s548 = sadd.s32 %s546, %s547
        %s549 = smul.addr %s548, 4
        %s550 = scalar_lea.vmem %s3, %s549
      $region44: #{vit_forward.16} parent=39 // pred_fallthru
        _
    $region40: #{vit_forward.16} parent=5 // pred_fallthru
      _
  $region6: #{vit_forward.16} parent=0 // loop_footer
    %s13 = sadd.s32 1, %s9
  $region7: #{vit_forward.16} parent=0 // loop_footer_branch
    %8 = sbr.rel target = $region3
  $region8: #{vit_forward.16} parent=0 // loop_exit
    _

// kernel: vit_forward.17
$region0: #{vit_forward.17}
  #allocation0 [shape = 'u32[]', space=smem, size = 0x4, offset = 0x4, fixed_abs, tag = 'smem constant byte address 0x4 - core index']
  #allocation1 [shape = 'u32[144,128]{1,0:T(1,128)}', space=vmem, size = 0x12000, scoped, tag = 'internal scratch']
  %s0 = inlined_call_operand.vmem [shape: bf16[64,256], index: 0, kind: input, shape index: {}]
  %s1 = inlined_call_operand.vmem [shape: bf16[256,128], index: 1, kind: input, shape index: {}]
  %s2 = inlined_call_operand.vmem [shape: f32[1,128], index: 2, kind: input, shape index: {}]
  %s3 = inlined_call_operand.vmem [shape: bf16[64,128], index: 3, kind: input, shape index: {}]
  %s4 = inlined_call_operand.vmem [shape: f32[1,128], index: 4, kind: input, shape index: {}]
  %s5 = inlined_call_operand.vmem [shape: f32[1,128], index: 5, kind: input, shape index: {}]
  %s6 = inlined_call_operand.vmem [shape: bf16[64,128], index: 6, kind: output, shape index: {}]
  %s7 = sld [smem:[#allocation0]]
  $region57: #{vit_forward.17} parent=0
    _
  %s9 = ssub.s32 1, %s7
  %s10 = scalar_select 0, %s9, %s7
  loop: start=0, step=1, limit=4
  $region2: #{vit_forward.17} parent=0 // loop_pre_header
    _
  $region3: #{vit_forward.17} parent=0 // loop_header
    %s12 = sphi 0, %s16
    %p13 = scmp.ge.s32.totalorder %s12, 4
    %s22 = sphi 0, %s24
    %s25 = sphi 0, %s22
    %s26 = sphi 0, %s25
    %s42 = sphi 0, %s26
    %s46 = sphi 0, %s46
    %s48 = sphi 0, %s46
    %s49 = sphi 0, %s48
    %s63 = sphi 0, %s49
    %s67 = sphi 0, %s67
    %s69 = sphi 0, %s67
    %s70 = sphi 0, %s69
    %s84 = sphi 0, %s70
    %s90 = sphi 0, %s92
    %s93 = sphi 0, %s90
    %s94 = sphi 0, %s93
    %s110 = sphi 0, %s94
    %s114 = sphi 0, %s114
    %s116 = sphi 0, %s114
    %s117 = sphi 0, %s116
    %s131 = sphi 0, %s117
    %s135 = sphi 0, %s135
    %s137 = sphi 0, %s135
    %s138 = sphi 0, %s137
    %s152 = sphi 0, %s138
    %s158 = sphi 0, %s160
    %s161 = sphi 0, %s158
    %s162 = sphi 0, %s161
    %s178 = sphi 0, %s162
  $region4: #{vit_forward.17} parent=0 // loop_header_branch
    %15 = sbr.rel (%p13) target = $region8
  $region5: #{vit_forward.17} parent=0 // loop_body
    %s17 = ssub.s32 %s12, 1
    %s18 = ssub.s32 %s12, 2
    %s19 = sadd.s32 %s12, 1
    %s20 = ssub.s32 %s12, %s19
    %p21 = scmp.eq.s32.totalorder %s20, 0
    %s23 = sadd.s32 %s22, 1
    %s24 = scalar_select %p21, %s22, %s23
    %p27 = pneg %p21
    %p28 = scmp.eq.s32.totalorder %s12, 1
    %p29 = por %p27, %p28
    %p30 = scmp.ne.s32.totalorder %s22, %s25
    %p31 = scmp.eq.s32.totalorder %s12, 0
    %p32 = por %p30, %p31
    %p33 = scmp.ne.s32.totalorder %s22, %s25
    %p34 = scmp.eq.s32.totalorder %s17, 1
    %p35 = por %p33, %p34
    %p36 = scmp.ne.s32.totalorder %s25, %s26
    %p37 = scmp.eq.s32.totalorder %s17, 0
    %p38 = por %p36, %p37
    %p39 = scmp.ne.s32.totalorder %s25, %s26
    %p40 = scmp.eq.s32.totalorder %s18, 1
    %p41 = por %p39, %p40
    %p43 = scmp.ne.s32.totalorder %s26, %s42
    %p44 = scmp.eq.s32.totalorder %s18, 0
    %p45 = por %p43, %p44
    %s47 = sadd.s32 %s46, 1
    %p50 = scmp.eq.s32.totalorder %s12, 1
    %p51 = scmp.ne.s32.totalorder %s46, %s48
    %p52 = scmp.eq.s32.totalorder %s12, 0
    %p53 = por %p51, %p52
    %p54 = scmp.ne.s32.totalorder %s46, %s48
    %p55 = scmp.eq.s32.totalorder %s17, 1
    %p56 = por %p54, %p55
    %p57 = scmp.ne.s32.totalorder %s48, %s49
    %p58 = scmp.eq.s32.totalorder %s17, 0
    %p59 = por %p57, %p58
    %p60 = scmp.ne.s32.totalorder %s48, %s49
    %p61 = scmp.eq.s32.totalorder %s18, 1
    %p62 = por %p60, %p61
    %p64 = scmp.ne.s32.totalorder %s49, %s63
    %p65 = scmp.eq.s32.totalorder %s18, 0
    %p66 = por %p64, %p65
    %s68 = sadd.s32 %s67, 1
    %p71 = scmp.eq.s32.totalorder %s12, 1
    %p72 = scmp.ne.s32.totalorder %s67, %s69
    %p73 = scmp.eq.s32.totalorder %s12, 0
    %p74 = por %p72, %p73
    %p75 = scmp.ne.s32.totalorder %s67, %s69
    %p76 = scmp.eq.s32.totalorder %s17, 1
    %p77 = por %p75, %p76
    %p78 = scmp.ne.s32.totalorder %s69, %s70
    %p79 = scmp.eq.s32.totalorder %s17, 0
    %p80 = por %p78, %p79
    %p81 = scmp.ne.s32.totalorder %s69, %s70
    %p82 = scmp.eq.s32.totalorder %s18, 1
    %p83 = por %p81, %p82
    %p85 = scmp.ne.s32.totalorder %s70, %s84
    %p86 = scmp.eq.s32.totalorder %s18, 0
    %p87 = por %p85, %p86
    %s88 = ssub.s32 %s12, %s19
    %p89 = scmp.eq.s32.totalorder %s88, 0
    %s91 = sadd.s32 %s90, 1
    %s92 = scalar_select %p89, %s90, %s91
    %p95 = pneg %p89
    %p96 = scmp.eq.s32.totalorder %s12, 1
    %p97 = por %p95, %p96
    %p98 = scmp.ne.s32.totalorder %s90, %s93
    %p99 = scmp.eq.s32.totalorder %s12, 0
    %p100 = por %p98, %p99
    %p101 = scmp.ne.s32.totalorder %s90, %s93
    %p102 = scmp.eq.s32.totalorder %s17, 1
    %p103 = por %p101, %p102
    %p104 = scmp.ne.s32.totalorder %s93, %s94
    %p105 = scmp.eq.s32.totalorder %s17, 0
    %p106 = por %p104, %p105
    %p107 = scmp.ne.s32.totalorder %s93, %s94
    %p108 = scmp.eq.s32.totalorder %s18, 1
    %p109 = por %p107, %p108
    %p111 = scmp.ne.s32.totalorder %s94, %s110
    %p112 = scmp.eq.s32.totalorder %s18, 0
    %p113 = por %p111, %p112
    %s115 = sadd.s32 %s114, 1
    %p118 = scmp.eq.s32.totalorder %s12, 1
    %p119 = scmp.ne.s32.totalorder %s114, %s116
    %p120 = scmp.eq.s32.totalorder %s12, 0
    %p121 = por %p119, %p120
    %p122 = scmp.ne.s32.totalorder %s114, %s116
    %p123 = scmp.eq.s32.totalorder %s17, 1
    %p124 = por %p122, %p123
    %p125 = scmp.ne.s32.totalorder %s116, %s117
    %p126 = scmp.eq.s32.totalorder %s17, 0
    %p127 = por %p125, %p126
    %p128 = scmp.ne.s32.totalorder %s116, %s117
    %p129 = scmp.eq.s32.totalorder %s18, 1
    %p130 = por %p128, %p129
    %p132 = scmp.ne.s32.totalorder %s117, %s131
    %p133 = scmp.eq.s32.totalorder %s18, 0
    %p134 = por %p132, %p133
    %s136 = sadd.s32 %s135, 1
    %p139 = scmp.eq.s32.totalorder %s12, 1
    %p140 = scmp.ne.s32.totalorder %s135, %s137
    %p141 = scmp.eq.s32.totalorder %s12, 0
    %p142 = por %p140, %p141
    %p143 = scmp.ne.s32.totalorder %s135, %s137
    %p144 = scmp.eq.s32.totalorder %s17, 1
    %p145 = por %p143, %p144
    %p146 = scmp.ne.s32.totalorder %s137, %s138
    %p147 = scmp.eq.s32.totalorder %s17, 0
    %p148 = por %p146, %p147
    %p149 = scmp.ne.s32.totalorder %s137, %s138
    %p150 = scmp.eq.s32.totalorder %s18, 1
    %p151 = por %p149, %p150
    %p153 = scmp.ne.s32.totalorder %s138, %s152
    %p154 = scmp.eq.s32.totalorder %s18, 0
    %p155 = por %p153, %p154
    %s156 = ssub.s32 %s12, %s19
    %p157 = scmp.eq.s32.totalorder %s156, 0
    %s159 = sadd.s32 %s158, 1
    %s160 = scalar_select %p157, %s158, %s159
    %p163 = pneg %p157
    %p164 = scmp.eq.s32.totalorder %s12, 1
    %p165 = por %p163, %p164
    %p166 = scmp.ne.s32.totalorder %s158, %s161
    %p167 = scmp.eq.s32.totalorder %s12, 0
    %p168 = por %p166, %p167
    %p169 = scmp.ne.s32.totalorder %s158, %s161
    %p170 = scmp.eq.s32.totalorder %s17, 1
    %p171 = por %p169, %p170
    %p172 = scmp.ne.s32.totalorder %s161, %s162
    %p173 = scmp.eq.s32.totalorder %s17, 0
    %p174 = por %p172, %p173
    %p175 = scmp.ne.s32.totalorder %s161, %s162
    %p176 = scmp.eq.s32.totalorder %s18, 1
    %p177 = por %p175, %p176
    %p179 = scmp.ne.s32.totalorder %s162, %s178
    %p180 = scmp.eq.s32.totalorder %s18, 0
    %p181 = por %p179, %p180
    %p182 = scmp.le.s32.totalorder 1, %s12
    %p183 = scmp.lt.s32.totalorder %s12, 3
    %p184 = pnand %p182, %p183
    %p185 = pneg %p184
    // Predicated region
    $region9: #{vit_forward.17} parent=5 // pred_check
      _
    $region10: #{vit_forward.17} parent=5 // pred_check_branch
      %187 = sbr.rel (%p184) target = $region12
    $region11: #{vit_forward.17} parent=5 // pred_region
      %s188 = ssub.s32 %s12, 1
      // Predicated region
      $region13: #{vit_forward.17} parent=11 // pred_check
        %p189 = pneg %p59
      $region14: #{vit_forward.17} parent=11 // pred_check_branch
        %191 = sbr.rel (%p189) target = $region16
      $region15: #{vit_forward.17} parent=11 // pred_region
        _
      $region16: #{vit_forward.17} parent=11 // pred_fallthru
        _
      // Predicated region
      $region17: #{vit_forward.17} parent=11 // pred_check
        %p192 = pneg %p80
      $region18: #{vit_forward.17} parent=11 // pred_check_branch
        %194 = sbr.rel (%p192) target = $region20
      $region19: #{vit_forward.17} parent=11 // pred_region
        _
      $region20: #{vit_forward.17} parent=11 // pred_fallthru
        _
      // Predicated region
      $region21: #{vit_forward.17} parent=11 // pred_check
        %p195 = pneg %p127
      $region22: #{vit_forward.17} parent=11 // pred_check_branch
        %197 = sbr.rel (%p195) target = $region24
      $region23: #{vit_forward.17} parent=11 // pred_region
        _
      $region24: #{vit_forward.17} parent=11 // pred_fallthru
        _
      // Predicated region
      $region25: #{vit_forward.17} parent=11 // pred_check
        %p198 = pneg %p148
      $region26: #{vit_forward.17} parent=11 // pred_check_branch
        %200 = sbr.rel (%p198) target = $region28
      $region27: #{vit_forward.17} parent=11 // pred_region
        _
      $region28: #{vit_forward.17} parent=11 // pred_fallthru
        _
    $region12: #{vit_forward.17} parent=5 // pred_fallthru
      _
    %p201 = scmp.lt.s32.totalorder %s12, 2
    // Predicated region
    $region29: #{vit_forward.17} parent=5 // pred_check
      %p202 = pneg %p201
    $region30: #{vit_forward.17} parent=5 // pred_check_branch
      %204 = sbr.rel (%p202) target = $region32
    $region31: #{vit_forward.17} parent=5 // pred_region
      // Predicated region
      $region33: #{vit_forward.17} parent=31 // pred_check
        %p205 = pneg %p32
      $region34: #{vit_forward.17} parent=31 // pred_check_branch
        %207 = sbr.rel (%p205) target = $region36
      $region35: #{vit_forward.17} parent=31 // pred_region
        %s208 = smul.u32 4, %s12
        %p209 = scmp.lt.s32.totalorder %s208, 7
        %s210 = scalar_select %p209, %s208, 7
        %s211 = smul.addr %s210, 2
        %s212 = smul.addr %s211, 4
        %s213 = scalar_lea.vmem %s0, %s212
        %s214 = smul.u32 4, %s12
      $region36: #{vit_forward.17} parent=31 // pred_fallthru
        _
      // Predicated region
      $region37: #{vit_forward.17} parent=31 // pred_check
        %p215 = pneg %p100
      $region38: #{vit_forward.17} parent=31 // pred_check_branch
        %217 = sbr.rel (%p215) target = $region40
      $region39: #{vit_forward.17} parent=31 // pred_region
        %s218 = smul.u32 4, %s12
        %p219 = scmp.lt.s32.totalorder %s218, 7
        %s220 = scalar_select %p219, %s218, 7
        %s221 = smul.addr %s220, 4
        %s222 = scalar_lea.vmem %s3, %s221
        %s223 = smul.u32 4, %s12
      $region40: #{vit_forward.17} parent=31 // pred_fallthru
        _
    $region32: #{vit_forward.17} parent=5 // pred_fallthru
      _
    %p224 = scmp.le.s32.totalorder 1, %s12
    %p225 = scmp.lt.s32.totalorder %s12, 3
    %p226 = pnand %p224, %p225
    %p227 = pneg %p226
    // Predicated region
    $region41: #{vit_forward.17} parent=5 // pred_check
      _
    $region42: #{vit_forward.17} parent=5 // pred_check_branch
      %229 = sbr.rel (%p226) target = $region44
    $region43: #{vit_forward.17} parent=5 // pred_region
      %s230 = ssub.s32 %s12, 1
      %s231 = smul.u32 4, %s17
      %p232 = scmp.lt.s32.totalorder %s231, 7
      %s233 = scalar_select %p232, %s231, 7
      %s234 = smul.addr %s233, 2
      %s235 = smul.addr %s234, 4
      %s236 = scalar_lea.vmem %s0, %s235
      %p237 = pneg %p38
      %p238 = pneg %p35
      %p239 = pneg %p59
      %p240 = pneg %p56
      %p241 = pneg %p80
      %p242 = pneg %p77
      %s243 = smul.u32 4, %s17
      %p244 = scmp.lt.s32.totalorder %s243, 7
      %s245 = scalar_select %p244, %s243, 7
      %s246 = smul.addr %s245, 4
      %s247 = scalar_lea.vmem %s3, %s246
      %p248 = pneg %p106
      %p249 = pneg %p103
      %p250 = pneg %p127
      %p251 = pneg %p124
      %p252 = pneg %p148
      %p253 = pneg %p145
      %p254 = pneg %p174
      %p255 = pneg %p171
      %s256 = smul.u32 4, %s17
      %p257 = scmp.lt.s32.totalorder %s256, 7
      %s258 = scalar_select %p257, %s256, 7
      %s259 = smul.addr %s258, 4
      %s260 = scalar_lea.vmem %s6, %s259
      %s261 = smul.u32 4, %s17
      %p262 = scmp.lt.s32.totalorder %s261, 7
      %s263 = scalar_select %p262, %s261, 7
      %s264 = smul.addr %s263, 2
      %s265 = smul.addr %s264, 4
      %s266 = scalar_lea.vmem %s0, %s265
      %s267 = smul.u32 4, %s17
      %s268 = smul.u32 4, %s17
      %p269 = scmp.lt.s32.totalorder %s268, 7
      %s270 = scalar_select %p269, %s268, 7
      %s271 = smul.addr %s270, 4
      %s272 = scalar_lea.vmem %s3, %s271
      %s273 = smul.u32 4, %s17
      %s274 = smul.u32 4, %s17
      %p275 = scmp.lt.s32.totalorder %s274, 7
      %s276 = scalar_select %p275, %s274, 7
      %s277 = smul.addr %s276, 4
      %s278 = scalar_lea.vmem %s6, %s277
      %s279 = smul.u32 4, %s17
      %v281 = vld [vmem:[%s266] sm:$0xff]
      %v282 = vld [vmem:[%s266 + $0x8] sm:$0xff]
      %v283 = vld [vmem:[%s266 + $0x10] sm:$0xff]
      %v284 = vld [vmem:[%s266 + $0x18] sm:$0xff]
      %v285 = vld [vmem:[%s1] sm:$0xf]
      %v286 = vld [vmem:[%s1 + $0x4] sm:$0xf]
      %v287 = vld [vmem:[%s1 + $0x8] sm:$0xf]
      %v288 = vld [vmem:[%s1 + $0xc] sm:$0xf]
      %v289 = vld [vmem:[%s1 + $0x10] sm:$0xf]
      %v290 = vld [vmem:[%s1 + $0x14] sm:$0xf]
      %v291 = vld [vmem:[%s1 + $0x18] sm:$0xf]
      %v292 = vld [vmem:[%s1 + $0x1c] sm:$0xf]
      %v293 = vld [vmem:[%s1 + $0x20] sm:$0xf]
      %v294 = vld [vmem:[%s1 + $0x24] sm:$0xf]
      %v295 = vld [vmem:[%s1 + $0x28] sm:$0xf]
      %v296 = vld [vmem:[%s1 + $0x2c] sm:$0xf]
      %v297 = vld [vmem:[%s1 + $0x30] sm:$0xf]
      %v298 = vld [vmem:[%s1 + $0x34] sm:$0xf]
      %v299 = vld [vmem:[%s1 + $0x38] sm:$0xf]
      %v300 = vld [vmem:[%s1 + $0x3c] sm:$0xf]
      %v301 = vld [vmem:[%s1 + $0x40] sm:$0xf]
      %v302 = vld [vmem:[%s1 + $0x44] sm:$0xf]
      %v303 = vld [vmem:[%s1 + $0x48] sm:$0xf]
      %v304 = vld [vmem:[%s1 + $0x4c] sm:$0xf]
      %v305 = vld [vmem:[%s1 + $0x50] sm:$0xf]
      %v306 = vld [vmem:[%s1 + $0x54] sm:$0xf]
      %v307 = vld [vmem:[%s1 + $0x58] sm:$0xf]
      %v308 = vld [vmem:[%s1 + $0x5c] sm:$0xf]
      %v309 = vld [vmem:[%s1 + $0x60] sm:$0xf]
      %v310 = vld [vmem:[%s1 + $0x64] sm:$0xf]
      %v311 = vld [vmem:[%s1 + $0x68] sm:$0xf]
      %v312 = vld [vmem:[%s1 + $0x6c] sm:$0xf]
      %v313 = vld [vmem:[%s1 + $0x70] sm:$0xf]
      %v314 = vld [vmem:[%s1 + $0x74] sm:$0xf]
      %v315 = vld [vmem:[%s1 + $0x78] sm:$0xf]
      %v316 = vld [vmem:[%s1 + $0x7c] sm:$0xf]
      %v317 = vld [vmem:[%s2] sm:$0x1]
      %v319 = vlaneseq
      %v320 = vshrl.u32 %v319, 7
      %v321 = vsub.s32 0, %v320
      %v322 = vrot.slane %v317, %v321
      %v328 = vunpack.c.l.b16 %v281
      %v329 = vunpack.c.h.b16 %v281
      %v330 = vunpack.c.l.b16 %v282
      %v331 = vunpack.c.h.b16 %v282
      %v332 = vunpack.c.l.b16 %v283
      %v333 = vunpack.c.h.b16 %v283
      %v334 = vunpack.c.l.b16 %v284
      %v335 = vunpack.c.h.b16 %v284
      %v336 = vpack.c.b16 %v330, %v328
      %v337 = vpack.c.b16 %v331, %v329
      %v338 = vpack.c.b16 %v334, %v332
      %v339 = vpack.c.b16 %v335, %v333
      %v376 = vunpack.c.l.b16 %v285
      %v377 = vunpack.c.l.b16 %v286
      %v378 = vunpack.c.l.b16 %v287
      %v379 = vunpack.c.l.b16 %v288
      %v380 = vunpack.c.l.b16 %v289
      %v381 = vunpack.c.l.b16 %v290
      %v382 = vunpack.c.l.b16 %v291
      %v383 = vunpack.c.l.b16 %v292
      %v384 = vunpack.c.l.b16 %v293
      %v385 = vunpack.c.l.b16 %v294
      %v386 = vunpack.c.l.b16 %v295
      %v387 = vunpack.c.l.b16 %v296
      %v388 = vunpack.c.l.b16 %v297
      %v389 = vunpack.c.l.b16 %v298
      %v390 = vunpack.c.l.b16 %v299
      %v391 = vunpack.c.l.b16 %v300
      %v392 = vunpack.c.l.b16 %v301
      %v393 = vunpack.c.l.b16 %v302
      %v394 = vunpack.c.l.b16 %v303
      %v395 = vunpack.c.l.b16 %v304
      %v396 = vunpack.c.l.b16 %v305
      %v397 = vunpack.c.l.b16 %v306
      %v398 = vunpack.c.l.b16 %v307
      %v399 = vunpack.c.l.b16 %v308
      %v400 = vunpack.c.l.b16 %v309
      %v401 = vunpack.c.l.b16 %v310
      %v402 = vunpack.c.l.b16 %v311
      %v403 = vunpack.c.l.b16 %v312
      %v404 = vunpack.c.l.b16 %v313
      %v405 = vunpack.c.l.b16 %v314
      %v406 = vunpack.c.l.b16 %v315
      %v407 = vunpack.c.l.b16 %v316
      %v408 = vpack.c.b16 %v377, %v376
      %v409 = vpack.c.b16 %v379, %v378
      %v410 = vpack.c.b16 %v381, %v380
      %v411 = vpack.c.b16 %v383, %v382
      %v412 = vpack.c.b16 %v385, %v384
      %v413 = vpack.c.b16 %v387, %v386
      %v414 = vpack.c.b16 %v389, %v388
      %v415 = vpack.c.b16 %v391, %v390
      %v416 = vpack.c.b16 %v393, %v392
      %v417 = vpack.c.b16 %v395, %v394
      %v418 = vpack.c.b16 %v397, %v396
      %v419 = vpack.c.b16 %v399, %v398
      %v420 = vpack.c.b16 %v401, %v400
      %v421 = vpack.c.b16 %v403, %v402
      %v422 = vpack.c.b16 %v405, %v404
      %v423 = vpack.c.b16 %v407, %v406
      %440 = vmatprep.subr.bf16.mxu0 0
      %441 = vmatpush1.bf16.msra.mxu0 %v408
      %442 = vmatprep.subr.bf16.mxu0 0
      %443 = vmatpush1.bf16.msra.mxu0 %v409
      %444 = vmatprep.subr.bf16.mxu0 0
      %445 = vmatpush1.bf16.msra.mxu0 %v410
      %446 = vmatprep.subr.bf16.mxu0 0
      %447 = vmatpush1.bf16.msra.mxu0 %v411
      %448 = vmatprep.subr.bf16.mxu0 0
      %449 = vmatpush1.bf16.msra.mxu0 %v412
      %450 = vmatprep.subr.bf16.mxu0 0
      %451 = vmatpush1.bf16.msra.mxu0 %v413
      %452 = vmatprep.subr.bf16.mxu0 0
      %453 = vmatpush1.bf16.msra.mxu0 %v414
      %454 = vmatprep.subr.bf16.mxu0 0
      %455 = vmatpush1.bf16.msra.mxu0 %v415
      %456 = vmatprep.subr.bf16.mxu0 0
      %457 = vmatpush1.bf16.msra.mxu0 %v416
      %458 = vmatprep.subr.bf16.mxu0 0
      %459 = vmatpush1.bf16.msra.mxu0 %v417
      %460 = vmatprep.subr.bf16.mxu0 0
      %461 = vmatpush1.bf16.msra.mxu0 %v418
      %462 = vmatprep.subr.bf16.mxu0 0
      %463 = vmatpush1.bf16.msra.mxu0 %v419
      %464 = vmatprep.subr.bf16.mxu0 0
      %465 = vmatpush1.bf16.msra.mxu0 %v420
      %466 = vmatprep.subr.bf16.mxu0 0
      %467 = vmatpush1.bf16.msra.mxu0 %v421
      %468 = vmatprep.subr.bf16.mxu0 0
      %469 = vmatpush1.bf16.msra.mxu0 %v422
      %470 = vmatprep.subr.bf16.mxu0 0
      %471 = vmatpush1.bf16.msra.mxu0 %v423
      %472 = vmatprep.mubr.bf16.mxu0 %v337
      %473 = vmatmul.mubr.bf16.gmra.mrb[0].mxu0 %v336
      %v474 = vpop.f32.mrb[0].mxu0
      %v475 = vadd.f32 %v322, %v474
      %v476 = vpop.f32.mrb[0].mxu0
      %v477 = vpop.f32.mrb[0].mxu0
      %v478 = vadd.f32 %v322, %v477
      %v479 = vpop.f32.mrb[0].mxu0
      %480 = vmatprep.mubr.bf16.mxu0 %v339
      %481 = vmatmul.mubr.bf16.gmra.mrb[0].mxu0 %v338
      %v482 = vpop.f32.mrb[0].mxu0
      %v483 = vadd.f32 %v322, %v482
      %v484 = vpop.f32.mrb[0].mxu0
      %v485 = vpop.f32.mrb[0].mxu0
      %v486 = vadd.f32 %v322, %v485
      %v487 = vpop.f32.mrb[0].mxu0
      %488 = vdwg.mxu0
      %v489 = vld [vmem:[%s272] sm:$0xf]
      %v490 = vld [vmem:[%s272 + $0x4] sm:$0xf]
      %v491 = vld [vmem:[%s272 + $0x8] sm:$0xf]
      %v492 = vld [vmem:[%s272 + $0xc] sm:$0xf]
      %v493 = vunpack.c.l.bf16 %v489
      %v494 = vunpack.c.l.bf16 %v490
      %v495 = vunpack.c.l.bf16 %v491
      %v496 = vunpack.c.l.bf16 %v492
      %v497 = vadd.f32 %v475, %v493
      %v498 = vadd.f32 %v478, %v494
      %v499 = vadd.f32 %v483, %v495
      %v500 = vadd.f32 %v486, %v496
      %v501 = vlaneseq
      %v502 = vand.u32 %v501, 127
      %vm503 = vcmp.lt.s32.totalorder %v502, 128
      %v504 = vsel %vm503, %v497, 0.0
      %v505 = vsel %vm503, %v498, 0.0
      %v506 = vsel %vm503, %v499, 0.0
      %v507 = vsel %vm503, %v500, 0.0
      %508 = vadd.xlane.f32.xlu0 %v504
      %v509 = vpop.xlane.xlu0 %508
      %510 = vadd.xlane.f32.xlu0 %v505
      %v511 = vpop.xlane.xlu0 %510
      %512 = vadd.xlane.f32.xlu0 %v506
      %v513 = vpop.xlane.xlu0 %512
      %514 = vadd.xlane.f32.xlu0 %v507
      %v515 = vpop.xlane.xlu0 %514
      %v516 = vmul.f32 %v509, 0.0078125
      %v517 = vmul.f32 %v511, 0.0078125
      %v518 = vmul.f32 %v513, 0.0078125
      %v519 = vmul.f32 %v515, 0.0078125
      %v520 = vsub.f32 %v497, %v516
      %v521 = vsub.f32 %v498, %v517
      %v522 = vsub.f32 %v499, %v518
      %v523 = vsub.f32 %v500, %v519
      %v524 = vsel %vm503, %v520, 0.0
      %v525 = vsel %vm503, %v521, 0.0
      %v526 = vsel %vm503, %v522, 0.0
      %v527 = vsel %vm503, %v523, 0.0
      %v528 = vmul.f32 %v524, %v524
      %v529 = vmul.f32 %v525, %v525
      %v530 = vmul.f32 %v526, %v526
      %v531 = vmul.f32 %v527, %v527
      %532 = vadd.xlane.f32.xlu0 %v528
      %v533 = vpop.xlane.xlu0 %532
      %534 = vadd.xlane.f32.xlu0 %v529
      %v535 = vpop.xlane.xlu0 %534
      %536 = vadd.xlane.f32.xlu0 %v530
      %v537 = vpop.xlane.xlu0 %536
      %538 = vadd.xlane.f32.xlu0 %v531
      %v539 = vpop.xlane.xlu0 %538
      %v540 = vmul.f32 %v533, 0.0078125
      %v541 = vmul.f32 %v535, 0.0078125
      %v542 = vmul.f32 %v537, 0.0078125
      %v543 = vmul.f32 %v539, 0.0078125
      %v544 = vadd.f32 %v540, 1e-05
      %v545 = vadd.f32 %v541, 1e-05
      %v546 = vadd.f32 %v542, 1e-05
      %v547 = vadd.f32 %v543, 1e-05
      %v548 = vrsqrt.pop %v544
      %v549 = vrsqrt.pop %v545
      %v550 = vrsqrt.pop %v546
      %v551 = vrsqrt.pop %v547
      %v552 = vmul.f32 %v524, %v548
      %v553 = vmul.f32 %v525, %v549
      %v554 = vmul.f32 %v526, %v550
      %v555 = vmul.f32 %v527, %v551
      %v556 = vld [vmem:[%s4] sm:$0x1]
      %v558 = vlaneseq
      %v559 = vshrl.u32 %v558, 7
      %v560 = vsub.s32 0, %v559
      %v561 = vrot.slane %v556, %v560
      %v563 = vmul.f32 %v552, %v561
      %v564 = vmul.f32 %v553, %v561
      %v565 = vmul.f32 %v554, %v561
      %v566 = vmul.f32 %v555, %v561
      %v567 = vld [vmem:[%s5] sm:$0x1]
      %v569 = vlaneseq
      %v570 = vshrl.u32 %v569, 7
      %v571 = vsub.s32 0, %v570
      %v572 = vrot.slane %v567, %v571
      %v574 = vadd.f32 %v563, %v572
      %v575 = vadd.f32 %v564, %v572
      %v576 = vadd.f32 %v565, %v572
      %v577 = vadd.f32 %v566, %v572
      %v578 = vpack.c.bf16 %v575, %v574
      %v579 = vpack.c.bf16 %v577, %v576
      %v582 = vunpack.c.l.b16 %v578
      %v583 = vunpack.c.h.b16 %v578
      %v584 = vunpack.c.l.b16 %v579
      %v585 = vunpack.c.h.b16 %v579
      %v586 = vpack.c.b16 %v582, %v582
      %v587 = vpack.c.b16 %v583, %v583
      %v588 = vpack.c.b16 %v584, %v584
      %v589 = vpack.c.b16 %v585, %v585
      %594 = vst [vmem:[%s278] sm:$0xf] %v586
      %595 = vst [vmem:[%s278 + $0x4] sm:$0xf] %v587
      %596 = vst [vmem:[%s278 + $0x8] sm:$0xf] %v588
      %597 = vst [vmem:[%s278 + $0xc] sm:$0xf] %v589
      %s598 = smul.u32 4, %s17
      %p599 = scmp.lt.s32.totalorder %s598, 7
      %s600 = scalar_select %p599, %s598, 7
      %s601 = smul.addr %s600, 4
      %s602 = scalar_lea.vmem %s6, %s601
      // Predicated region
      $region45: #{vit_forward.17} parent=43 // pred_check
        %p603 = pneg %p171
      $region46: #{vit_forward.17} parent=43 // pred_check_branch
        %605 = sbr.rel (%p603) target = $region48
      $region47: #{vit_forward.17} parent=43 // pred_region
        %s606 = smul.u32 4, %s17
      $region48: #{vit_forward.17} parent=43 // pred_fallthru
        _
    $region44: #{vit_forward.17} parent=5 // pred_fallthru
      _
    %p607 = scmp.le.s32.totalorder 2, %s12
    // Predicated region
    $region49: #{vit_forward.17} parent=5 // pred_check
      %p608 = pneg %p607
    $region50: #{vit_forward.17} parent=5 // pred_check_branch
      %610 = sbr.rel (%p608) target = $region52
    $region51: #{vit_forward.17} parent=5 // pred_region
      %s611 = ssub.s32 %s12, 2
      // Predicated region
      $region53: #{vit_forward.17} parent=51 // pred_check
        %p612 = pneg %p177
      $region54: #{vit_forward.17} parent=51 // pred_check_branch
        %614 = sbr.rel (%p612) target = $region56
      $region55: #{vit_forward.17} parent=51 // pred_region
        %s615 = smul.u32 4, %s18
        %p616 = scmp.lt.s32.totalorder %s615, 7
        %s617 = scalar_select %p616, %s615, 7
        %s618 = smul.addr %s617, 4
        %s619 = scalar_lea.vmem %s6, %s618
      $region56: #{vit_forward.17} parent=51 // pred_fallthru
        _
    $region52: #{vit_forward.17} parent=5 // pred_fallthru
      _
  $region6: #{vit_forward.17} parent=0 // loop_footer
    %s16 = sadd.s32 1, %s12
  $region7: #{vit_forward.17} parent=0 // loop_footer_branch
    %11 = sbr.rel target = $region3
  $region8: #{vit_forward.17} parent=0 // loop_exit
    _

// kernel: vit_forward.23
$region0: #{vit_forward.23}
  #allocation0 [shape = 'u32[]', space=smem, size = 0x4, offset = 0x4, fixed_abs, tag = 'smem constant byte address 0x4 - core index']
  #allocation1 [shape = 'u32[144,128]{1,0:T(1,128)}', space=vmem, size = 0x12000, scoped, tag = 'internal scratch']
  %s0 = inlined_call_operand.vmem [shape: bf16[16,128], index: 0, kind: input, shape index: {}]
  %s1 = inlined_call_operand.vmem [shape: bf16[128,128], index: 1, kind: input, shape index: {}]
  %s2 = inlined_call_operand.vmem [shape: f32[1,128], index: 2, kind: input, shape index: {}]
  %s3 = inlined_call_operand.vmem [shape: f32[16,128], index: 3, kind: output, shape index: {}]
  %s4 = sld [smem:[#allocation0]]
  $region22: #{vit_forward.23} parent=0
    _
  %s6 = ssub.s32 1, %s4
  %s7 = scalar_select 0, %s6, %s4
  // Predicated region
  $region2: #{vit_forward.23} parent=0 // pred_check
    _
  $region3: #{vit_forward.23} parent=0 // pred_check_branch
    %9 = sbr.rel (0) target = $region5
  $region4: #{vit_forward.23} parent=0 // pred_region
    _
  $region5: #{vit_forward.23} parent=0 // pred_fallthru
    _
  // Predicated region
  $region6: #{vit_forward.23} parent=0 // pred_check
    _
  $region7: #{vit_forward.23} parent=0 // pred_check_branch
    %11 = sbr.rel (0) target = $region9
  $region8: #{vit_forward.23} parent=0 // pred_region
    _
  $region9: #{vit_forward.23} parent=0 // pred_fallthru
    _
  // Predicated region
  $region10: #{vit_forward.23} parent=0 // pred_check
    _
  $region11: #{vit_forward.23} parent=0 // pred_check_branch
    %13 = sbr.rel (0) target = $region13
  $region12: #{vit_forward.23} parent=0 // pred_region
    _
  $region13: #{vit_forward.23} parent=0 // pred_fallthru
    _
  %v15 = vld [vmem:[%s0] sm:$0xf]
  %v16 = vld [vmem:[%s0 + $0x4] sm:$0xf]
  %v17 = vld [vmem:[%s1] sm:$0xf]
  %v18 = vld [vmem:[%s1 + $0x4] sm:$0xf]
  %v19 = vld [vmem:[%s1 + $0x8] sm:$0xf]
  %v20 = vld [vmem:[%s1 + $0xc] sm:$0xf]
  %v21 = vld [vmem:[%s1 + $0x10] sm:$0xf]
  %v22 = vld [vmem:[%s1 + $0x14] sm:$0xf]
  %v23 = vld [vmem:[%s1 + $0x18] sm:$0xf]
  %v24 = vld [vmem:[%s1 + $0x1c] sm:$0xf]
  %v25 = vld [vmem:[%s1 + $0x20] sm:$0xf]
  %v26 = vld [vmem:[%s1 + $0x24] sm:$0xf]
  %v27 = vld [vmem:[%s1 + $0x28] sm:$0xf]
  %v28 = vld [vmem:[%s1 + $0x2c] sm:$0xf]
  %v29 = vld [vmem:[%s1 + $0x30] sm:$0xf]
  %v30 = vld [vmem:[%s1 + $0x34] sm:$0xf]
  %v31 = vld [vmem:[%s1 + $0x38] sm:$0xf]
  %v32 = vld [vmem:[%s1 + $0x3c] sm:$0xf]
  %v33 = vld [vmem:[%s2] sm:$0x1]
  %v35 = vlaneseq
  %v36 = vshrl.u32 %v35, 7
  %v37 = vsub.s32 0, %v36
  %v38 = vrot.slane %v33, %v37
  %v42 = vunpack.c.l.b16 %v15
  %v43 = vunpack.c.l.b16 %v16
  %v44 = vpack.c.b16 %v43, %v42
  %v62 = vunpack.c.l.b16 %v17
  %v63 = vunpack.c.l.b16 %v18
  %v64 = vunpack.c.l.b16 %v19
  %v65 = vunpack.c.l.b16 %v20
  %v66 = vunpack.c.l.b16 %v21
  %v67 = vunpack.c.l.b16 %v22
  %v68 = vunpack.c.l.b16 %v23
  %v69 = vunpack.c.l.b16 %v24
  %v70 = vunpack.c.l.b16 %v25
  %v71 = vunpack.c.l.b16 %v26
  %v72 = vunpack.c.l.b16 %v27
  %v73 = vunpack.c.l.b16 %v28
  %v74 = vunpack.c.l.b16 %v29
  %v75 = vunpack.c.l.b16 %v30
  %v76 = vunpack.c.l.b16 %v31
  %v77 = vunpack.c.l.b16 %v32
  %v78 = vpack.c.b16 %v63, %v62
  %v79 = vpack.c.b16 %v65, %v64
  %v80 = vpack.c.b16 %v67, %v66
  %v81 = vpack.c.b16 %v69, %v68
  %v82 = vpack.c.b16 %v71, %v70
  %v83 = vpack.c.b16 %v73, %v72
  %v84 = vpack.c.b16 %v75, %v74
  %v85 = vpack.c.b16 %v77, %v76
  %94 = vmatprep.subr.bf16.mxu0 0
  %95 = vmatpush1.bf16.msra.mxu0 %v78
  %96 = vmatprep.subr.bf16.mxu0 0
  %97 = vmatpush1.bf16.msra.mxu0 %v79
  %98 = vmatprep.subr.bf16.mxu0 0
  %99 = vmatpush1.bf16.msra.mxu0 %v80
  %100 = vmatprep.subr.bf16.mxu0 0
  %101 = vmatpush1.bf16.msra.mxu0 %v81
  %102 = vmatprep.subr.bf16.mxu0 0
  %103 = vmatpush1.bf16.msra.mxu0 %v82
  %104 = vmatprep.subr.bf16.mxu0 0
  %105 = vmatpush1.bf16.msra.mxu0 %v83
  %106 = vmatprep.subr.bf16.mxu0 0
  %107 = vmatpush1.bf16.msra.mxu0 %v84
  %108 = vmatprep.subr.bf16.mxu0 0
  %109 = vmatpush1.bf16.msra.mxu0 %v85
  %110 = vmatprep.subr.bf16.mxu0 0
  %111 = vmatpush1.bf16.msra.mxu0 0
  %112 = vmatprep.subr.bf16.mxu0 0
  %113 = vmatpush1.bf16.msra.mxu0 0
  %114 = vmatprep.subr.bf16.mxu0 0
  %115 = vmatpush1.bf16.msra.mxu0 0
  %116 = vmatprep.subr.bf16.mxu0 0
  %117 = vmatpush1.bf16.msra.mxu0 0
  %118 = vmatprep.subr.bf16.mxu0 0
  %119 = vmatpush1.bf16.msra.mxu0 0
  %120 = vmatprep.subr.bf16.mxu0 0
  %121 = vmatpush1.bf16.msra.mxu0 0
  %122 = vmatprep.subr.bf16.mxu0 0
  %123 = vmatpush1.bf16.msra.mxu0 0
  %124 = vmatprep.subr.bf16.mxu0 0
  %125 = vmatpush1.bf16.msra.mxu0 0
  %126 = vmatprep.mubr.bf16.mxu0 0
  %127 = vmatmul.mubr.bf16.gmra.mrb[0].mxu0 %v44
  %v128 = vpop.f32.mrb[0].mxu0
  %v129 = vadd.f32 %v38, %v128
  %v130 = vpop.f32.mrb[0].mxu0
  %v131 = vpop.f32.mrb[0].mxu0
  %v132 = vadd.f32 %v38, %v131
  %v133 = vpop.f32.mrb[0].mxu0
  %134 = vdwg.mxu0
  %135 = vst [vmem:[%s3] sm:$0xff] %v129
  %136 = vst [vmem:[%s3 + $0x8] sm:$0xff] %v132
  // Predicated region
  $region14: #{vit_forward.23} parent=0 // pred_check
    _
  $region15: #{vit_forward.23} parent=0 // pred_check_branch
    %138 = sbr.rel (0) target = $region17
  $region16: #{vit_forward.23} parent=0 // pred_region
    _
  $region17: #{vit_forward.23} parent=0 // pred_fallthru
    _
  // Predicated region
  $region18: #{vit_forward.23} parent=0 // pred_check
    _
  $region19: #{vit_forward.23} parent=0 // pred_check_branch
    %140 = sbr.rel (0) target = $region21
  $region20: #{vit_forward.23} parent=0 // pred_region
    _
  $region21: #{vit_forward.23} parent=0 // pred_fallthru
    _

</llo_original>
